<compile_context>
chip_gen: v5e
topology: v5e:2x2
jax: 0.10.0
libtpu: 0.0.40
codegen_flags: <defaults>
</compile_context>

<pallas_src>
import math
import jax
import jax.numpy as jnp
from jax.experimental import pallas as pl
from jax.experimental.pallas import tpu as pltpu


# ---------------------------------------------------------------------------
# Flat parameter-vector layout (prefetched to SMEM)
# ---------------------------------------------------------------------------
_W_S = 0       # SpatialGate  conv weights (2 x 5 x 5, ch0 = max-pool, ch1 = mean-pool)
_W_H = 50      # ChannelGateH conv weights
_W_W = 100     # ChannelGateW conv weights
_ALPHA = 150   # ChannelAttention alpha
_BETA = 151    # ChannelAttention beta
_BIAS = 152    # ChannelAttention conv1d bias
_W_C = 153     # ChannelAttention conv1d weights (k of them)


def get_kernel_num(C, gamma=2, b=1):
    t = math.log2(C) / gamma + b / gamma
    floor = math.floor(t)
    return floor + (1 - floor % 2)


# ---------------------------------------------------------------------------
# In-kernel 5x5 conv on a halo-padded scratch
# ---------------------------------------------------------------------------
def _conv5x5(pad_ref, w, R, S, swap):
    """2-in / 1-out 5x5 cross-correlation (padding=2) from a (2, R+4, S+4)
    halo-padded scratch.  One row-slab load per (c, d0); the 5 lane taps are
    in-register slices of that slab.  `w[c][dh][dw]` are hoisted scalar weights.
    swap=True: the scratch is stored transposed w.r.t. the conv's (h, w) axes,
    so dh maps to the lane offset and dw to the sublane offset."""
    acc = jnp.zeros((R, S), jnp.float32)
    for c in range(2):
        for d0 in range(5):                      # sublane (row) offset
            slab = pad_ref[c, d0:d0 + R, :]      # (R, S+4) - single load
            for d1 in range(5):                  # lane offset
                wi = w[c][d1][d0] if swap else w[c][d0][d1]
                acc = acc + wi * slab[:, d1:d1 + S]
    return acc


# ---------------------------------------------------------------------------
# Fused TripletAttention kernel (one grid step == TB batch elements)
# ---------------------------------------------------------------------------
def _make_fused_kernel(C, H, W, k, TB):
    padk = k // 2
    inv_C = 1.0 / C
    inv_H = 1.0 / H
    inv_W = 1.0 / W
    inv_HW = 1.0 / (H * W)

    def kernel(p_ref, x_ref, o_ref, pad_s, pad_h, pad_w, pad_c, scale_ref):
        # Zero the padded scratches once per grid step (dense full-buffer stores;
        # halos are never dirtied and interiors are fully overwritten below).
        # Safe even when the batch axis is sharded across TensorCores, since
        # every grid step re-establishes the invariant for its own scratch.
        pad_s[...] = jnp.zeros_like(pad_s)
        pad_h[...] = jnp.zeros_like(pad_h)
        pad_w[...] = jnp.zeros_like(pad_w)
        pad_c[...] = jnp.zeros_like(pad_c)

        # Hoist every scalar parameter read above the batch / conv loops.
        w_s = [[[p_ref[_W_S + c * 25 + dh * 5 + dw] for dw in range(5)]
                for dh in range(5)] for c in range(2)]
        w_h = [[[p_ref[_W_H + c * 25 + dh * 5 + dw] for dw in range(5)]
                for dh in range(5)] for c in range(2)]
        w_w = [[[p_ref[_W_W + c * 25 + dh * 5 + dw] for dw in range(5)]
                for dh in range(5)] for c in range(2)]
        w_c = [p_ref[_W_C + j] for j in range(k)]
        alpha = p_ref[_ALPHA]
        beta = p_ref[_BETA]
        bias = p_ref[_BIAS]

        for b in range(TB):
            # ---- single fused pass over x: all six pooling reductions ------
            mx_h = jnp.full((C, W), -jnp.inf, jnp.float32)   # max over H  -> (C, W)
            sm_h = jnp.zeros((C, W), jnp.float32)            # sum over H  -> (C, W)
            for h in range(H):
                slab = x_ref[b, :, h * W:(h + 1) * W]        # (C, W) row slab of x
                mx_h = jnp.maximum(mx_h, slab)
                sm_h = sm_h + slab
                # SpatialGate pooled maps: pool over C -> row h of (H, W) maps
                pad_s[0, 2 + h:3 + h, 2:2 + W] = jnp.max(slab, axis=0, keepdims=True)
                pad_s[1, 2 + h:3 + h, 2:2 + W] = jnp.sum(slab, axis=0, keepdims=True) * inv_C
                # ChannelGateW pooled maps: pool over W -> column h of (C, H) maps
                pad_w[0, 2:2 + C, 2 + h:3 + h] = jnp.max(slab, axis=1, keepdims=True)
                pad_w[1, 2:2 + C, 2 + h:3 + h] = jnp.sum(slab, axis=1, keepdims=True) * inv_W
            # ChannelGateH pooled maps: pool over H -> (C, W)
            pad_h[0, 2:2 + C, 2:2 + W] = mx_h
            pad_h[1, 2:2 + C, 2:2 + W] = sm_h * inv_H
            # ChannelAttention global pools reuse the H-reduced maps (no extra pass)
            f_max = jnp.max(mx_h, axis=1, keepdims=True)           # (C, 1)
            f_avg = jnp.sum(sm_h, axis=1, keepdims=True) * inv_HW  # (C, 1)

            # ---- three 5x5 conv -> sigmoid branch scale maps ---------------
            s_s = jax.nn.sigmoid(_conv5x5(pad_s, w_s, H, W, swap=False))  # (H, W)
            s_h = jax.nn.sigmoid(_conv5x5(pad_h, w_h, C, W, swap=False))  # (C, W)
            s_w = jax.nn.sigmoid(_conv5x5(pad_w, w_w, C, H, swap=True))   # (C, H)

            # ---- channel attention: blended stats -> 1D conv over C --------
            f_add = 0.5 * (f_avg + f_max) + alpha * f_avg + beta * f_max  # (C, 1)
            pad_c[padk:padk + C, :] = f_add
            acc_c = jnp.zeros((C, 1), jnp.float32)
            for j in range(k):
                acc_c = acc_c + w_c[j] * pad_c[j:j + C, :]
            att = jax.nn.sigmoid(acc_c + bias)                            # (C, 1)

            # ---- combine: build flat (C, H*W) scale map, one dense store ---
            for h in range(H):
                scale_ref[:, h * W:(h + 1) * W] = (
                    s_s[h:h + 1, :] + s_h + s_w[:, h:h + 1] + att)
            # lane-dense multiply + store (accumulate in f32, cast on store)
            o_ref[b] = (0.25 * x_ref[b] * scale_ref[...]).astype(o_ref.dtype)

    return kernel


def triplet_attention(x, params, k, *, target_block_bytes=2 * 1024 * 1024):
    """x: (B, C, H, W), params: flat f32 vector (layout above), k: conv1d kernel size."""
    B, C, H, W = x.shape
    HW = H * W
    padk = k // 2
    elem_bytes = C * HW * x.dtype.itemsize

    # Batch-tile size: biggest divisor of B whose (TB, C, H*W) block stays under
    # ~2 MiB (double-buffered in+out then fits comfortably in v7x's 64 MiB VMEM
    # without raising vmem_limit_bytes), preferring >= 2 grid steps so the DMA
    # pipeline / both TensorCores get work.
    divs = [d for d in range(1, B + 1) if B % d == 0 and d * elem_bytes <= target_block_bytes]
    if not divs:
        divs = [1]
    pref = [d for d in divs if B // d >= 2]
    TB = max(pref) if pref else max(divs)

    # Lane-dense last dim for all HBM-facing blocks (free reshape: contiguous).
    xf = x.reshape(B, C, HW)

    grid_spec = pltpu.PrefetchScalarGridSpec(
        num_scalar_prefetch=1,                      # params land in SMEM once
        grid=(B // TB,),
        in_specs=[pl.BlockSpec((TB, C, HW), lambda i, p: (i, 0, 0))],
        out_specs=pl.BlockSpec((TB, C, HW), lambda i, p: (i, 0, 0)),
        scratch_shapes=[
            pltpu.VMEM((2, H + 4, W + 4), jnp.float32),   # SpatialGate  padded pools
            pltpu.VMEM((2, C + 4, W + 4), jnp.float32),   # ChannelGateH padded pools
            pltpu.VMEM((2, C + 4, H + 4), jnp.float32),   # ChannelGateW padded pools
            pltpu.VMEM((C + 2 * padk, 1), jnp.float32),   # channel-attn 1D conv pad
            pltpu.VMEM((C, HW), jnp.float32),             # flat per-element scale map
        ],
    )

    out = pl.pallas_call(
        _make_fused_kernel(C, H, W, k, TB),
        out_shape=jax.ShapeDtypeStruct((B, C, HW), x.dtype),
        grid_spec=grid_spec,
        compiler_params=pltpu.CompilerParams(dimension_semantics=("parallel",)),
    )(params, xf)
    return out.reshape(B, C, H, W)


# ---------------------------------------------------------------------------
# Pure-JAX reference (mirrors the PyTorch forward exactly) for correctness
# ---------------------------------------------------------------------------
def _spatial_gate_ref(x, w_flat):
    pmax = jnp.max(x, axis=1)
    pmean = jnp.mean(x, axis=1)
    pooled = jnp.stack([pmax, pmean], axis=1)                 # (B, 2, D2, D3)
    w4 = w_flat.reshape(1, 2, 5, 5)
    conv = jax.lax.conv_general_dilated(
        pooled, w4, window_strides=(1, 1), padding=[(2, 2), (2, 2)],
        dimension_numbers=("NCHW", "OIHW", "NCHW"))
    return x * jax.nn.sigmoid(conv)


def _triplet_attention_ref(x, params, k):
    w_s = params[_W_S:_W_S + 50]
    w_h = params[_W_H:_W_H + 50]
    w_w = params[_W_W:_W_W + 50]
    alpha, beta, bias = params[_ALPHA], params[_BETA], params[_BIAS]
    w_c = params[_W_C:_W_C + k]

    xp1 = jnp.transpose(x, (0, 2, 1, 3))
    o11 = jnp.transpose(_spatial_gate_ref(xp1, w_h), (0, 2, 1, 3))
    xp2 = jnp.transpose(x, (0, 3, 2, 1))
    o21 = jnp.transpose(_spatial_gate_ref(xp2, w_w), (0, 3, 2, 1))

    f_avg = jnp.mean(x, axis=(2, 3))
    f_max = jnp.max(x, axis=(2, 3))
    f_add = 0.5 * (f_avg + f_max) + alpha * f_avg + beta * f_max
    pad = k // 2
    f_pad = jnp.pad(f_add, ((0, 0), (pad, pad)))
    C = f_add.shape[1]
    out = jnp.zeros_like(f_add)
    for j in range(k):
        out = out + w_c[j] * f_pad[:, j:j + C]
    att = jax.nn.sigmoid(out + bias)
    o31 = x * att[:, :, None, None]

    o = _spatial_gate_ref(x, w_s)
    return 0.25 * (o + o11 + o21 + o31)


if __name__ == "__main__":
    B, C, H, W = 2, 8, 16, 16
    key = jax.random.PRNGKey(0)
    k_x, k_h, k_w, k_s, k_c1, k_c2 = jax.random.split(key, 6)

    x = jax.random.normal(k_x, (B, C, H, W), dtype=jnp.float32)

    # Three independent SpatialGate conv weights: (out=1, in=2, 5, 5), bias=False.
    w_gate_h = jax.random.normal(k_h, (50,), dtype=jnp.float32) * 0.1
    w_gate_w = jax.random.normal(k_w, (50,), dtype=jnp.float32) * 0.1
    w_gate_s = jax.random.normal(k_s, (50,), dtype=jnp.float32) * 0.1

    # ChannelAttention: alpha = beta = 0.5 (as in __init__), conv1d (1,1,k) + bias.
    k_ca = get_kernel_num(C)
    w_conv1d = jax.random.normal(k_c1, (k_ca,), dtype=jnp.float32) * 0.1
    b_conv1d = jax.random.normal(k_c2, (1,), dtype=jnp.float32) * 0.1

    params = jnp.concatenate([
        w_gate_s, w_gate_h, w_gate_w,
        jnp.array([0.5, 0.5], dtype=jnp.float32),  # alpha, beta
        b_conv1d, w_conv1d,
    ])

    out = triplet_attention(x, params, k_ca)
    out = jax.block_until_ready(out)

    ref = _triplet_attention_ref(x, params, k_ca)
    assert out.shape == (B, C, H, W)
    assert jnp.allclose(out, ref, atol=2e-4, rtol=2e-4), "mismatch vs JAX reference"

    print("KERNEL_OK")
</pallas_src>

<mosaic_0001>
module attributes {stable_mosaic.version = 11 : i64} {
  func.func @kernel(%arg0: i32, %arg1: memref<156xf32, #tpu.memory_space<smem>>, %arg2: memref<1x8x256xf32, #tpu.memory_space<vmem>>, %arg3: memref<1x8x256xf32, #tpu.memory_space<vmem>>, %arg4: memref<2x20x20xf32, #tpu.memory_space<vmem>>, %arg5: memref<2x12x20xf32, #tpu.memory_space<vmem>>, %arg6: memref<2x12x20xf32, #tpu.memory_space<vmem>>, %arg7: memref<10x1xf32, #tpu.memory_space<vmem>>, %arg8: memref<8x256xf32, #tpu.memory_space<vmem>>) attributes {dimension_semantics = [#tpu.dimension_semantics<parallel>], iteration_bounds = array<i64: 2>, scalar_prefetch = 1 : i64, scratch_operands = 5 : i64, tpu.core_type = #tpu.core_type<tc>, window_params = [{transform_indices = @transform_0, window_bounds = array<i64: 1, 8, 256>}, {transform_indices = @transform_1, window_bounds = array<i64: 1, 8, 256>}]} {
    %cst = arith.constant 0.000000e+00 : f32
    %0 = vector.broadcast %cst : f32 to vector<2x20x20xf32>
    %c0 = arith.constant 0 : index
    %c0_0 = arith.constant 0 : index
    %c0_1 = arith.constant 0 : index
    %1 = vector.load %arg4[%c0, %c0_0, %c0_1] : memref<2x20x20xf32, #tpu.memory_space<vmem>>, vector<2x20x20xf32>
    tpu.vector_store %arg4[%c0, %c0_0, %c0_1], %0 {strides = array<i32>} : memref<2x20x20xf32, #tpu.memory_space<vmem>>, vector<2x20x20xf32>,
    %cst_2 = arith.constant 0.000000e+00 : f32
    %2 = vector.broadcast %cst_2 : f32 to vector<2x12x20xf32>
    %c0_3 = arith.constant 0 : index
    %c0_4 = arith.constant 0 : index
    %c0_5 = arith.constant 0 : index
    %3 = vector.load %arg5[%c0_3, %c0_4, %c0_5] : memref<2x12x20xf32, #tpu.memory_space<vmem>>, vector<2x12x20xf32>
    tpu.vector_store %arg5[%c0_3, %c0_4, %c0_5], %2 {strides = array<i32>} : memref<2x12x20xf32, #tpu.memory_space<vmem>>, vector<2x12x20xf32>,
    %cst_6 = arith.constant 0.000000e+00 : f32
    %4 = vector.broadcast %cst_6 : f32 to vector<2x12x20xf32>
    %c0_7 = arith.constant 0 : index
    %c0_8 = arith.constant 0 : index
    %c0_9 = arith.constant 0 : index
    %5 = vector.load %arg6[%c0_7, %c0_8, %c0_9] : memref<2x12x20xf32, #tpu.memory_space<vmem>>, vector<2x12x20xf32>
    tpu.vector_store %arg6[%c0_7, %c0_8, %c0_9], %4 {strides = array<i32>} : memref<2x12x20xf32, #tpu.memory_space<vmem>>, vector<2x12x20xf32>,
    %cst_10 = arith.constant 0.000000e+00 : f32
    %6 = vector.broadcast %cst_10 : f32 to vector<10x1xf32>
    %c0_11 = arith.constant 0 : index
    %c0_12 = arith.constant 0 : index
    %7 = vector.load %arg7[%c0_11, %c0_12] : memref<10x1xf32, #tpu.memory_space<vmem>>, vector<10x1xf32>
    tpu.vector_store %arg7[%c0_11, %c0_12], %6 {strides = array<i32>} : memref<10x1xf32, #tpu.memory_space<vmem>>, vector<10x1xf32>,
    %c0_13 = arith.constant 0 : index
    %8 = memref.load %arg1[%c0_13] : memref<156xf32, #tpu.memory_space<smem>>
    %c1 = arith.constant 1 : index
    %9 = memref.load %arg1[%c1] : memref<156xf32, #tpu.memory_space<smem>>
    %c2 = arith.constant 2 : index
    %10 = memref.load %arg1[%c2] : memref<156xf32, #tpu.memory_space<smem>>
    %c3 = arith.constant 3 : index
    %11 = memref.load %arg1[%c3] : memref<156xf32, #tpu.memory_space<smem>>
    %c4 = arith.constant 4 : index
    %12 = memref.load %arg1[%c4] : memref<156xf32, #tpu.memory_space<smem>>
    %c5 = arith.constant 5 : index
    %13 = memref.load %arg1[%c5] : memref<156xf32, #tpu.memory_space<smem>>
    %c6 = arith.constant 6 : index
    %14 = memref.load %arg1[%c6] : memref<156xf32, #tpu.memory_space<smem>>
    %c7 = arith.constant 7 : index
    %15 = memref.load %arg1[%c7] : memref<156xf32, #tpu.memory_space<smem>>
    %c8 = arith.constant 8 : index
    %16 = memref.load %arg1[%c8] : memref<156xf32, #tpu.memory_space<smem>>
    %c9 = arith.constant 9 : index
    %17 = memref.load %arg1[%c9] : memref<156xf32, #tpu.memory_space<smem>>
    %c10 = arith.constant 10 : index
    %18 = memref.load %arg1[%c10] : memref<156xf32, #tpu.memory_space<smem>>
    %c11 = arith.constant 11 : index
    %19 = memref.load %arg1[%c11] : memref<156xf32, #tpu.memory_space<smem>>
    %c12 = arith.constant 12 : index
    %20 = memref.load %arg1[%c12] : memref<156xf32, #tpu.memory_space<smem>>
    %c13 = arith.constant 13 : index
    %21 = memref.load %arg1[%c13] : memref<156xf32, #tpu.memory_space<smem>>
    %c14 = arith.constant 14 : index
    %22 = memref.load %arg1[%c14] : memref<156xf32, #tpu.memory_space<smem>>
    %c15 = arith.constant 15 : index
    %23 = memref.load %arg1[%c15] : memref<156xf32, #tpu.memory_space<smem>>
    %c16 = arith.constant 16 : index
    %24 = memref.load %arg1[%c16] : memref<156xf32, #tpu.memory_space<smem>>
    %c17 = arith.constant 17 : index
    %25 = memref.load %arg1[%c17] : memref<156xf32, #tpu.memory_space<smem>>
    %c18 = arith.constant 18 : index
    %26 = memref.load %arg1[%c18] : memref<156xf32, #tpu.memory_space<smem>>
    %c19 = arith.constant 19 : index
    %27 = memref.load %arg1[%c19] : memref<156xf32, #tpu.memory_space<smem>>
    %c20 = arith.constant 20 : index
    %28 = memref.load %arg1[%c20] : memref<156xf32, #tpu.memory_space<smem>>
    %c21 = arith.constant 21 : index
    %29 = memref.load %arg1[%c21] : memref<156xf32, #tpu.memory_space<smem>>
    %c22 = arith.constant 22 : index
    %30 = memref.load %arg1[%c22] : memref<156xf32, #tpu.memory_space<smem>>
    %c23 = arith.constant 23 : index
    %31 = memref.load %arg1[%c23] : memref<156xf32, #tpu.memory_space<smem>>
    %c24 = arith.constant 24 : index
    %32 = memref.load %arg1[%c24] : memref<156xf32, #tpu.memory_space<smem>>
    %c25 = arith.constant 25 : index
    %33 = memref.load %arg1[%c25] : memref<156xf32, #tpu.memory_space<smem>>
    %c26 = arith.constant 26 : index
    %34 = memref.load %arg1[%c26] : memref<156xf32, #tpu.memory_space<smem>>
    %c27 = arith.constant 27 : index
    %35 = memref.load %arg1[%c27] : memref<156xf32, #tpu.memory_space<smem>>
    %c28 = arith.constant 28 : index
    %36 = memref.load %arg1[%c28] : memref<156xf32, #tpu.memory_space<smem>>
    %c29 = arith.constant 29 : index
    %37 = memref.load %arg1[%c29] : memref<156xf32, #tpu.memory_space<smem>>
    %c30 = arith.constant 30 : index
    %38 = memref.load %arg1[%c30] : memref<156xf32, #tpu.memory_space<smem>>
    %c31 = arith.constant 31 : index
    %39 = memref.load %arg1[%c31] : memref<156xf32, #tpu.memory_space<smem>>
    %c32 = arith.constant 32 : index
    %40 = memref.load %arg1[%c32] : memref<156xf32, #tpu.memory_space<smem>>
    %c33 = arith.constant 33 : index
    %41 = memref.load %arg1[%c33] : memref<156xf32, #tpu.memory_space<smem>>
    %c34 = arith.constant 34 : index
    %42 = memref.load %arg1[%c34] : memref<156xf32, #tpu.memory_space<smem>>
    %c35 = arith.constant 35 : index
    %43 = memref.load %arg1[%c35] : memref<156xf32, #tpu.memory_space<smem>>
    %c36 = arith.constant 36 : index
    %44 = memref.load %arg1[%c36] : memref<156xf32, #tpu.memory_space<smem>>
    %c37 = arith.constant 37 : index
    %45 = memref.load %arg1[%c37] : memref<156xf32, #tpu.memory_space<smem>>
    %c38 = arith.constant 38 : index
    %46 = memref.load %arg1[%c38] : memref<156xf32, #tpu.memory_space<smem>>
    %c39 = arith.constant 39 : index
    %47 = memref.load %arg1[%c39] : memref<156xf32, #tpu.memory_space<smem>>
    %c40 = arith.constant 40 : index
    %48 = memref.load %arg1[%c40] : memref<156xf32, #tpu.memory_space<smem>>
    %c41 = arith.constant 41 : index
    %49 = memref.load %arg1[%c41] : memref<156xf32, #tpu.memory_space<smem>>
    %c42 = arith.constant 42 : index
    %50 = memref.load %arg1[%c42] : memref<156xf32, #tpu.memory_space<smem>>
    %c43 = arith.constant 43 : index
    %51 = memref.load %arg1[%c43] : memref<156xf32, #tpu.memory_space<smem>>
    %c44 = arith.constant 44 : index
    %52 = memref.load %arg1[%c44] : memref<156xf32, #tpu.memory_space<smem>>
    %c45 = arith.constant 45 : index
    %53 = memref.load %arg1[%c45] : memref<156xf32, #tpu.memory_space<smem>>
    %c46 = arith.constant 46 : index
    %54 = memref.load %arg1[%c46] : memref<156xf32, #tpu.memory_space<smem>>
    %c47 = arith.constant 47 : index
    %55 = memref.load %arg1[%c47] : memref<156xf32, #tpu.memory_space<smem>>
    %c48 = arith.constant 48 : index
    %56 = memref.load %arg1[%c48] : memref<156xf32, #tpu.memory_space<smem>>
    %c49 = arith.constant 49 : index
    %57 = memref.load %arg1[%c49] : memref<156xf32, #tpu.memory_space<smem>>
    %c50 = arith.constant 50 : index
    %58 = memref.load %arg1[%c50] : memref<156xf32, #tpu.memory_space<smem>>
    %c51 = arith.constant 51 : index
    %59 = memref.load %arg1[%c51] : memref<156xf32, #tpu.memory_space<smem>>
    %c52 = arith.constant 52 : index
    %60 = memref.load %arg1[%c52] : memref<156xf32, #tpu.memory_space<smem>>
    %c53 = arith.constant 53 : index
    %61 = memref.load %arg1[%c53] : memref<156xf32, #tpu.memory_space<smem>>
    %c54 = arith.constant 54 : index
    %62 = memref.load %arg1[%c54] : memref<156xf32, #tpu.memory_space<smem>>
    %c55 = arith.constant 55 : index
    %63 = memref.load %arg1[%c55] : memref<156xf32, #tpu.memory_space<smem>>
    %c56 = arith.constant 56 : index
    %64 = memref.load %arg1[%c56] : memref<156xf32, #tpu.memory_space<smem>>
    %c57 = arith.constant 57 : index
    %65 = memref.load %arg1[%c57] : memref<156xf32, #tpu.memory_space<smem>>
    %c58 = arith.constant 58 : index
    %66 = memref.load %arg1[%c58] : memref<156xf32, #tpu.memory_space<smem>>
    %c59 = arith.constant 59 : index
    %67 = memref.load %arg1[%c59] : memref<156xf32, #tpu.memory_space<smem>>
    %c60 = arith.constant 60 : index
    %68 = memref.load %arg1[%c60] : memref<156xf32, #tpu.memory_space<smem>>
    %c61 = arith.constant 61 : index
    %69 = memref.load %arg1[%c61] : memref<156xf32, #tpu.memory_space<smem>>
    %c62 = arith.constant 62 : index
    %70 = memref.load %arg1[%c62] : memref<156xf32, #tpu.memory_space<smem>>
    %c63 = arith.constant 63 : index
    %71 = memref.load %arg1[%c63] : memref<156xf32, #tpu.memory_space<smem>>
    %c64 = arith.constant 64 : index
    %72 = memref.load %arg1[%c64] : memref<156xf32, #tpu.memory_space<smem>>
    %c65 = arith.constant 65 : index
    %73 = memref.load %arg1[%c65] : memref<156xf32, #tpu.memory_space<smem>>
    %c66 = arith.constant 66 : index
    %74 = memref.load %arg1[%c66] : memref<156xf32, #tpu.memory_space<smem>>
    %c67 = arith.constant 67 : index
    %75 = memref.load %arg1[%c67] : memref<156xf32, #tpu.memory_space<smem>>
    %c68 = arith.constant 68 : index
    %76 = memref.load %arg1[%c68] : memref<156xf32, #tpu.memory_space<smem>>
    %c69 = arith.constant 69 : index
    %77 = memref.load %arg1[%c69] : memref<156xf32, #tpu.memory_space<smem>>
    %c70 = arith.constant 70 : index
    %78 = memref.load %arg1[%c70] : memref<156xf32, #tpu.memory_space<smem>>
    %c71 = arith.constant 71 : index
    %79 = memref.load %arg1[%c71] : memref<156xf32, #tpu.memory_space<smem>>
    %c72 = arith.constant 72 : index
    %80 = memref.load %arg1[%c72] : memref<156xf32, #tpu.memory_space<smem>>
    %c73 = arith.constant 73 : index
    %81 = memref.load %arg1[%c73] : memref<156xf32, #tpu.memory_space<smem>>
    %c74 = arith.constant 74 : index
    %82 = memref.load %arg1[%c74] : memref<156xf32, #tpu.memory_space<smem>>
    %c75 = arith.constant 75 : index
    %83 = memref.load %arg1[%c75] : memref<156xf32, #tpu.memory_space<smem>>
    %c76 = arith.constant 76 : index
    %84 = memref.load %arg1[%c76] : memref<156xf32, #tpu.memory_space<smem>>
    %c77 = arith.constant 77 : index
    %85 = memref.load %arg1[%c77] : memref<156xf32, #tpu.memory_space<smem>>
    %c78 = arith.constant 78 : index
    %86 = memref.load %arg1[%c78] : memref<156xf32, #tpu.memory_space<smem>>
    %c79 = arith.constant 79 : index
    %87 = memref.load %arg1[%c79] : memref<156xf32, #tpu.memory_space<smem>>
    %c80 = arith.constant 80 : index
    %88 = memref.load %arg1[%c80] : memref<156xf32, #tpu.memory_space<smem>>
    %c81 = arith.constant 81 : index
    %89 = memref.load %arg1[%c81] : memref<156xf32, #tpu.memory_space<smem>>
    %c82 = arith.constant 82 : index
    %90 = memref.load %arg1[%c82] : memref<156xf32, #tpu.memory_space<smem>>
    %c83 = arith.constant 83 : index
    %91 = memref.load %arg1[%c83] : memref<156xf32, #tpu.memory_space<smem>>
    %c84 = arith.constant 84 : index
    %92 = memref.load %arg1[%c84] : memref<156xf32, #tpu.memory_space<smem>>
    %c85 = arith.constant 85 : index
    %93 = memref.load %arg1[%c85] : memref<156xf32, #tpu.memory_space<smem>>
    %c86 = arith.constant 86 : index
    %94 = memref.load %arg1[%c86] : memref<156xf32, #tpu.memory_space<smem>>
    %c87 = arith.constant 87 : index
    %95 = memref.load %arg1[%c87] : memref<156xf32, #tpu.memory_space<smem>>
    %c88 = arith.constant 88 : index
    %96 = memref.load %arg1[%c88] : memref<156xf32, #tpu.memory_space<smem>>
    %c89 = arith.constant 89 : index
    %97 = memref.load %arg1[%c89] : memref<156xf32, #tpu.memory_space<smem>>
    %c90 = arith.constant 90 : index
    %98 = memref.load %arg1[%c90] : memref<156xf32, #tpu.memory_space<smem>>
    %c91 = arith.constant 91 : index
    %99 = memref.load %arg1[%c91] : memref<156xf32, #tpu.memory_space<smem>>
    %c92 = arith.constant 92 : index
    %100 = memref.load %arg1[%c92] : memref<156xf32, #tpu.memory_space<smem>>
    %c93 = arith.constant 93 : index
    %101 = memref.load %arg1[%c93] : memref<156xf32, #tpu.memory_space<smem>>
    %c94 = arith.constant 94 : index
    %102 = memref.load %arg1[%c94] : memref<156xf32, #tpu.memory_space<smem>>
    %c95 = arith.constant 95 : index
    %103 = memref.load %arg1[%c95] : memref<156xf32, #tpu.memory_space<smem>>
    %c96 = arith.constant 96 : index
    %104 = memref.load %arg1[%c96] : memref<156xf32, #tpu.memory_space<smem>>
    %c97 = arith.constant 97 : index
    %105 = memref.load %arg1[%c97] : memref<156xf32, #tpu.memory_space<smem>>
    %c98 = arith.constant 98 : index
    %106 = memref.load %arg1[%c98] : memref<156xf32, #tpu.memory_space<smem>>
    %c99 = arith.constant 99 : index
    %107 = memref.load %arg1[%c99] : memref<156xf32, #tpu.memory_space<smem>>
    %c100 = arith.constant 100 : index
    %108 = memref.load %arg1[%c100] : memref<156xf32, #tpu.memory_space<smem>>
    %c101 = arith.constant 101 : index
    %109 = memref.load %arg1[%c101] : memref<156xf32, #tpu.memory_space<smem>>
    %c102 = arith.constant 102 : index
    %110 = memref.load %arg1[%c102] : memref<156xf32, #tpu.memory_space<smem>>
    %c103 = arith.constant 103 : index
    %111 = memref.load %arg1[%c103] : memref<156xf32, #tpu.memory_space<smem>>
    %c104 = arith.constant 104 : index
    %112 = memref.load %arg1[%c104] : memref<156xf32, #tpu.memory_space<smem>>
    %c105 = arith.constant 105 : index
    %113 = memref.load %arg1[%c105] : memref<156xf32, #tpu.memory_space<smem>>
    %c106 = arith.constant 106 : index
    %114 = memref.load %arg1[%c106] : memref<156xf32, #tpu.memory_space<smem>>
    %c107 = arith.constant 107 : index
    %115 = memref.load %arg1[%c107] : memref<156xf32, #tpu.memory_space<smem>>
    %c108 = arith.constant 108 : index
    %116 = memref.load %arg1[%c108] : memref<156xf32, #tpu.memory_space<smem>>
    %c109 = arith.constant 109 : index
    %117 = memref.load %arg1[%c109] : memref<156xf32, #tpu.memory_space<smem>>
    %c110 = arith.constant 110 : index
    %118 = memref.load %arg1[%c110] : memref<156xf32, #tpu.memory_space<smem>>
    %c111 = arith.constant 111 : index
    %119 = memref.load %arg1[%c111] : memref<156xf32, #tpu.memory_space<smem>>
    %c112 = arith.constant 112 : index
    %120 = memref.load %arg1[%c112] : memref<156xf32, #tpu.memory_space<smem>>
    %c113 = arith.constant 113 : index
    %121 = memref.load %arg1[%c113] : memref<156xf32, #tpu.memory_space<smem>>
    %c114 = arith.constant 114 : index
    %122 = memref.load %arg1[%c114] : memref<156xf32, #tpu.memory_space<smem>>
    %c115 = arith.constant 115 : index
    %123 = memref.load %arg1[%c115] : memref<156xf32, #tpu.memory_space<smem>>
    %c116 = arith.constant 116 : index
    %124 = memref.load %arg1[%c116] : memref<156xf32, #tpu.memory_space<smem>>
    %c117 = arith.constant 117 : index
    %125 = memref.load %arg1[%c117] : memref<156xf32, #tpu.memory_space<smem>>
    %c118 = arith.constant 118 : index
    %126 = memref.load %arg1[%c118] : memref<156xf32, #tpu.memory_space<smem>>
    %c119 = arith.constant 119 : index
    %127 = memref.load %arg1[%c119] : memref<156xf32, #tpu.memory_space<smem>>
    %c120 = arith.constant 120 : index
    %128 = memref.load %arg1[%c120] : memref<156xf32, #tpu.memory_space<smem>>
    %c121 = arith.constant 121 : index
    %129 = memref.load %arg1[%c121] : memref<156xf32, #tpu.memory_space<smem>>
    %c122 = arith.constant 122 : index
    %130 = memref.load %arg1[%c122] : memref<156xf32, #tpu.memory_space<smem>>
    %c123 = arith.constant 123 : index
    %131 = memref.load %arg1[%c123] : memref<156xf32, #tpu.memory_space<smem>>
    %c124 = arith.constant 124 : index
    %132 = memref.load %arg1[%c124] : memref<156xf32, #tpu.memory_space<smem>>
    %c125 = arith.constant 125 : index
    %133 = memref.load %arg1[%c125] : memref<156xf32, #tpu.memory_space<smem>>
    %c126 = arith.constant 126 : index
    %134 = memref.load %arg1[%c126] : memref<156xf32, #tpu.memory_space<smem>>
    %c127 = arith.constant 127 : index
    %135 = memref.load %arg1[%c127] : memref<156xf32, #tpu.memory_space<smem>>
    %c128 = arith.constant 128 : index
    %136 = memref.load %arg1[%c128] : memref<156xf32, #tpu.memory_space<smem>>
    %c129 = arith.constant 129 : index
    %137 = memref.load %arg1[%c129] : memref<156xf32, #tpu.memory_space<smem>>
    %c130 = arith.constant 130 : index
    %138 = memref.load %arg1[%c130] : memref<156xf32, #tpu.memory_space<smem>>
    %c131 = arith.constant 131 : index
    %139 = memref.load %arg1[%c131] : memref<156xf32, #tpu.memory_space<smem>>
    %c132 = arith.constant 132 : index
    %140 = memref.load %arg1[%c132] : memref<156xf32, #tpu.memory_space<smem>>
    %c133 = arith.constant 133 : index
    %141 = memref.load %arg1[%c133] : memref<156xf32, #tpu.memory_space<smem>>
    %c134 = arith.constant 134 : index
    %142 = memref.load %arg1[%c134] : memref<156xf32, #tpu.memory_space<smem>>
    %c135 = arith.constant 135 : index
    %143 = memref.load %arg1[%c135] : memref<156xf32, #tpu.memory_space<smem>>
    %c136 = arith.constant 136 : index
    %144 = memref.load %arg1[%c136] : memref<156xf32, #tpu.memory_space<smem>>
    %c137 = arith.constant 137 : index
    %145 = memref.load %arg1[%c137] : memref<156xf32, #tpu.memory_space<smem>>
    %c138 = arith.constant 138 : index
    %146 = memref.load %arg1[%c138] : memref<156xf32, #tpu.memory_space<smem>>
    %c139 = arith.constant 139 : index
    %147 = memref.load %arg1[%c139] : memref<156xf32, #tpu.memory_space<smem>>
    %c140 = arith.constant 140 : index
    %148 = memref.load %arg1[%c140] : memref<156xf32, #tpu.memory_space<smem>>
    %c141 = arith.constant 141 : index
    %149 = memref.load %arg1[%c141] : memref<156xf32, #tpu.memory_space<smem>>
    %c142 = arith.constant 142 : index
    %150 = memref.load %arg1[%c142] : memref<156xf32, #tpu.memory_space<smem>>
    %c143 = arith.constant 143 : index
    %151 = memref.load %arg1[%c143] : memref<156xf32, #tpu.memory_space<smem>>
    %c144 = arith.constant 144 : index
    %152 = memref.load %arg1[%c144] : memref<156xf32, #tpu.memory_space<smem>>
    %c145 = arith.constant 145 : index
    %153 = memref.load %arg1[%c145] : memref<156xf32, #tpu.memory_space<smem>>
    %c146 = arith.constant 146 : index
    %154 = memref.load %arg1[%c146] : memref<156xf32, #tpu.memory_space<smem>>
    %c147 = arith.constant 147 : index
    %155 = memref.load %arg1[%c147] : memref<156xf32, #tpu.memory_space<smem>>
    %c148 = arith.constant 148 : index
    %156 = memref.load %arg1[%c148] : memref<156xf32, #tpu.memory_space<smem>>
    %c149 = arith.constant 149 : index
    %157 = memref.load %arg1[%c149] : memref<156xf32, #tpu.memory_space<smem>>
    %c153 = arith.constant 153 : index
    %158 = memref.load %arg1[%c153] : memref<156xf32, #tpu.memory_space<smem>>
    %c154 = arith.constant 154 : index
    %159 = memref.load %arg1[%c154] : memref<156xf32, #tpu.memory_space<smem>>
    %c155 = arith.constant 155 : index
    %160 = memref.load %arg1[%c155] : memref<156xf32, #tpu.memory_space<smem>>
    %c150 = arith.constant 150 : index
    %161 = memref.load %arg1[%c150] : memref<156xf32, #tpu.memory_space<smem>>
    %c151 = arith.constant 151 : index
    %162 = memref.load %arg1[%c151] : memref<156xf32, #tpu.memory_space<smem>>
    %c152 = arith.constant 152 : index
    %163 = memref.load %arg1[%c152] : memref<156xf32, #tpu.memory_space<smem>>
    %cst_14 = arith.constant 0xFF800000 : f32
    %164 = vector.broadcast %cst_14 : f32 to vector<8x16xf32>
    %cst_15 = arith.constant 0.000000e+00 : f32
    %165 = vector.broadcast %cst_15 : f32 to vector<8x16xf32>
    %c0_16 = arith.constant 0 : index
    %c0_17 = arith.constant 0 : index
    %c0_18 = arith.constant 0 : index
    %166 = vector.load %arg2[%c0_16, %c0_17, %c0_18] : memref<1x8x256xf32, #tpu.memory_space<vmem>>, vector<1x8x16xf32>
    %167 = vector.shape_cast %166 : vector<1x8x16xf32> to vector<8x16xf32>
    %168 = arith.maximumf %164, %167 : vector<8x16xf32>
    %169 = arith.addf %165, %167 : vector<8x16xf32>
    %cst_19 = arith.constant dense<0xFF800000> : vector<16xf32>
    %170 = vector.multi_reduction <maximumf>, %167, %cst_19 [0] : vector<8x16xf32> to vector<16xf32>
    %171 = vector.shape_cast %170 : vector<16xf32> to vector<1x16xf32>
    %c0_20 = arith.constant 0 : index
    %c2_21 = arith.constant 2 : index
    %c2_22 = arith.constant 2 : index
    %172 = vector.load %arg4[%c0_20, %c2_21, %c2_22] : memref<2x20x20xf32, #tpu.memory_space<vmem>>, vector<1x1x16xf32>
    %173 = vector.shape_cast %172 : vector<1x1x16xf32> to vector<1x16xf32>
    %174 = vector.shape_cast %171 : vector<1x16xf32> to vector<1x1x16xf32>
    tpu.vector_store %arg4[%c0_20, %c2_21, %c2_22], %174 {strides = array<i32>} : memref<2x20x20xf32, #tpu.memory_space<vmem>>, vector<1x1x16xf32>,
    %cst_23 = arith.constant dense<0.000000e+00> : vector<16xf32>
    %175 = vector.multi_reduction <add>, %167, %cst_23 [0] : vector<8x16xf32> to vector<16xf32>
    %176 = vector.shape_cast %175 : vector<16xf32> to vector<1x16xf32>
    %cst_24 = arith.constant 1.250000e-01 : f32
    %177 = vector.broadcast %cst_24 : f32 to vector<1x16xf32>
    %178 = arith.mulf %176, %177 : vector<1x16xf32>
    %c1_25 = arith.constant 1 : index
    %c2_26 = arith.constant 2 : index
    %c2_27 = arith.constant 2 : index
    %179 = vector.load %arg4[%c1_25, %c2_26, %c2_27] : memref<2x20x20xf32, #tpu.memory_space<vmem>>, vector<1x1x16xf32>
    %180 = vector.shape_cast %179 : vector<1x1x16xf32> to vector<1x16xf32>
    %181 = vector.shape_cast %178 : vector<1x16xf32> to vector<1x1x16xf32>
    tpu.vector_store %arg4[%c1_25, %c2_26, %c2_27], %181 {strides = array<i32>} : memref<2x20x20xf32, #tpu.memory_space<vmem>>, vector<1x1x16xf32>,
    %cst_28 = arith.constant dense<0xFF800000> : vector<8xf32>
    %182 = vector.multi_reduction <maximumf>, %167, %cst_28 [1] : vector<8x16xf32> to vector<8xf32>
    %183 = vector.shape_cast %182 : vector<8xf32> to vector<8x1xf32>
    %c0_29 = arith.constant 0 : index
    %c2_30 = arith.constant 2 : index
    %c2_31 = arith.constant 2 : index
    %184 = vector.load %arg6[%c0_29, %c2_30, %c2_31] : memref<2x12x20xf32, #tpu.memory_space<vmem>>, vector<1x8x1xf32>
    %185 = vector.shape_cast %184 : vector<1x8x1xf32> to vector<8x1xf32>
    %186 = vector.shape_cast %183 : vector<8x1xf32> to vector<1x8x1xf32>
    tpu.vector_store %arg6[%c0_29, %c2_30, %c2_31], %186 {strides = array<i32>} : memref<2x12x20xf32, #tpu.memory_space<vmem>>, vector<1x8x1xf32>,
    %cst_32 = arith.constant dense<0.000000e+00> : vector<8xf32>
    %187 = vector.multi_reduction <add>, %167, %cst_32 [1] : vector<8x16xf32> to vector<8xf32>
    %188 = vector.shape_cast %187 : vector<8xf32> to vector<8x1xf32>
    %cst_33 = arith.constant 6.250000e-02 : f32
    %189 = vector.broadcast %cst_33 : f32 to vector<8x1xf32>
    %190 = arith.mulf %188, %189 : vector<8x1xf32>
    %c1_34 = arith.constant 1 : index
    %c2_35 = arith.constant 2 : index
    %c2_36 = arith.constant 2 : index
    %191 = vector.load %arg6[%c1_34, %c2_35, %c2_36] : memref<2x12x20xf32, #tpu.memory_space<vmem>>, vector<1x8x1xf32>
    %192 = vector.shape_cast %191 : vector<1x8x1xf32> to vector<8x1xf32>
    %193 = vector.shape_cast %190 : vector<8x1xf32> to vector<1x8x1xf32>
    tpu.vector_store %arg6[%c1_34, %c2_35, %c2_36], %193 {strides = array<i32>} : memref<2x12x20xf32, #tpu.memory_space<vmem>>, vector<1x8x1xf32>,
    %c0_37 = arith.constant 0 : index
    %c0_38 = arith.constant 0 : index
    %c16_39 = arith.constant 16 : index
    %194 = vector.load %arg2[%c0_37, %c0_38, %c16_39] : memref<1x8x256xf32, #tpu.memory_space<vmem>>, vector<1x8x16xf32>
    %195 = vector.shape_cast %194 : vector<1x8x16xf32> to vector<8x16xf32>
    %196 = arith.maximumf %168, %195 : vector<8x16xf32>
    %197 = arith.addf %169, %195 : vector<8x16xf32>
    %cst_40 = arith.constant dense<0xFF800000> : vector<16xf32>
    %198 = vector.multi_reduction <maximumf>, %195, %cst_40 [0] : vector<8x16xf32> to vector<16xf32>
    %199 = vector.shape_cast %198 : vector<16xf32> to vector<1x16xf32>
    %c0_41 = arith.constant 0 : index
    %c3_42 = arith.constant 3 : index
    %c2_43 = arith.constant 2 : index
    %200 = vector.load %arg4[%c0_41, %c3_42, %c2_43] : memref<2x20x20xf32, #tpu.memory_space<vmem>>, vector<1x1x16xf32>
    %201 = vector.shape_cast %200 : vector<1x1x16xf32> to vector<1x16xf32>
    %202 = vector.shape_cast %199 : vector<1x16xf32> to vector<1x1x16xf32>
    tpu.vector_store %arg4[%c0_41, %c3_42, %c2_43], %202 {strides = array<i32>} : memref<2x20x20xf32, #tpu.memory_space<vmem>>, vector<1x1x16xf32>,
    %cst_44 = arith.constant dense<0.000000e+00> : vector<16xf32>
    %203 = vector.multi_reduction <add>, %195, %cst_44 [0] : vector<8x16xf32> to vector<16xf32>
    %204 = vector.shape_cast %203 : vector<16xf32> to vector<1x16xf32>
    %cst_45 = arith.constant 1.250000e-01 : f32
    %205 = vector.broadcast %cst_45 : f32 to vector<1x16xf32>
    %206 = arith.mulf %204, %205 : vector<1x16xf32>
    %c1_46 = arith.constant 1 : index
    %c3_47 = arith.constant 3 : index
    %c2_48 = arith.constant 2 : index
    %207 = vector.load %arg4[%c1_46, %c3_47, %c2_48] : memref<2x20x20xf32, #tpu.memory_space<vmem>>, vector<1x1x16xf32>
    %208 = vector.shape_cast %207 : vector<1x1x16xf32> to vector<1x16xf32>
    %209 = vector.shape_cast %206 : vector<1x16xf32> to vector<1x1x16xf32>
    tpu.vector_store %arg4[%c1_46, %c3_47, %c2_48], %209 {strides = array<i32>} : memref<2x20x20xf32, #tpu.memory_space<vmem>>, vector<1x1x16xf32>,
    %cst_49 = arith.constant dense<0xFF800000> : vector<8xf32>
    %210 = vector.multi_reduction <maximumf>, %195, %cst_49 [1] : vector<8x16xf32> to vector<8xf32>
    %211 = vector.shape_cast %210 : vector<8xf32> to vector<8x1xf32>
    %c0_50 = arith.constant 0 : index
    %c2_51 = arith.constant 2 : index
    %c3_52 = arith.constant 3 : index
    %212 = vector.load %arg6[%c0_50, %c2_51, %c3_52] : memref<2x12x20xf32, #tpu.memory_space<vmem>>, vector<1x8x1xf32>
    %213 = vector.shape_cast %212 : vector<1x8x1xf32> to vector<8x1xf32>
    %214 = vector.shape_cast %211 : vector<8x1xf32> to vector<1x8x1xf32>
    tpu.vector_store %arg6[%c0_50, %c2_51, %c3_52], %214 {strides = array<i32>} : memref<2x12x20xf32, #tpu.memory_space<vmem>>, vector<1x8x1xf32>,
    %cst_53 = arith.constant dense<0.000000e+00> : vector<8xf32>
    %215 = vector.multi_reduction <add>, %195, %cst_53 [1] : vector<8x16xf32> to vector<8xf32>
    %216 = vector.shape_cast %215 : vector<8xf32> to vector<8x1xf32>
    %cst_54 = arith.constant 6.250000e-02 : f32
    %217 = vector.broadcast %cst_54 : f32 to vector<8x1xf32>
    %218 = arith.mulf %216, %217 : vector<8x1xf32>
    %c1_55 = arith.constant 1 : index
    %c2_56 = arith.constant 2 : index
    %c3_57 = arith.constant 3 : index
    %219 = vector.load %arg6[%c1_55, %c2_56, %c3_57] : memref<2x12x20xf32, #tpu.memory_space<vmem>>, vector<1x8x1xf32>
    %220 = vector.shape_cast %219 : vector<1x8x1xf32> to vector<8x1xf32>
    %221 = vector.shape_cast %218 : vector<8x1xf32> to vector<1x8x1xf32>
    tpu.vector_store %arg6[%c1_55, %c2_56, %c3_57], %221 {strides = array<i32>} : memref<2x12x20xf32, #tpu.memory_space<vmem>>, vector<1x8x1xf32>,
    %c0_58 = arith.constant 0 : index
    %c0_59 = arith.constant 0 : index
    %c32_60 = arith.constant 32 : index
    %222 = vector.load %arg2[%c0_58, %c0_59, %c32_60] : memref<1x8x256xf32, #tpu.memory_space<vmem>>, vector<1x8x16xf32>
    %223 = vector.shape_cast %222 : vector<1x8x16xf32> to vector<8x16xf32>
    %224 = arith.maximumf %196, %223 : vector<8x16xf32>
    %225 = arith.addf %197, %223 : vector<8x16xf32>
    %cst_61 = arith.constant dense<0xFF800000> : vector<16xf32>
    %226 = vector.multi_reduction <maximumf>, %223, %cst_61 [0] : vector<8x16xf32> to vector<16xf32>
    %227 = vector.shape_cast %226 : vector<16xf32> to vector<1x16xf32>
    %c0_62 = arith.constant 0 : index
    %c4_63 = arith.constant 4 : index
    %c2_64 = arith.constant 2 : index
    %228 = vector.load %arg4[%c0_62, %c4_63, %c2_64] : memref<2x20x20xf32, #tpu.memory_space<vmem>>, vector<1x1x16xf32>
    %229 = vector.shape_cast %228 : vector<1x1x16xf32> to vector<1x16xf32>
    %230 = vector.shape_cast %227 : vector<1x16xf32> to vector<1x1x16xf32>
    tpu.vector_store %arg4[%c0_62, %c4_63, %c2_64], %230 {strides = array<i32>} : memref<2x20x20xf32, #tpu.memory_space<vmem>>, vector<1x1x16xf32>,
    %cst_65 = arith.constant dense<0.000000e+00> : vector<16xf32>
    %231 = vector.multi_reduction <add>, %223, %cst_65 [0] : vector<8x16xf32> to vector<16xf32>
    %232 = vector.shape_cast %231 : vector<16xf32> to vector<1x16xf32>
    %cst_66 = arith.constant 1.250000e-01 : f32
    %233 = vector.broadcast %cst_66 : f32 to vector<1x16xf32>
    %234 = arith.mulf %232, %233 : vector<1x16xf32>
    %c1_67 = arith.constant 1 : index
    %c4_68 = arith.constant 4 : index
    %c2_69 = arith.constant 2 : index
    %235 = vector.load %arg4[%c1_67, %c4_68, %c2_69] : memref<2x20x20xf32, #tpu.memory_space<vmem>>, vector<1x1x16xf32>
    %236 = vector.shape_cast %235 : vector<1x1x16xf32> to vector<1x16xf32>
    %237 = vector.shape_cast %234 : vector<1x16xf32> to vector<1x1x16xf32>
    tpu.vector_store %arg4[%c1_67, %c4_68, %c2_69], %237 {strides = array<i32>} : memref<2x20x20xf32, #tpu.memory_space<vmem>>, vector<1x1x16xf32>,
    %cst_70 = arith.constant dense<0xFF800000> : vector<8xf32>
    %238 = vector.multi_reduction <maximumf>, %223, %cst_70 [1] : vector<8x16xf32> to vector<8xf32>
    %239 = vector.shape_cast %238 : vector<8xf32> to vector<8x1xf32>
    %c0_71 = arith.constant 0 : index
    %c2_72 = arith.constant 2 : index
    %c4_73 = arith.constant 4 : index
    %240 = vector.load %arg6[%c0_71, %c2_72, %c4_73] : memref<2x12x20xf32, #tpu.memory_space<vmem>>, vector<1x8x1xf32>
    %241 = vector.shape_cast %240 : vector<1x8x1xf32> to vector<8x1xf32>
    %242 = vector.shape_cast %239 : vector<8x1xf32> to vector<1x8x1xf32>
    tpu.vector_store %arg6[%c0_71, %c2_72, %c4_73], %242 {strides = array<i32>} : memref<2x12x20xf32, #tpu.memory_space<vmem>>, vector<1x8x1xf32>,
    %cst_74 = arith.constant dense<0.000000e+00> : vector<8xf32>
    %243 = vector.multi_reduction <add>, %223, %cst_74 [1] : vector<8x16xf32> to vector<8xf32>
    %244 = vector.shape_cast %243 : vector<8xf32> to vector<8x1xf32>
    %cst_75 = arith.constant 6.250000e-02 : f32
    %245 = vector.broadcast %cst_75 : f32 to vector<8x1xf32>
    %246 = arith.mulf %244, %245 : vector<8x1xf32>
    %c1_76 = arith.constant 1 : index
    %c2_77 = arith.constant 2 : index
    %c4_78 = arith.constant 4 : index
    %247 = vector.load %arg6[%c1_76, %c2_77, %c4_78] : memref<2x12x20xf32, #tpu.memory_space<vmem>>, vector<1x8x1xf32>
    %248 = vector.shape_cast %247 : vector<1x8x1xf32> to vector<8x1xf32>
    %249 = vector.shape_cast %246 : vector<8x1xf32> to vector<1x8x1xf32>
    tpu.vector_store %arg6[%c1_76, %c2_77, %c4_78], %249 {strides = array<i32>} : memref<2x12x20xf32, #tpu.memory_space<vmem>>, vector<1x8x1xf32>,
    %c0_79 = arith.constant 0 : index
    %c0_80 = arith.constant 0 : index
    %c48_81 = arith.constant 48 : index
    %250 = vector.load %arg2[%c0_79, %c0_80, %c48_81] : memref<1x8x256xf32, #tpu.memory_space<vmem>>, vector<1x8x16xf32>
    %251 = vector.shape_cast %250 : vector<1x8x16xf32> to vector<8x16xf32>
    %252 = arith.maximumf %224, %251 : vector<8x16xf32>
    %253 = arith.addf %225, %251 : vector<8x16xf32>
    %cst_82 = arith.constant dense<0xFF800000> : vector<16xf32>
    %254 = vector.multi_reduction <maximumf>, %251, %cst_82 [0] : vector<8x16xf32> to vector<16xf32>
    %255 = vector.shape_cast %254 : vector<16xf32> to vector<1x16xf32>
    %c0_83 = arith.constant 0 : index
    %c5_84 = arith.constant 5 : index
    %c2_85 = arith.constant 2 : index
    %256 = vector.load %arg4[%c0_83, %c5_84, %c2_85] : memref<2x20x20xf32, #tpu.memory_space<vmem>>, vector<1x1x16xf32>
    %257 = vector.shape_cast %256 : vector<1x1x16xf32> to vector<1x16xf32>
    %258 = vector.shape_cast %255 : vector<1x16xf32> to vector<1x1x16xf32>
    tpu.vector_store %arg4[%c0_83, %c5_84, %c2_85], %258 {strides = array<i32>} : memref<2x20x20xf32, #tpu.memory_space<vmem>>, vector<1x1x16xf32>,
    %cst_86 = arith.constant dense<0.000000e+00> : vector<16xf32>
    %259 = vector.multi_reduction <add>, %251, %cst_86 [0] : vector<8x16xf32> to vector<16xf32>
    %260 = vector.shape_cast %259 : vector<16xf32> to vector<1x16xf32>
    %cst_87 = arith.constant 1.250000e-01 : f32
    %261 = vector.broadcast %cst_87 : f32 to vector<1x16xf32>
    %262 = arith.mulf %260, %261 : vector<1x16xf32>
    %c1_88 = arith.constant 1 : index
    %c5_89 = arith.constant 5 : index
    %c2_90 = arith.constant 2 : index
    %263 = vector.load %arg4[%c1_88, %c5_89, %c2_90] : memref<2x20x20xf32, #tpu.memory_space<vmem>>, vector<1x1x16xf32>
    %264 = vector.shape_cast %263 : vector<1x1x16xf32> to vector<1x16xf32>
    %265 = vector.shape_cast %262 : vector<1x16xf32> to vector<1x1x16xf32>
    tpu.vector_store %arg4[%c1_88, %c5_89, %c2_90], %265 {strides = array<i32>} : memref<2x20x20xf32, #tpu.memory_space<vmem>>, vector<1x1x16xf32>,
    %cst_91 = arith.constant dense<0xFF800000> : vector<8xf32>
    %266 = vector.multi_reduction <maximumf>, %251, %cst_91 [1] : vector<8x16xf32> to vector<8xf32>
    %267 = vector.shape_cast %266 : vector<8xf32> to vector<8x1xf32>
    %c0_92 = arith.constant 0 : index
    %c2_93 = arith.constant 2 : index
    %c5_94 = arith.constant 5 : index
    %268 = vector.load %arg6[%c0_92, %c2_93, %c5_94] : memref<2x12x20xf32, #tpu.memory_space<vmem>>, vector<1x8x1xf32>
    %269 = vector.shape_cast %268 : vector<1x8x1xf32> to vector<8x1xf32>
    %270 = vector.shape_cast %267 : vector<8x1xf32> to vector<1x8x1xf32>
    tpu.vector_store %arg6[%c0_92, %c2_93, %c5_94], %270 {strides = array<i32>} : memref<2x12x20xf32, #tpu.memory_space<vmem>>, vector<1x8x1xf32>,
    %cst_95 = arith.constant dense<0.000000e+00> : vector<8xf32>
    %271 = vector.multi_reduction <add>, %251, %cst_95 [1] : vector<8x16xf32> to vector<8xf32>
    %272 = vector.shape_cast %271 : vector<8xf32> to vector<8x1xf32>
    %cst_96 = arith.constant 6.250000e-02 : f32
    %273 = vector.broadcast %cst_96 : f32 to vector<8x1xf32>
    %274 = arith.mulf %272, %273 : vector<8x1xf32>
    %c1_97 = arith.constant 1 : index
    %c2_98 = arith.constant 2 : index
    %c5_99 = arith.constant 5 : index
    %275 = vector.load %arg6[%c1_97, %c2_98, %c5_99] : memref<2x12x20xf32, #tpu.memory_space<vmem>>, vector<1x8x1xf32>
    %276 = vector.shape_cast %275 : vector<1x8x1xf32> to vector<8x1xf32>
    %277 = vector.shape_cast %274 : vector<8x1xf32> to vector<1x8x1xf32>
    tpu.vector_store %arg6[%c1_97, %c2_98, %c5_99], %277 {strides = array<i32>} : memref<2x12x20xf32, #tpu.memory_space<vmem>>, vector<1x8x1xf32>,
    %c0_100 = arith.constant 0 : index
    %c0_101 = arith.constant 0 : index
    %c64_102 = arith.constant 64 : index
    %278 = vector.load %arg2[%c0_100, %c0_101, %c64_102] : memref<1x8x256xf32, #tpu.memory_space<vmem>>, vector<1x8x16xf32>
    %279 = vector.shape_cast %278 : vector<1x8x16xf32> to vector<8x16xf32>
    %280 = arith.maximumf %252, %279 : vector<8x16xf32>
    %281 = arith.addf %253, %279 : vector<8x16xf32>
    %cst_103 = arith.constant dense<0xFF800000> : vector<16xf32>
    %282 = vector.multi_reduction <maximumf>, %279, %cst_103 [0] : vector<8x16xf32> to vector<16xf32>
    %283 = vector.shape_cast %282 : vector<16xf32> to vector<1x16xf32>
    %c0_104 = arith.constant 0 : index
    %c6_105 = arith.constant 6 : index
    %c2_106 = arith.constant 2 : index
    %284 = vector.load %arg4[%c0_104, %c6_105, %c2_106] : memref<2x20x20xf32, #tpu.memory_space<vmem>>, vector<1x1x16xf32>
    %285 = vector.shape_cast %284 : vector<1x1x16xf32> to vector<1x16xf32>
    %286 = vector.shape_cast %283 : vector<1x16xf32> to vector<1x1x16xf32>
    tpu.vector_store %arg4[%c0_104, %c6_105, %c2_106], %286 {strides = array<i32>} : memref<2x20x20xf32, #tpu.memory_space<vmem>>, vector<1x1x16xf32>,
    %cst_107 = arith.constant dense<0.000000e+00> : vector<16xf32>
    %287 = vector.multi_reduction <add>, %279, %cst_107 [0] : vector<8x16xf32> to vector<16xf32>
    %288 = vector.shape_cast %287 : vector<16xf32> to vector<1x16xf32>
    %cst_108 = arith.constant 1.250000e-01 : f32
    %289 = vector.broadcast %cst_108 : f32 to vector<1x16xf32>
    %290 = arith.mulf %288, %289 : vector<1x16xf32>
    %c1_109 = arith.constant 1 : index
    %c6_110 = arith.constant 6 : index
    %c2_111 = arith.constant 2 : index
    %291 = vector.load %arg4[%c1_109, %c6_110, %c2_111] : memref<2x20x20xf32, #tpu.memory_space<vmem>>, vector<1x1x16xf32>
    %292 = vector.shape_cast %291 : vector<1x1x16xf32> to vector<1x16xf32>
    %293 = vector.shape_cast %290 : vector<1x16xf32> to vector<1x1x16xf32>
    tpu.vector_store %arg4[%c1_109, %c6_110, %c2_111], %293 {strides = array<i32>} : memref<2x20x20xf32, #tpu.memory_space<vmem>>, vector<1x1x16xf32>,
    %cst_112 = arith.constant dense<0xFF800000> : vector<8xf32>
    %294 = vector.multi_reduction <maximumf>, %279, %cst_112 [1] : vector<8x16xf32> to vector<8xf32>
    %295 = vector.shape_cast %294 : vector<8xf32> to vector<8x1xf32>
    %c0_113 = arith.constant 0 : index
    %c2_114 = arith.constant 2 : index
    %c6_115 = arith.constant 6 : index
    %296 = vector.load %arg6[%c0_113, %c2_114, %c6_115] : memref<2x12x20xf32, #tpu.memory_space<vmem>>, vector<1x8x1xf32>
    %297 = vector.shape_cast %296 : vector<1x8x1xf32> to vector<8x1xf32>
    %298 = vector.shape_cast %295 : vector<8x1xf32> to vector<1x8x1xf32>
    tpu.vector_store %arg6[%c0_113, %c2_114, %c6_115], %298 {strides = array<i32>} : memref<2x12x20xf32, #tpu.memory_space<vmem>>, vector<1x8x1xf32>,
    %cst_116 = arith.constant dense<0.000000e+00> : vector<8xf32>
    %299 = vector.multi_reduction <add>, %279, %cst_116 [1] : vector<8x16xf32> to vector<8xf32>
    %300 = vector.shape_cast %299 : vector<8xf32> to vector<8x1xf32>
    %cst_117 = arith.constant 6.250000e-02 : f32
    %301 = vector.broadcast %cst_117 : f32 to vector<8x1xf32>
    %302 = arith.mulf %300, %301 : vector<8x1xf32>
    %c1_118 = arith.constant 1 : index
    %c2_119 = arith.constant 2 : index
    %c6_120 = arith.constant 6 : index
    %303 = vector.load %arg6[%c1_118, %c2_119, %c6_120] : memref<2x12x20xf32, #tpu.memory_space<vmem>>, vector<1x8x1xf32>
    %304 = vector.shape_cast %303 : vector<1x8x1xf32> to vector<8x1xf32>
    %305 = vector.shape_cast %302 : vector<8x1xf32> to vector<1x8x1xf32>
    tpu.vector_store %arg6[%c1_118, %c2_119, %c6_120], %305 {strides = array<i32>} : memref<2x12x20xf32, #tpu.memory_space<vmem>>, vector<1x8x1xf32>,
    %c0_121 = arith.constant 0 : index
    %c0_122 = arith.constant 0 : index
    %c80_123 = arith.constant 80 : index
    %306 = vector.load %arg2[%c0_121, %c0_122, %c80_123] : memref<1x8x256xf32, #tpu.memory_space<vmem>>, vector<1x8x16xf32>
    %307 = vector.shape_cast %306 : vector<1x8x16xf32> to vector<8x16xf32>
    %308 = arith.maximumf %280, %307 : vector<8x16xf32>
    %309 = arith.addf %281, %307 : vector<8x16xf32>
    %cst_124 = arith.constant dense<0xFF800000> : vector<16xf32>
    %310 = vector.multi_reduction <maximumf>, %307, %cst_124 [0] : vector<8x16xf32> to vector<16xf32>
    %311 = vector.shape_cast %310 : vector<16xf32> to vector<1x16xf32>
    %c0_125 = arith.constant 0 : index
    %c7_126 = arith.constant 7 : index
    %c2_127 = arith.constant 2 : index
    %312 = vector.load %arg4[%c0_125, %c7_126, %c2_127] : memref<2x20x20xf32, #tpu.memory_space<vmem>>, vector<1x1x16xf32>
    %313 = vector.shape_cast %312 : vector<1x1x16xf32> to vector<1x16xf32>
    %314 = vector.shape_cast %311 : vector<1x16xf32> to vector<1x1x16xf32>
    tpu.vector_store %arg4[%c0_125, %c7_126, %c2_127], %314 {strides = array<i32>} : memref<2x20x20xf32, #tpu.memory_space<vmem>>, vector<1x1x16xf32>,
    %cst_128 = arith.constant dense<0.000000e+00> : vector<16xf32>
    %315 = vector.multi_reduction <add>, %307, %cst_128 [0] : vector<8x16xf32> to vector<16xf32>
    %316 = vector.shape_cast %315 : vector<16xf32> to vector<1x16xf32>
    %cst_129 = arith.constant 1.250000e-01 : f32
    %317 = vector.broadcast %cst_129 : f32 to vector<1x16xf32>
    %318 = arith.mulf %316, %317 : vector<1x16xf32>
    %c1_130 = arith.constant 1 : index
    %c7_131 = arith.constant 7 : index
    %c2_132 = arith.constant 2 : index
    %319 = vector.load %arg4[%c1_130, %c7_131, %c2_132] : memref<2x20x20xf32, #tpu.memory_space<vmem>>, vector<1x1x16xf32>
    %320 = vector.shape_cast %319 : vector<1x1x16xf32> to vector<1x16xf32>
    %321 = vector.shape_cast %318 : vector<1x16xf32> to vector<1x1x16xf32>
    tpu.vector_store %arg4[%c1_130, %c7_131, %c2_132], %321 {strides = array<i32>} : memref<2x20x20xf32, #tpu.memory_space<vmem>>, vector<1x1x16xf32>,
    %cst_133 = arith.constant dense<0xFF800000> : vector<8xf32>
    %322 = vector.multi_reduction <maximumf>, %307, %cst_133 [1] : vector<8x16xf32> to vector<8xf32>
    %323 = vector.shape_cast %322 : vector<8xf32> to vector<8x1xf32>
    %c0_134 = arith.constant 0 : index
    %c2_135 = arith.constant 2 : index
    %c7_136 = arith.constant 7 : index
    %324 = vector.load %arg6[%c0_134, %c2_135, %c7_136] : memref<2x12x20xf32, #tpu.memory_space<vmem>>, vector<1x8x1xf32>
    %325 = vector.shape_cast %324 : vector<1x8x1xf32> to vector<8x1xf32>
    %326 = vector.shape_cast %323 : vector<8x1xf32> to vector<1x8x1xf32>
    tpu.vector_store %arg6[%c0_134, %c2_135, %c7_136], %326 {strides = array<i32>} : memref<2x12x20xf32, #tpu.memory_space<vmem>>, vector<1x8x1xf32>,
    %cst_137 = arith.constant dense<0.000000e+00> : vector<8xf32>
    %327 = vector.multi_reduction <add>, %307, %cst_137 [1] : vector<8x16xf32> to vector<8xf32>
    %328 = vector.shape_cast %327 : vector<8xf32> to vector<8x1xf32>
    %cst_138 = arith.constant 6.250000e-02 : f32
    %329 = vector.broadcast %cst_138 : f32 to vector<8x1xf32>
    %330 = arith.mulf %328, %329 : vector<8x1xf32>
    %c1_139 = arith.constant 1 : index
    %c2_140 = arith.constant 2 : index
    %c7_141 = arith.constant 7 : index
    %331 = vector.load %arg6[%c1_139, %c2_140, %c7_141] : memref<2x12x20xf32, #tpu.memory_space<vmem>>, vector<1x8x1xf32>
    %332 = vector.shape_cast %331 : vector<1x8x1xf32> to vector<8x1xf32>
    %333 = vector.shape_cast %330 : vector<8x1xf32> to vector<1x8x1xf32>
    tpu.vector_store %arg6[%c1_139, %c2_140, %c7_141], %333 {strides = array<i32>} : memref<2x12x20xf32, #tpu.memory_space<vmem>>, vector<1x8x1xf32>,
    %c0_142 = arith.constant 0 : index
    %c0_143 = arith.constant 0 : index
    %c96_144 = arith.constant 96 : index
    %334 = vector.load %arg2[%c0_142, %c0_143, %c96_144] : memref<1x8x256xf32, #tpu.memory_space<vmem>>, vector<1x8x16xf32>
    %335 = vector.shape_cast %334 : vector<1x8x16xf32> to vector<8x16xf32>
    %336 = arith.maximumf %308, %335 : vector<8x16xf32>
    %337 = arith.addf %309, %335 : vector<8x16xf32>
    %cst_145 = arith.constant dense<0xFF800000> : vector<16xf32>
    %338 = vector.multi_reduction <maximumf>, %335, %cst_145 [0] : vector<8x16xf32> to vector<16xf32>
    %339 = vector.shape_cast %338 : vector<16xf32> to vector<1x16xf32>
    %c0_146 = arith.constant 0 : index
    %c8_147 = arith.constant 8 : index
    %c2_148 = arith.constant 2 : index
    %340 = vector.load %arg4[%c0_146, %c8_147, %c2_148] : memref<2x20x20xf32, #tpu.memory_space<vmem>>, vector<1x1x16xf32>
    %341 = vector.shape_cast %340 : vector<1x1x16xf32> to vector<1x16xf32>
    %342 = vector.shape_cast %339 : vector<1x16xf32> to vector<1x1x16xf32>
    tpu.vector_store %arg4[%c0_146, %c8_147, %c2_148], %342 {strides = array<i32>} : memref<2x20x20xf32, #tpu.memory_space<vmem>>, vector<1x1x16xf32>,
    %cst_149 = arith.constant dense<0.000000e+00> : vector<16xf32>
    %343 = vector.multi_reduction <add>, %335, %cst_149 [0] : vector<8x16xf32> to vector<16xf32>
    %344 = vector.shape_cast %343 : vector<16xf32> to vector<1x16xf32>
    %cst_150 = arith.constant 1.250000e-01 : f32
    %345 = vector.broadcast %cst_150 : f32 to vector<1x16xf32>
    %346 = arith.mulf %344, %345 : vector<1x16xf32>
    %c1_151 = arith.constant 1 : index
    %c8_152 = arith.constant 8 : index
    %c2_153 = arith.constant 2 : index
    %347 = vector.load %arg4[%c1_151, %c8_152, %c2_153] : memref<2x20x20xf32, #tpu.memory_space<vmem>>, vector<1x1x16xf32>
    %348 = vector.shape_cast %347 : vector<1x1x16xf32> to vector<1x16xf32>
    %349 = vector.shape_cast %346 : vector<1x16xf32> to vector<1x1x16xf32>
    tpu.vector_store %arg4[%c1_151, %c8_152, %c2_153], %349 {strides = array<i32>} : memref<2x20x20xf32, #tpu.memory_space<vmem>>, vector<1x1x16xf32>,
    %cst_154 = arith.constant dense<0xFF800000> : vector<8xf32>
    %350 = vector.multi_reduction <maximumf>, %335, %cst_154 [1] : vector<8x16xf32> to vector<8xf32>
    %351 = vector.shape_cast %350 : vector<8xf32> to vector<8x1xf32>
    %c0_155 = arith.constant 0 : index
    %c2_156 = arith.constant 2 : index
    %c8_157 = arith.constant 8 : index
    %352 = vector.load %arg6[%c0_155, %c2_156, %c8_157] : memref<2x12x20xf32, #tpu.memory_space<vmem>>, vector<1x8x1xf32>
    %353 = vector.shape_cast %352 : vector<1x8x1xf32> to vector<8x1xf32>
    %354 = vector.shape_cast %351 : vector<8x1xf32> to vector<1x8x1xf32>
    tpu.vector_store %arg6[%c0_155, %c2_156, %c8_157], %354 {strides = array<i32>} : memref<2x12x20xf32, #tpu.memory_space<vmem>>, vector<1x8x1xf32>,
    %cst_158 = arith.constant dense<0.000000e+00> : vector<8xf32>
    %355 = vector.multi_reduction <add>, %335, %cst_158 [1] : vector<8x16xf32> to vector<8xf32>
    %356 = vector.shape_cast %355 : vector<8xf32> to vector<8x1xf32>
    %cst_159 = arith.constant 6.250000e-02 : f32
    %357 = vector.broadcast %cst_159 : f32 to vector<8x1xf32>
    %358 = arith.mulf %356, %357 : vector<8x1xf32>
    %c1_160 = arith.constant 1 : index
    %c2_161 = arith.constant 2 : index
    %c8_162 = arith.constant 8 : index
    %359 = vector.load %arg6[%c1_160, %c2_161, %c8_162] : memref<2x12x20xf32, #tpu.memory_space<vmem>>, vector<1x8x1xf32>
    %360 = vector.shape_cast %359 : vector<1x8x1xf32> to vector<8x1xf32>
    %361 = vector.shape_cast %358 : vector<8x1xf32> to vector<1x8x1xf32>
    tpu.vector_store %arg6[%c1_160, %c2_161, %c8_162], %361 {strides = array<i32>} : memref<2x12x20xf32, #tpu.memory_space<vmem>>, vector<1x8x1xf32>,
    %c0_163 = arith.constant 0 : index
    %c0_164 = arith.constant 0 : index
    %c112_165 = arith.constant 112 : index
    %362 = vector.load %arg2[%c0_163, %c0_164, %c112_165] : memref<1x8x256xf32, #tpu.memory_space<vmem>>, vector<1x8x16xf32>
    %363 = vector.shape_cast %362 : vector<1x8x16xf32> to vector<8x16xf32>
    %364 = arith.maximumf %336, %363 : vector<8x16xf32>
    %365 = arith.addf %337, %363 : vector<8x16xf32>
    %cst_166 = arith.constant dense<0xFF800000> : vector<16xf32>
    %366 = vector.multi_reduction <maximumf>, %363, %cst_166 [0] : vector<8x16xf32> to vector<16xf32>
    %367 = vector.shape_cast %366 : vector<16xf32> to vector<1x16xf32>
    %c0_167 = arith.constant 0 : index
    %c9_168 = arith.constant 9 : index
    %c2_169 = arith.constant 2 : index
    %368 = vector.load %arg4[%c0_167, %c9_168, %c2_169] : memref<2x20x20xf32, #tpu.memory_space<vmem>>, vector<1x1x16xf32>
    %369 = vector.shape_cast %368 : vector<1x1x16xf32> to vector<1x16xf32>
    %370 = vector.shape_cast %367 : vector<1x16xf32> to vector<1x1x16xf32>
    tpu.vector_store %arg4[%c0_167, %c9_168, %c2_169], %370 {strides = array<i32>} : memref<2x20x20xf32, #tpu.memory_space<vmem>>, vector<1x1x16xf32>,
    %cst_170 = arith.constant dense<0.000000e+00> : vector<16xf32>
    %371 = vector.multi_reduction <add>, %363, %cst_170 [0] : vector<8x16xf32> to vector<16xf32>
    %372 = vector.shape_cast %371 : vector<16xf32> to vector<1x16xf32>
    %cst_171 = arith.constant 1.250000e-01 : f32
    %373 = vector.broadcast %cst_171 : f32 to vector<1x16xf32>
    %374 = arith.mulf %372, %373 : vector<1x16xf32>
    %c1_172 = arith.constant 1 : index
    %c9_173 = arith.constant 9 : index
    %c2_174 = arith.constant 2 : index
    %375 = vector.load %arg4[%c1_172, %c9_173, %c2_174] : memref<2x20x20xf32, #tpu.memory_space<vmem>>, vector<1x1x16xf32>
    %376 = vector.shape_cast %375 : vector<1x1x16xf32> to vector<1x16xf32>
    %377 = vector.shape_cast %374 : vector<1x16xf32> to vector<1x1x16xf32>
    tpu.vector_store %arg4[%c1_172, %c9_173, %c2_174], %377 {strides = array<i32>} : memref<2x20x20xf32, #tpu.memory_space<vmem>>, vector<1x1x16xf32>,
    %cst_175 = arith.constant dense<0xFF800000> : vector<8xf32>
    %378 = vector.multi_reduction <maximumf>, %363, %cst_175 [1] : vector<8x16xf32> to vector<8xf32>
    %379 = vector.shape_cast %378 : vector<8xf32> to vector<8x1xf32>
    %c0_176 = arith.constant 0 : index
    %c2_177 = arith.constant 2 : index
    %c9_178 = arith.constant 9 : index
    %380 = vector.load %arg6[%c0_176, %c2_177, %c9_178] : memref<2x12x20xf32, #tpu.memory_space<vmem>>, vector<1x8x1xf32>
    %381 = vector.shape_cast %380 : vector<1x8x1xf32> to vector<8x1xf32>
    %382 = vector.shape_cast %379 : vector<8x1xf32> to vector<1x8x1xf32>
    tpu.vector_store %arg6[%c0_176, %c2_177, %c9_178], %382 {strides = array<i32>} : memref<2x12x20xf32, #tpu.memory_space<vmem>>, vector<1x8x1xf32>,
    %cst_179 = arith.constant dense<0.000000e+00> : vector<8xf32>
    %383 = vector.multi_reduction <add>, %363, %cst_179 [1] : vector<8x16xf32> to vector<8xf32>
    %384 = vector.shape_cast %383 : vector<8xf32> to vector<8x1xf32>
    %cst_180 = arith.constant 6.250000e-02 : f32
    %385 = vector.broadcast %cst_180 : f32 to vector<8x1xf32>
    %386 = arith.mulf %384, %385 : vector<8x1xf32>
    %c1_181 = arith.constant 1 : index
    %c2_182 = arith.constant 2 : index
    %c9_183 = arith.constant 9 : index
    %387 = vector.load %arg6[%c1_181, %c2_182, %c9_183] : memref<2x12x20xf32, #tpu.memory_space<vmem>>, vector<1x8x1xf32>
    %388 = vector.shape_cast %387 : vector<1x8x1xf32> to vector<8x1xf32>
    %389 = vector.shape_cast %386 : vector<8x1xf32> to vector<1x8x1xf32>
    tpu.vector_store %arg6[%c1_181, %c2_182, %c9_183], %389 {strides = array<i32>} : memref<2x12x20xf32, #tpu.memory_space<vmem>>, vector<1x8x1xf32>,
    %c0_184 = arith.constant 0 : index
    %c0_185 = arith.constant 0 : index
    %c128_186 = arith.constant 128 : index
    %390 = vector.load %arg2[%c0_184, %c0_185, %c128_186] : memref<1x8x256xf32, #tpu.memory_space<vmem>>, vector<1x8x16xf32>
    %391 = vector.shape_cast %390 : vector<1x8x16xf32> to vector<8x16xf32>
    %392 = arith.maximumf %364, %391 : vector<8x16xf32>
    %393 = arith.addf %365, %391 : vector<8x16xf32>
    %cst_187 = arith.constant dense<0xFF800000> : vector<16xf32>
    %394 = vector.multi_reduction <maximumf>, %391, %cst_187 [0] : vector<8x16xf32> to vector<16xf32>
    %395 = vector.shape_cast %394 : vector<16xf32> to vector<1x16xf32>
    %c0_188 = arith.constant 0 : index
    %c10_189 = arith.constant 10 : index
    %c2_190 = arith.constant 2 : index
    %396 = vector.load %arg4[%c0_188, %c10_189, %c2_190] : memref<2x20x20xf32, #tpu.memory_space<vmem>>, vector<1x1x16xf32>
    %397 = vector.shape_cast %396 : vector<1x1x16xf32> to vector<1x16xf32>
    %398 = vector.shape_cast %395 : vector<1x16xf32> to vector<1x1x16xf32>
    tpu.vector_store %arg4[%c0_188, %c10_189, %c2_190], %398 {strides = array<i32>} : memref<2x20x20xf32, #tpu.memory_space<vmem>>, vector<1x1x16xf32>,
    %cst_191 = arith.constant dense<0.000000e+00> : vector<16xf32>
    %399 = vector.multi_reduction <add>, %391, %cst_191 [0] : vector<8x16xf32> to vector<16xf32>
    %400 = vector.shape_cast %399 : vector<16xf32> to vector<1x16xf32>
    %cst_192 = arith.constant 1.250000e-01 : f32
    %401 = vector.broadcast %cst_192 : f32 to vector<1x16xf32>
    %402 = arith.mulf %400, %401 : vector<1x16xf32>
    %c1_193 = arith.constant 1 : index
    %c10_194 = arith.constant 10 : index
    %c2_195 = arith.constant 2 : index
    %403 = vector.load %arg4[%c1_193, %c10_194, %c2_195] : memref<2x20x20xf32, #tpu.memory_space<vmem>>, vector<1x1x16xf32>
    %404 = vector.shape_cast %403 : vector<1x1x16xf32> to vector<1x16xf32>
    %405 = vector.shape_cast %402 : vector<1x16xf32> to vector<1x1x16xf32>
    tpu.vector_store %arg4[%c1_193, %c10_194, %c2_195], %405 {strides = array<i32>} : memref<2x20x20xf32, #tpu.memory_space<vmem>>, vector<1x1x16xf32>,
    %cst_196 = arith.constant dense<0xFF800000> : vector<8xf32>
    %406 = vector.multi_reduction <maximumf>, %391, %cst_196 [1] : vector<8x16xf32> to vector<8xf32>
    %407 = vector.shape_cast %406 : vector<8xf32> to vector<8x1xf32>
    %c0_197 = arith.constant 0 : index
    %c2_198 = arith.constant 2 : index
    %c10_199 = arith.constant 10 : index
    %408 = vector.load %arg6[%c0_197, %c2_198, %c10_199] : memref<2x12x20xf32, #tpu.memory_space<vmem>>, vector<1x8x1xf32>
    %409 = vector.shape_cast %408 : vector<1x8x1xf32> to vector<8x1xf32>
    %410 = vector.shape_cast %407 : vector<8x1xf32> to vector<1x8x1xf32>
    tpu.vector_store %arg6[%c0_197, %c2_198, %c10_199], %410 {strides = array<i32>} : memref<2x12x20xf32, #tpu.memory_space<vmem>>, vector<1x8x1xf32>,
    %cst_200 = arith.constant dense<0.000000e+00> : vector<8xf32>
    %411 = vector.multi_reduction <add>, %391, %cst_200 [1] : vector<8x16xf32> to vector<8xf32>
    %412 = vector.shape_cast %411 : vector<8xf32> to vector<8x1xf32>
    %cst_201 = arith.constant 6.250000e-02 : f32
    %413 = vector.broadcast %cst_201 : f32 to vector<8x1xf32>
    %414 = arith.mulf %412, %413 : vector<8x1xf32>
    %c1_202 = arith.constant 1 : index
    %c2_203 = arith.constant 2 : index
    %c10_204 = arith.constant 10 : index
    %415 = vector.load %arg6[%c1_202, %c2_203, %c10_204] : memref<2x12x20xf32, #tpu.memory_space<vmem>>, vector<1x8x1xf32>
    %416 = vector.shape_cast %415 : vector<1x8x1xf32> to vector<8x1xf32>
    %417 = vector.shape_cast %414 : vector<8x1xf32> to vector<1x8x1xf32>
    tpu.vector_store %arg6[%c1_202, %c2_203, %c10_204], %417 {strides = array<i32>} : memref<2x12x20xf32, #tpu.memory_space<vmem>>, vector<1x8x1xf32>,
    %c0_205 = arith.constant 0 : index
    %c0_206 = arith.constant 0 : index
    %c144_207 = arith.constant 144 : index
    %418 = vector.load %arg2[%c0_205, %c0_206, %c144_207] : memref<1x8x256xf32, #tpu.memory_space<vmem>>, vector<1x8x16xf32>
    %419 = vector.shape_cast %418 : vector<1x8x16xf32> to vector<8x16xf32>
    %420 = arith.maximumf %392, %419 : vector<8x16xf32>
    %421 = arith.addf %393, %419 : vector<8x16xf32>
    %cst_208 = arith.constant dense<0xFF800000> : vector<16xf32>
    %422 = vector.multi_reduction <maximumf>, %419, %cst_208 [0] : vector<8x16xf32> to vector<16xf32>
    %423 = vector.shape_cast %422 : vector<16xf32> to vector<1x16xf32>
    %c0_209 = arith.constant 0 : index
    %c11_210 = arith.constant 11 : index
    %c2_211 = arith.constant 2 : index
    %424 = vector.load %arg4[%c0_209, %c11_210, %c2_211] : memref<2x20x20xf32, #tpu.memory_space<vmem>>, vector<1x1x16xf32>
    %425 = vector.shape_cast %424 : vector<1x1x16xf32> to vector<1x16xf32>
    %426 = vector.shape_cast %423 : vector<1x16xf32> to vector<1x1x16xf32>
    tpu.vector_store %arg4[%c0_209, %c11_210, %c2_211], %426 {strides = array<i32>} : memref<2x20x20xf32, #tpu.memory_space<vmem>>, vector<1x1x16xf32>,
    %cst_212 = arith.constant dense<0.000000e+00> : vector<16xf32>
    %427 = vector.multi_reduction <add>, %419, %cst_212 [0] : vector<8x16xf32> to vector<16xf32>
    %428 = vector.shape_cast %427 : vector<16xf32> to vector<1x16xf32>
    %cst_213 = arith.constant 1.250000e-01 : f32
    %429 = vector.broadcast %cst_213 : f32 to vector<1x16xf32>
    %430 = arith.mulf %428, %429 : vector<1x16xf32>
    %c1_214 = arith.constant 1 : index
    %c11_215 = arith.constant 11 : index
    %c2_216 = arith.constant 2 : index
    %431 = vector.load %arg4[%c1_214, %c11_215, %c2_216] : memref<2x20x20xf32, #tpu.memory_space<vmem>>, vector<1x1x16xf32>
    %432 = vector.shape_cast %431 : vector<1x1x16xf32> to vector<1x16xf32>
    %433 = vector.shape_cast %430 : vector<1x16xf32> to vector<1x1x16xf32>
    tpu.vector_store %arg4[%c1_214, %c11_215, %c2_216], %433 {strides = array<i32>} : memref<2x20x20xf32, #tpu.memory_space<vmem>>, vector<1x1x16xf32>,
    %cst_217 = arith.constant dense<0xFF800000> : vector<8xf32>
    %434 = vector.multi_reduction <maximumf>, %419, %cst_217 [1] : vector<8x16xf32> to vector<8xf32>
    %435 = vector.shape_cast %434 : vector<8xf32> to vector<8x1xf32>
    %c0_218 = arith.constant 0 : index
    %c2_219 = arith.constant 2 : index
    %c11_220 = arith.constant 11 : index
    %436 = vector.load %arg6[%c0_218, %c2_219, %c11_220] : memref<2x12x20xf32, #tpu.memory_space<vmem>>, vector<1x8x1xf32>
    %437 = vector.shape_cast %436 : vector<1x8x1xf32> to vector<8x1xf32>
    %438 = vector.shape_cast %435 : vector<8x1xf32> to vector<1x8x1xf32>
    tpu.vector_store %arg6[%c0_218, %c2_219, %c11_220], %438 {strides = array<i32>} : memref<2x12x20xf32, #tpu.memory_space<vmem>>, vector<1x8x1xf32>,
    %cst_221 = arith.constant dense<0.000000e+00> : vector<8xf32>
    %439 = vector.multi_reduction <add>, %419, %cst_221 [1] : vector<8x16xf32> to vector<8xf32>
    %440 = vector.shape_cast %439 : vector<8xf32> to vector<8x1xf32>
    %cst_222 = arith.constant 6.250000e-02 : f32
    %441 = vector.broadcast %cst_222 : f32 to vector<8x1xf32>
    %442 = arith.mulf %440, %441 : vector<8x1xf32>
    %c1_223 = arith.constant 1 : index
    %c2_224 = arith.constant 2 : index
    %c11_225 = arith.constant 11 : index
    %443 = vector.load %arg6[%c1_223, %c2_224, %c11_225] : memref<2x12x20xf32, #tpu.memory_space<vmem>>, vector<1x8x1xf32>
    %444 = vector.shape_cast %443 : vector<1x8x1xf32> to vector<8x1xf32>
    %445 = vector.shape_cast %442 : vector<8x1xf32> to vector<1x8x1xf32>
    tpu.vector_store %arg6[%c1_223, %c2_224, %c11_225], %445 {strides = array<i32>} : memref<2x12x20xf32, #tpu.memory_space<vmem>>, vector<1x8x1xf32>,
    %c0_226 = arith.constant 0 : index
    %c0_227 = arith.constant 0 : index
    %c160 = arith.constant 160 : index
    %446 = vector.load %arg2[%c0_226, %c0_227, %c160] : memref<1x8x256xf32, #tpu.memory_space<vmem>>, vector<1x8x16xf32>
    %447 = vector.shape_cast %446 : vector<1x8x16xf32> to vector<8x16xf32>
    %448 = arith.maximumf %420, %447 : vector<8x16xf32>
    %449 = arith.addf %421, %447 : vector<8x16xf32>
    %cst_228 = arith.constant dense<0xFF800000> : vector<16xf32>
    %450 = vector.multi_reduction <maximumf>, %447, %cst_228 [0] : vector<8x16xf32> to vector<16xf32>
    %451 = vector.shape_cast %450 : vector<16xf32> to vector<1x16xf32>
    %c0_229 = arith.constant 0 : index
    %c12_230 = arith.constant 12 : index
    %c2_231 = arith.constant 2 : index
    %452 = vector.load %arg4[%c0_229, %c12_230, %c2_231] : memref<2x20x20xf32, #tpu.memory_space<vmem>>, vector<1x1x16xf32>
    %453 = vector.shape_cast %452 : vector<1x1x16xf32> to vector<1x16xf32>
    %454 = vector.shape_cast %451 : vector<1x16xf32> to vector<1x1x16xf32>
    tpu.vector_store %arg4[%c0_229, %c12_230, %c2_231], %454 {strides = array<i32>} : memref<2x20x20xf32, #tpu.memory_space<vmem>>, vector<1x1x16xf32>,
    %cst_232 = arith.constant dense<0.000000e+00> : vector<16xf32>
    %455 = vector.multi_reduction <add>, %447, %cst_232 [0] : vector<8x16xf32> to vector<16xf32>
    %456 = vector.shape_cast %455 : vector<16xf32> to vector<1x16xf32>
    %cst_233 = arith.constant 1.250000e-01 : f32
    %457 = vector.broadcast %cst_233 : f32 to vector<1x16xf32>
    %458 = arith.mulf %456, %457 : vector<1x16xf32>
    %c1_234 = arith.constant 1 : index
    %c12_235 = arith.constant 12 : index
    %c2_236 = arith.constant 2 : index
    %459 = vector.load %arg4[%c1_234, %c12_235, %c2_236] : memref<2x20x20xf32, #tpu.memory_space<vmem>>, vector<1x1x16xf32>
    %460 = vector.shape_cast %459 : vector<1x1x16xf32> to vector<1x16xf32>
    %461 = vector.shape_cast %458 : vector<1x16xf32> to vector<1x1x16xf32>
    tpu.vector_store %arg4[%c1_234, %c12_235, %c2_236], %461 {strides = array<i32>} : memref<2x20x20xf32, #tpu.memory_space<vmem>>, vector<1x1x16xf32>,
    %cst_237 = arith.constant dense<0xFF800000> : vector<8xf32>
    %462 = vector.multi_reduction <maximumf>, %447, %cst_237 [1] : vector<8x16xf32> to vector<8xf32>
    %463 = vector.shape_cast %462 : vector<8xf32> to vector<8x1xf32>
    %c0_238 = arith.constant 0 : index
    %c2_239 = arith.constant 2 : index
    %c12_240 = arith.constant 12 : index
    %464 = vector.load %arg6[%c0_238, %c2_239, %c12_240] : memref<2x12x20xf32, #tpu.memory_space<vmem>>, vector<1x8x1xf32>
    %465 = vector.shape_cast %464 : vector<1x8x1xf32> to vector<8x1xf32>
    %466 = vector.shape_cast %463 : vector<8x1xf32> to vector<1x8x1xf32>
    tpu.vector_store %arg6[%c0_238, %c2_239, %c12_240], %466 {strides = array<i32>} : memref<2x12x20xf32, #tpu.memory_space<vmem>>, vector<1x8x1xf32>,
    %cst_241 = arith.constant dense<0.000000e+00> : vector<8xf32>
    %467 = vector.multi_reduction <add>, %447, %cst_241 [1] : vector<8x16xf32> to vector<8xf32>
    %468 = vector.shape_cast %467 : vector<8xf32> to vector<8x1xf32>
    %cst_242 = arith.constant 6.250000e-02 : f32
    %469 = vector.broadcast %cst_242 : f32 to vector<8x1xf32>
    %470 = arith.mulf %468, %469 : vector<8x1xf32>
    %c1_243 = arith.constant 1 : index
    %c2_244 = arith.constant 2 : index
    %c12_245 = arith.constant 12 : index
    %471 = vector.load %arg6[%c1_243, %c2_244, %c12_245] : memref<2x12x20xf32, #tpu.memory_space<vmem>>, vector<1x8x1xf32>
    %472 = vector.shape_cast %471 : vector<1x8x1xf32> to vector<8x1xf32>
    %473 = vector.shape_cast %470 : vector<8x1xf32> to vector<1x8x1xf32>
    tpu.vector_store %arg6[%c1_243, %c2_244, %c12_245], %473 {strides = array<i32>} : memref<2x12x20xf32, #tpu.memory_space<vmem>>, vector<1x8x1xf32>,
    %c0_246 = arith.constant 0 : index
    %c0_247 = arith.constant 0 : index
    %c176 = arith.constant 176 : index
    %474 = vector.load %arg2[%c0_246, %c0_247, %c176] : memref<1x8x256xf32, #tpu.memory_space<vmem>>, vector<1x8x16xf32>
    %475 = vector.shape_cast %474 : vector<1x8x16xf32> to vector<8x16xf32>
    %476 = arith.maximumf %448, %475 : vector<8x16xf32>
    %477 = arith.addf %449, %475 : vector<8x16xf32>
    %cst_248 = arith.constant dense<0xFF800000> : vector<16xf32>
    %478 = vector.multi_reduction <maximumf>, %475, %cst_248 [0] : vector<8x16xf32> to vector<16xf32>
    %479 = vector.shape_cast %478 : vector<16xf32> to vector<1x16xf32>
    %c0_249 = arith.constant 0 : index
    %c13_250 = arith.constant 13 : index
    %c2_251 = arith.constant 2 : index
    %480 = vector.load %arg4[%c0_249, %c13_250, %c2_251] : memref<2x20x20xf32, #tpu.memory_space<vmem>>, vector<1x1x16xf32>
    %481 = vector.shape_cast %480 : vector<1x1x16xf32> to vector<1x16xf32>
    %482 = vector.shape_cast %479 : vector<1x16xf32> to vector<1x1x16xf32>
    tpu.vector_store %arg4[%c0_249, %c13_250, %c2_251], %482 {strides = array<i32>} : memref<2x20x20xf32, #tpu.memory_space<vmem>>, vector<1x1x16xf32>,
    %cst_252 = arith.constant dense<0.000000e+00> : vector<16xf32>
    %483 = vector.multi_reduction <add>, %475, %cst_252 [0] : vector<8x16xf32> to vector<16xf32>
    %484 = vector.shape_cast %483 : vector<16xf32> to vector<1x16xf32>
    %cst_253 = arith.constant 1.250000e-01 : f32
    %485 = vector.broadcast %cst_253 : f32 to vector<1x16xf32>
    %486 = arith.mulf %484, %485 : vector<1x16xf32>
    %c1_254 = arith.constant 1 : index
    %c13_255 = arith.constant 13 : index
    %c2_256 = arith.constant 2 : index
    %487 = vector.load %arg4[%c1_254, %c13_255, %c2_256] : memref<2x20x20xf32, #tpu.memory_space<vmem>>, vector<1x1x16xf32>
    %488 = vector.shape_cast %487 : vector<1x1x16xf32> to vector<1x16xf32>
    %489 = vector.shape_cast %486 : vector<1x16xf32> to vector<1x1x16xf32>
    tpu.vector_store %arg4[%c1_254, %c13_255, %c2_256], %489 {strides = array<i32>} : memref<2x20x20xf32, #tpu.memory_space<vmem>>, vector<1x1x16xf32>,
    %cst_257 = arith.constant dense<0xFF800000> : vector<8xf32>
    %490 = vector.multi_reduction <maximumf>, %475, %cst_257 [1] : vector<8x16xf32> to vector<8xf32>
    %491 = vector.shape_cast %490 : vector<8xf32> to vector<8x1xf32>
    %c0_258 = arith.constant 0 : index
    %c2_259 = arith.constant 2 : index
    %c13_260 = arith.constant 13 : index
    %492 = vector.load %arg6[%c0_258, %c2_259, %c13_260] : memref<2x12x20xf32, #tpu.memory_space<vmem>>, vector<1x8x1xf32>
    %493 = vector.shape_cast %492 : vector<1x8x1xf32> to vector<8x1xf32>
    %494 = vector.shape_cast %491 : vector<8x1xf32> to vector<1x8x1xf32>
    tpu.vector_store %arg6[%c0_258, %c2_259, %c13_260], %494 {strides = array<i32>} : memref<2x12x20xf32, #tpu.memory_space<vmem>>, vector<1x8x1xf32>,
    %cst_261 = arith.constant dense<0.000000e+00> : vector<8xf32>
    %495 = vector.multi_reduction <add>, %475, %cst_261 [1] : vector<8x16xf32> to vector<8xf32>
    %496 = vector.shape_cast %495 : vector<8xf32> to vector<8x1xf32>
    %cst_262 = arith.constant 6.250000e-02 : f32
    %497 = vector.broadcast %cst_262 : f32 to vector<8x1xf32>
    %498 = arith.mulf %496, %497 : vector<8x1xf32>
    %c1_263 = arith.constant 1 : index
    %c2_264 = arith.constant 2 : index
    %c13_265 = arith.constant 13 : index
    %499 = vector.load %arg6[%c1_263, %c2_264, %c13_265] : memref<2x12x20xf32, #tpu.memory_space<vmem>>, vector<1x8x1xf32>
    %500 = vector.shape_cast %499 : vector<1x8x1xf32> to vector<8x1xf32>
    %501 = vector.shape_cast %498 : vector<8x1xf32> to vector<1x8x1xf32>
    tpu.vector_store %arg6[%c1_263, %c2_264, %c13_265], %501 {strides = array<i32>} : memref<2x12x20xf32, #tpu.memory_space<vmem>>, vector<1x8x1xf32>,
    %c0_266 = arith.constant 0 : index
    %c0_267 = arith.constant 0 : index
    %c192 = arith.constant 192 : index
    %502 = vector.load %arg2[%c0_266, %c0_267, %c192] : memref<1x8x256xf32, #tpu.memory_space<vmem>>, vector<1x8x16xf32>
    %503 = vector.shape_cast %502 : vector<1x8x16xf32> to vector<8x16xf32>
    %504 = arith.maximumf %476, %503 : vector<8x16xf32>
    %505 = arith.addf %477, %503 : vector<8x16xf32>
    %cst_268 = arith.constant dense<0xFF800000> : vector<16xf32>
    %506 = vector.multi_reduction <maximumf>, %503, %cst_268 [0] : vector<8x16xf32> to vector<16xf32>
    %507 = vector.shape_cast %506 : vector<16xf32> to vector<1x16xf32>
    %c0_269 = arith.constant 0 : index
    %c14_270 = arith.constant 14 : index
    %c2_271 = arith.constant 2 : index
    %508 = vector.load %arg4[%c0_269, %c14_270, %c2_271] : memref<2x20x20xf32, #tpu.memory_space<vmem>>, vector<1x1x16xf32>
    %509 = vector.shape_cast %508 : vector<1x1x16xf32> to vector<1x16xf32>
    %510 = vector.shape_cast %507 : vector<1x16xf32> to vector<1x1x16xf32>
    tpu.vector_store %arg4[%c0_269, %c14_270, %c2_271], %510 {strides = array<i32>} : memref<2x20x20xf32, #tpu.memory_space<vmem>>, vector<1x1x16xf32>,
    %cst_272 = arith.constant dense<0.000000e+00> : vector<16xf32>
    %511 = vector.multi_reduction <add>, %503, %cst_272 [0] : vector<8x16xf32> to vector<16xf32>
    %512 = vector.shape_cast %511 : vector<16xf32> to vector<1x16xf32>
    %cst_273 = arith.constant 1.250000e-01 : f32
    %513 = vector.broadcast %cst_273 : f32 to vector<1x16xf32>
    %514 = arith.mulf %512, %513 : vector<1x16xf32>
    %c1_274 = arith.constant 1 : index
    %c14_275 = arith.constant 14 : index
    %c2_276 = arith.constant 2 : index
    %515 = vector.load %arg4[%c1_274, %c14_275, %c2_276] : memref<2x20x20xf32, #tpu.memory_space<vmem>>, vector<1x1x16xf32>
    %516 = vector.shape_cast %515 : vector<1x1x16xf32> to vector<1x16xf32>
    %517 = vector.shape_cast %514 : vector<1x16xf32> to vector<1x1x16xf32>
    tpu.vector_store %arg4[%c1_274, %c14_275, %c2_276], %517 {strides = array<i32>} : memref<2x20x20xf32, #tpu.memory_space<vmem>>, vector<1x1x16xf32>,
    %cst_277 = arith.constant dense<0xFF800000> : vector<8xf32>
    %518 = vector.multi_reduction <maximumf>, %503, %cst_277 [1] : vector<8x16xf32> to vector<8xf32>
    %519 = vector.shape_cast %518 : vector<8xf32> to vector<8x1xf32>
    %c0_278 = arith.constant 0 : index
    %c2_279 = arith.constant 2 : index
    %c14_280 = arith.constant 14 : index
    %520 = vector.load %arg6[%c0_278, %c2_279, %c14_280] : memref<2x12x20xf32, #tpu.memory_space<vmem>>, vector<1x8x1xf32>
    %521 = vector.shape_cast %520 : vector<1x8x1xf32> to vector<8x1xf32>
    %522 = vector.shape_cast %519 : vector<8x1xf32> to vector<1x8x1xf32>
    tpu.vector_store %arg6[%c0_278, %c2_279, %c14_280], %522 {strides = array<i32>} : memref<2x12x20xf32, #tpu.memory_space<vmem>>, vector<1x8x1xf32>,
    %cst_281 = arith.constant dense<0.000000e+00> : vector<8xf32>
    %523 = vector.multi_reduction <add>, %503, %cst_281 [1] : vector<8x16xf32> to vector<8xf32>
    %524 = vector.shape_cast %523 : vector<8xf32> to vector<8x1xf32>
    %cst_282 = arith.constant 6.250000e-02 : f32
    %525 = vector.broadcast %cst_282 : f32 to vector<8x1xf32>
    %526 = arith.mulf %524, %525 : vector<8x1xf32>
    %c1_283 = arith.constant 1 : index
    %c2_284 = arith.constant 2 : index
    %c14_285 = arith.constant 14 : index
    %527 = vector.load %arg6[%c1_283, %c2_284, %c14_285] : memref<2x12x20xf32, #tpu.memory_space<vmem>>, vector<1x8x1xf32>
    %528 = vector.shape_cast %527 : vector<1x8x1xf32> to vector<8x1xf32>
    %529 = vector.shape_cast %526 : vector<8x1xf32> to vector<1x8x1xf32>
    tpu.vector_store %arg6[%c1_283, %c2_284, %c14_285], %529 {strides = array<i32>} : memref<2x12x20xf32, #tpu.memory_space<vmem>>, vector<1x8x1xf32>,
    %c0_286 = arith.constant 0 : index
    %c0_287 = arith.constant 0 : index
    %c208 = arith.constant 208 : index
    %530 = vector.load %arg2[%c0_286, %c0_287, %c208] : memref<1x8x256xf32, #tpu.memory_space<vmem>>, vector<1x8x16xf32>
    %531 = vector.shape_cast %530 : vector<1x8x16xf32> to vector<8x16xf32>
    %532 = arith.maximumf %504, %531 : vector<8x16xf32>
    %533 = arith.addf %505, %531 : vector<8x16xf32>
    %cst_288 = arith.constant dense<0xFF800000> : vector<16xf32>
    %534 = vector.multi_reduction <maximumf>, %531, %cst_288 [0] : vector<8x16xf32> to vector<16xf32>
    %535 = vector.shape_cast %534 : vector<16xf32> to vector<1x16xf32>
    %c0_289 = arith.constant 0 : index
    %c15_290 = arith.constant 15 : index
    %c2_291 = arith.constant 2 : index
    %536 = vector.load %arg4[%c0_289, %c15_290, %c2_291] : memref<2x20x20xf32, #tpu.memory_space<vmem>>, vector<1x1x16xf32>
    %537 = vector.shape_cast %536 : vector<1x1x16xf32> to vector<1x16xf32>
    %538 = vector.shape_cast %535 : vector<1x16xf32> to vector<1x1x16xf32>
    tpu.vector_store %arg4[%c0_289, %c15_290, %c2_291], %538 {strides = array<i32>} : memref<2x20x20xf32, #tpu.memory_space<vmem>>, vector<1x1x16xf32>,
    %cst_292 = arith.constant dense<0.000000e+00> : vector<16xf32>
    %539 = vector.multi_reduction <add>, %531, %cst_292 [0] : vector<8x16xf32> to vector<16xf32>
    %540 = vector.shape_cast %539 : vector<16xf32> to vector<1x16xf32>
    %cst_293 = arith.constant 1.250000e-01 : f32
    %541 = vector.broadcast %cst_293 : f32 to vector<1x16xf32>
    %542 = arith.mulf %540, %541 : vector<1x16xf32>
    %c1_294 = arith.constant 1 : index
    %c15_295 = arith.constant 15 : index
    %c2_296 = arith.constant 2 : index
    %543 = vector.load %arg4[%c1_294, %c15_295, %c2_296] : memref<2x20x20xf32, #tpu.memory_space<vmem>>, vector<1x1x16xf32>
    %544 = vector.shape_cast %543 : vector<1x1x16xf32> to vector<1x16xf32>
    %545 = vector.shape_cast %542 : vector<1x16xf32> to vector<1x1x16xf32>
    tpu.vector_store %arg4[%c1_294, %c15_295, %c2_296], %545 {strides = array<i32>} : memref<2x20x20xf32, #tpu.memory_space<vmem>>, vector<1x1x16xf32>,
    %cst_297 = arith.constant dense<0xFF800000> : vector<8xf32>
    %546 = vector.multi_reduction <maximumf>, %531, %cst_297 [1] : vector<8x16xf32> to vector<8xf32>
    %547 = vector.shape_cast %546 : vector<8xf32> to vector<8x1xf32>
    %c0_298 = arith.constant 0 : index
    %c2_299 = arith.constant 2 : index
    %c15_300 = arith.constant 15 : index
    %548 = vector.load %arg6[%c0_298, %c2_299, %c15_300] : memref<2x12x20xf32, #tpu.memory_space<vmem>>, vector<1x8x1xf32>
    %549 = vector.shape_cast %548 : vector<1x8x1xf32> to vector<8x1xf32>
    %550 = vector.shape_cast %547 : vector<8x1xf32> to vector<1x8x1xf32>
    tpu.vector_store %arg6[%c0_298, %c2_299, %c15_300], %550 {strides = array<i32>} : memref<2x12x20xf32, #tpu.memory_space<vmem>>, vector<1x8x1xf32>,
    %cst_301 = arith.constant dense<0.000000e+00> : vector<8xf32>
    %551 = vector.multi_reduction <add>, %531, %cst_301 [1] : vector<8x16xf32> to vector<8xf32>
    %552 = vector.shape_cast %551 : vector<8xf32> to vector<8x1xf32>
    %cst_302 = arith.constant 6.250000e-02 : f32
    %553 = vector.broadcast %cst_302 : f32 to vector<8x1xf32>
    %554 = arith.mulf %552, %553 : vector<8x1xf32>
    %c1_303 = arith.constant 1 : index
    %c2_304 = arith.constant 2 : index
    %c15_305 = arith.constant 15 : index
    %555 = vector.load %arg6[%c1_303, %c2_304, %c15_305] : memref<2x12x20xf32, #tpu.memory_space<vmem>>, vector<1x8x1xf32>
    %556 = vector.shape_cast %555 : vector<1x8x1xf32> to vector<8x1xf32>
    %557 = vector.shape_cast %554 : vector<8x1xf32> to vector<1x8x1xf32>
    tpu.vector_store %arg6[%c1_303, %c2_304, %c15_305], %557 {strides = array<i32>} : memref<2x12x20xf32, #tpu.memory_space<vmem>>, vector<1x8x1xf32>,
    %c0_306 = arith.constant 0 : index
    %c0_307 = arith.constant 0 : index
    %c224 = arith.constant 224 : index
    %558 = vector.load %arg2[%c0_306, %c0_307, %c224] : memref<1x8x256xf32, #tpu.memory_space<vmem>>, vector<1x8x16xf32>
    %559 = vector.shape_cast %558 : vector<1x8x16xf32> to vector<8x16xf32>
    %560 = arith.maximumf %532, %559 : vector<8x16xf32>
    %561 = arith.addf %533, %559 : vector<8x16xf32>
    %cst_308 = arith.constant dense<0xFF800000> : vector<16xf32>
    %562 = vector.multi_reduction <maximumf>, %559, %cst_308 [0] : vector<8x16xf32> to vector<16xf32>
    %563 = vector.shape_cast %562 : vector<16xf32> to vector<1x16xf32>
    %c0_309 = arith.constant 0 : index
    %c16_310 = arith.constant 16 : index
    %c2_311 = arith.constant 2 : index
    %564 = vector.load %arg4[%c0_309, %c16_310, %c2_311] : memref<2x20x20xf32, #tpu.memory_space<vmem>>, vector<1x1x16xf32>
    %565 = vector.shape_cast %564 : vector<1x1x16xf32> to vector<1x16xf32>
    %566 = vector.shape_cast %563 : vector<1x16xf32> to vector<1x1x16xf32>
    tpu.vector_store %arg4[%c0_309, %c16_310, %c2_311], %566 {strides = array<i32>} : memref<2x20x20xf32, #tpu.memory_space<vmem>>, vector<1x1x16xf32>,
    %cst_312 = arith.constant dense<0.000000e+00> : vector<16xf32>
    %567 = vector.multi_reduction <add>, %559, %cst_312 [0] : vector<8x16xf32> to vector<16xf32>
    %568 = vector.shape_cast %567 : vector<16xf32> to vector<1x16xf32>
    %cst_313 = arith.constant 1.250000e-01 : f32
    %569 = vector.broadcast %cst_313 : f32 to vector<1x16xf32>
    %570 = arith.mulf %568, %569 : vector<1x16xf32>
    %c1_314 = arith.constant 1 : index
    %c16_315 = arith.constant 16 : index
    %c2_316 = arith.constant 2 : index
    %571 = vector.load %arg4[%c1_314, %c16_315, %c2_316] : memref<2x20x20xf32, #tpu.memory_space<vmem>>, vector<1x1x16xf32>
    %572 = vector.shape_cast %571 : vector<1x1x16xf32> to vector<1x16xf32>
    %573 = vector.shape_cast %570 : vector<1x16xf32> to vector<1x1x16xf32>
    tpu.vector_store %arg4[%c1_314, %c16_315, %c2_316], %573 {strides = array<i32>} : memref<2x20x20xf32, #tpu.memory_space<vmem>>, vector<1x1x16xf32>,
    %cst_317 = arith.constant dense<0xFF800000> : vector<8xf32>
    %574 = vector.multi_reduction <maximumf>, %559, %cst_317 [1] : vector<8x16xf32> to vector<8xf32>
    %575 = vector.shape_cast %574 : vector<8xf32> to vector<8x1xf32>
    %c0_318 = arith.constant 0 : index
    %c2_319 = arith.constant 2 : index
    %c16_320 = arith.constant 16 : index
    %576 = vector.load %arg6[%c0_318, %c2_319, %c16_320] : memref<2x12x20xf32, #tpu.memory_space<vmem>>, vector<1x8x1xf32>
    %577 = vector.shape_cast %576 : vector<1x8x1xf32> to vector<8x1xf32>
    %578 = vector.shape_cast %575 : vector<8x1xf32> to vector<1x8x1xf32>
    tpu.vector_store %arg6[%c0_318, %c2_319, %c16_320], %578 {strides = array<i32>} : memref<2x12x20xf32, #tpu.memory_space<vmem>>, vector<1x8x1xf32>,
    %cst_321 = arith.constant dense<0.000000e+00> : vector<8xf32>
    %579 = vector.multi_reduction <add>, %559, %cst_321 [1] : vector<8x16xf32> to vector<8xf32>
    %580 = vector.shape_cast %579 : vector<8xf32> to vector<8x1xf32>
    %cst_322 = arith.constant 6.250000e-02 : f32
    %581 = vector.broadcast %cst_322 : f32 to vector<8x1xf32>
    %582 = arith.mulf %580, %581 : vector<8x1xf32>
    %c1_323 = arith.constant 1 : index
    %c2_324 = arith.constant 2 : index
    %c16_325 = arith.constant 16 : index
    %583 = vector.load %arg6[%c1_323, %c2_324, %c16_325] : memref<2x12x20xf32, #tpu.memory_space<vmem>>, vector<1x8x1xf32>
    %584 = vector.shape_cast %583 : vector<1x8x1xf32> to vector<8x1xf32>
    %585 = vector.shape_cast %582 : vector<8x1xf32> to vector<1x8x1xf32>
    tpu.vector_store %arg6[%c1_323, %c2_324, %c16_325], %585 {strides = array<i32>} : memref<2x12x20xf32, #tpu.memory_space<vmem>>, vector<1x8x1xf32>,
    %c0_326 = arith.constant 0 : index
    %c0_327 = arith.constant 0 : index
    %c240 = arith.constant 240 : index
    %586 = vector.load %arg2[%c0_326, %c0_327, %c240] : memref<1x8x256xf32, #tpu.memory_space<vmem>>, vector<1x8x16xf32>
    %587 = vector.shape_cast %586 : vector<1x8x16xf32> to vector<8x16xf32>
    %588 = arith.maximumf %560, %587 : vector<8x16xf32>
    %589 = arith.addf %561, %587 : vector<8x16xf32>
    %cst_328 = arith.constant dense<0xFF800000> : vector<16xf32>
    %590 = vector.multi_reduction <maximumf>, %587, %cst_328 [0] : vector<8x16xf32> to vector<16xf32>
    %591 = vector.shape_cast %590 : vector<16xf32> to vector<1x16xf32>
    %c0_329 = arith.constant 0 : index
    %c17_330 = arith.constant 17 : index
    %c2_331 = arith.constant 2 : index
    %592 = vector.load %arg4[%c0_329, %c17_330, %c2_331] : memref<2x20x20xf32, #tpu.memory_space<vmem>>, vector<1x1x16xf32>
    %593 = vector.shape_cast %592 : vector<1x1x16xf32> to vector<1x16xf32>
    %594 = vector.shape_cast %591 : vector<1x16xf32> to vector<1x1x16xf32>
    tpu.vector_store %arg4[%c0_329, %c17_330, %c2_331], %594 {strides = array<i32>} : memref<2x20x20xf32, #tpu.memory_space<vmem>>, vector<1x1x16xf32>,
    %cst_332 = arith.constant dense<0.000000e+00> : vector<16xf32>
    %595 = vector.multi_reduction <add>, %587, %cst_332 [0] : vector<8x16xf32> to vector<16xf32>
    %596 = vector.shape_cast %595 : vector<16xf32> to vector<1x16xf32>
    %cst_333 = arith.constant 1.250000e-01 : f32
    %597 = vector.broadcast %cst_333 : f32 to vector<1x16xf32>
    %598 = arith.mulf %596, %597 : vector<1x16xf32>
    %c1_334 = arith.constant 1 : index
    %c17_335 = arith.constant 17 : index
    %c2_336 = arith.constant 2 : index
    %599 = vector.load %arg4[%c1_334, %c17_335, %c2_336] : memref<2x20x20xf32, #tpu.memory_space<vmem>>, vector<1x1x16xf32>
    %600 = vector.shape_cast %599 : vector<1x1x16xf32> to vector<1x16xf32>
    %601 = vector.shape_cast %598 : vector<1x16xf32> to vector<1x1x16xf32>
    tpu.vector_store %arg4[%c1_334, %c17_335, %c2_336], %601 {strides = array<i32>} : memref<2x20x20xf32, #tpu.memory_space<vmem>>, vector<1x1x16xf32>,
    %cst_337 = arith.constant dense<0xFF800000> : vector<8xf32>
    %602 = vector.multi_reduction <maximumf>, %587, %cst_337 [1] : vector<8x16xf32> to vector<8xf32>
    %603 = vector.shape_cast %602 : vector<8xf32> to vector<8x1xf32>
    %c0_338 = arith.constant 0 : index
    %c2_339 = arith.constant 2 : index
    %c17_340 = arith.constant 17 : index
    %604 = vector.load %arg6[%c0_338, %c2_339, %c17_340] : memref<2x12x20xf32, #tpu.memory_space<vmem>>, vector<1x8x1xf32>
    %605 = vector.shape_cast %604 : vector<1x8x1xf32> to vector<8x1xf32>
    %606 = vector.shape_cast %603 : vector<8x1xf32> to vector<1x8x1xf32>
    tpu.vector_store %arg6[%c0_338, %c2_339, %c17_340], %606 {strides = array<i32>} : memref<2x12x20xf32, #tpu.memory_space<vmem>>, vector<1x8x1xf32>,
    %cst_341 = arith.constant dense<0.000000e+00> : vector<8xf32>
    %607 = vector.multi_reduction <add>, %587, %cst_341 [1] : vector<8x16xf32> to vector<8xf32>
    %608 = vector.shape_cast %607 : vector<8xf32> to vector<8x1xf32>
    %cst_342 = arith.constant 6.250000e-02 : f32
    %609 = vector.broadcast %cst_342 : f32 to vector<8x1xf32>
    %610 = arith.mulf %608, %609 : vector<8x1xf32>
    %c1_343 = arith.constant 1 : index
    %c2_344 = arith.constant 2 : index
    %c17_345 = arith.constant 17 : index
    %611 = vector.load %arg6[%c1_343, %c2_344, %c17_345] : memref<2x12x20xf32, #tpu.memory_space<vmem>>, vector<1x8x1xf32>
    %612 = vector.shape_cast %611 : vector<1x8x1xf32> to vector<8x1xf32>
    %613 = vector.shape_cast %610 : vector<8x1xf32> to vector<1x8x1xf32>
    tpu.vector_store %arg6[%c1_343, %c2_344, %c17_345], %613 {strides = array<i32>} : memref<2x12x20xf32, #tpu.memory_space<vmem>>, vector<1x8x1xf32>,
    %c0_346 = arith.constant 0 : index
    %c2_347 = arith.constant 2 : index
    %c2_348 = arith.constant 2 : index
    %614 = vector.load %arg5[%c0_346, %c2_347, %c2_348] : memref<2x12x20xf32, #tpu.memory_space<vmem>>, vector<1x8x16xf32>
    %615 = vector.shape_cast %614 : vector<1x8x16xf32> to vector<8x16xf32>
    %616 = vector.shape_cast %588 : vector<8x16xf32> to vector<1x8x16xf32>
    tpu.vector_store %arg5[%c0_346, %c2_347, %c2_348], %616 {strides = array<i32>} : memref<2x12x20xf32, #tpu.memory_space<vmem>>, vector<1x8x16xf32>,
    %cst_349 = arith.constant 6.250000e-02 : f32
    %617 = vector.broadcast %cst_349 : f32 to vector<8x16xf32>
    %618 = arith.mulf %589, %617 : vector<8x16xf32>
    %c1_350 = arith.constant 1 : index
    %c2_351 = arith.constant 2 : index
    %c2_352 = arith.constant 2 : index
    %619 = vector.load %arg5[%c1_350, %c2_351, %c2_352] : memref<2x12x20xf32, #tpu.memory_space<vmem>>, vector<1x8x16xf32>
    %620 = vector.shape_cast %619 : vector<1x8x16xf32> to vector<8x16xf32>
    %621 = vector.shape_cast %618 : vector<8x16xf32> to vector<1x8x16xf32>
    tpu.vector_store %arg5[%c1_350, %c2_351, %c2_352], %621 {strides = array<i32>} : memref<2x12x20xf32, #tpu.memory_space<vmem>>, vector<1x8x16xf32>,
    %cst_353 = arith.constant dense<0xFF800000> : vector<8xf32>
    %622 = vector.multi_reduction <maximumf>, %588, %cst_353 [1] : vector<8x16xf32> to vector<8xf32>
    %623 = vector.shape_cast %622 : vector<8xf32> to vector<8x1xf32>
    %cst_354 = arith.constant dense<0.000000e+00> : vector<8xf32>
    %624 = vector.multi_reduction <add>, %589, %cst_354 [1] : vector<8x16xf32> to vector<8xf32>
    %625 = vector.shape_cast %624 : vector<8xf32> to vector<8x1xf32>
    %cst_355 = arith.constant 3.906250e-03 : f32
    %626 = vector.broadcast %cst_355 : f32 to vector<8x1xf32>
    %627 = arith.mulf %625, %626 : vector<8x1xf32>
    %cst_356 = arith.constant 0.000000e+00 : f32
    %628 = vector.broadcast %cst_356 : f32 to vector<16x16xf32>
    %c0_357 = arith.constant 0 : index
    %c0_358 = arith.constant 0 : index
    %c0_359 = arith.constant 0 : index
    %629 = vector.load %arg4[%c0_357, %c0_358, %c0_359] : memref<2x20x20xf32, #tpu.memory_space<vmem>>, vector<1x16x20xf32>
    %630 = vector.shape_cast %629 : vector<1x16x20xf32> to vector<16x20xf32>
    %631 = vector.extract_strided_slice %630 {offsets = [0, 0], sizes = [16, 16], strides = [1, 1]} : vector<16x20xf32> to vector<16x16xf32>
    %632 = vector.broadcast %8 : f32 to vector<16x16xf32>
    %633 = arith.mulf %632, %631 : vector<16x16xf32>
    %634 = arith.addf %628, %633 : vector<16x16xf32>
    %635 = vector.extract_strided_slice %630 {offsets = [0, 1], sizes = [16, 16], strides = [1, 1]} : vector<16x20xf32> to vector<16x16xf32>
    %636 = vector.broadcast %9 : f32 to vector<16x16xf32>
    %637 = arith.mulf %636, %635 : vector<16x16xf32>
    %638 = arith.addf %634, %637 : vector<16x16xf32>
    %639 = vector.extract_strided_slice %630 {offsets = [0, 2], sizes = [16, 16], strides = [1, 1]} : vector<16x20xf32> to vector<16x16xf32>
    %640 = vector.broadcast %10 : f32 to vector<16x16xf32>
    %641 = arith.mulf %640, %639 : vector<16x16xf32>
    %642 = arith.addf %638, %641 : vector<16x16xf32>
    %643 = vector.extract_strided_slice %630 {offsets = [0, 3], sizes = [16, 16], strides = [1, 1]} : vector<16x20xf32> to vector<16x16xf32>
    %644 = vector.broadcast %11 : f32 to vector<16x16xf32>
    %645 = arith.mulf %644, %643 : vector<16x16xf32>
    %646 = arith.addf %642, %645 : vector<16x16xf32>
    %647 = vector.extract_strided_slice %630 {offsets = [0, 4], sizes = [16, 16], strides = [1, 1]} : vector<16x20xf32> to vector<16x16xf32>
    %648 = vector.broadcast %12 : f32 to vector<16x16xf32>
    %649 = arith.mulf %648, %647 : vector<16x16xf32>
    %650 = arith.addf %646, %649 : vector<16x16xf32>
    %c0_360 = arith.constant 0 : index
    %c1_361 = arith.constant 1 : index
    %c0_362 = arith.constant 0 : index
    %651 = vector.load %arg4[%c0_360, %c1_361, %c0_362] : memref<2x20x20xf32, #tpu.memory_space<vmem>>, vector<1x16x20xf32>
    %652 = vector.shape_cast %651 : vector<1x16x20xf32> to vector<16x20xf32>
    %653 = vector.extract_strided_slice %652 {offsets = [0, 0], sizes = [16, 16], strides = [1, 1]} : vector<16x20xf32> to vector<16x16xf32>
    %654 = vector.broadcast %13 : f32 to vector<16x16xf32>
    %655 = arith.mulf %654, %653 : vector<16x16xf32>
    %656 = arith.addf %650, %655 : vector<16x16xf32>
    %657 = vector.extract_strided_slice %652 {offsets = [0, 1], sizes = [16, 16], strides = [1, 1]} : vector<16x20xf32> to vector<16x16xf32>
    %658 = vector.broadcast %14 : f32 to vector<16x16xf32>
    %659 = arith.mulf %658, %657 : vector<16x16xf32>
    %660 = arith.addf %656, %659 : vector<16x16xf32>
    %661 = vector.extract_strided_slice %652 {offsets = [0, 2], sizes = [16, 16], strides = [1, 1]} : vector<16x20xf32> to vector<16x16xf32>
    %662 = vector.broadcast %15 : f32 to vector<16x16xf32>
    %663 = arith.mulf %662, %661 : vector<16x16xf32>
    %664 = arith.addf %660, %663 : vector<16x16xf32>
    %665 = vector.extract_strided_slice %652 {offsets = [0, 3], sizes = [16, 16], strides = [1, 1]} : vector<16x20xf32> to vector<16x16xf32>
    %666 = vector.broadcast %16 : f32 to vector<16x16xf32>
    %667 = arith.mulf %666, %665 : vector<16x16xf32>
    %668 = arith.addf %664, %667 : vector<16x16xf32>
    %669 = vector.extract_strided_slice %652 {offsets = [0, 4], sizes = [16, 16], strides = [1, 1]} : vector<16x20xf32> to vector<16x16xf32>
    %670 = vector.broadcast %17 : f32 to vector<16x16xf32>
    %671 = arith.mulf %670, %669 : vector<16x16xf32>
    %672 = arith.addf %668, %671 : vector<16x16xf32>
    %c0_363 = arith.constant 0 : index
    %c2_364 = arith.constant 2 : index
    %c0_365 = arith.constant 0 : index
    %673 = vector.load %arg4[%c0_363, %c2_364, %c0_365] : memref<2x20x20xf32, #tpu.memory_space<vmem>>, vector<1x16x20xf32>
    %674 = vector.shape_cast %673 : vector<1x16x20xf32> to vector<16x20xf32>
    %675 = vector.extract_strided_slice %674 {offsets = [0, 0], sizes = [16, 16], strides = [1, 1]} : vector<16x20xf32> to vector<16x16xf32>
    %676 = vector.broadcast %18 : f32 to vector<16x16xf32>
    %677 = arith.mulf %676, %675 : vector<16x16xf32>
    %678 = arith.addf %672, %677 : vector<16x16xf32>
    %679 = vector.extract_strided_slice %674 {offsets = [0, 1], sizes = [16, 16], strides = [1, 1]} : vector<16x20xf32> to vector<16x16xf32>
    %680 = vector.broadcast %19 : f32 to vector<16x16xf32>
    %681 = arith.mulf %680, %679 : vector<16x16xf32>
    %682 = arith.addf %678, %681 : vector<16x16xf32>
    %683 = vector.extract_strided_slice %674 {offsets = [0, 2], sizes = [16, 16], strides = [1, 1]} : vector<16x20xf32> to vector<16x16xf32>
    %684 = vector.broadcast %20 : f32 to vector<16x16xf32>
    %685 = arith.mulf %684, %683 : vector<16x16xf32>
    %686 = arith.addf %682, %685 : vector<16x16xf32>
    %687 = vector.extract_strided_slice %674 {offsets = [0, 3], sizes = [16, 16], strides = [1, 1]} : vector<16x20xf32> to vector<16x16xf32>
    %688 = vector.broadcast %21 : f32 to vector<16x16xf32>
    %689 = arith.mulf %688, %687 : vector<16x16xf32>
    %690 = arith.addf %686, %689 : vector<16x16xf32>
    %691 = vector.extract_strided_slice %674 {offsets = [0, 4], sizes = [16, 16], strides = [1, 1]} : vector<16x20xf32> to vector<16x16xf32>
    %692 = vector.broadcast %22 : f32 to vector<16x16xf32>
    %693 = arith.mulf %692, %691 : vector<16x16xf32>
    %694 = arith.addf %690, %693 : vector<16x16xf32>
    %c0_366 = arith.constant 0 : index
    %c3_367 = arith.constant 3 : index
    %c0_368 = arith.constant 0 : index
    %695 = vector.load %arg4[%c0_366, %c3_367, %c0_368] : memref<2x20x20xf32, #tpu.memory_space<vmem>>, vector<1x16x20xf32>
    %696 = vector.shape_cast %695 : vector<1x16x20xf32> to vector<16x20xf32>
    %697 = vector.extract_strided_slice %696 {offsets = [0, 0], sizes = [16, 16], strides = [1, 1]} : vector<16x20xf32> to vector<16x16xf32>
    %698 = vector.broadcast %23 : f32 to vector<16x16xf32>
    %699 = arith.mulf %698, %697 : vector<16x16xf32>
    %700 = arith.addf %694, %699 : vector<16x16xf32>
    %701 = vector.extract_strided_slice %696 {offsets = [0, 1], sizes = [16, 16], strides = [1, 1]} : vector<16x20xf32> to vector<16x16xf32>
    %702 = vector.broadcast %24 : f32 to vector<16x16xf32>
    %703 = arith.mulf %702, %701 : vector<16x16xf32>
    %704 = arith.addf %700, %703 : vector<16x16xf32>
    %705 = vector.extract_strided_slice %696 {offsets = [0, 2], sizes = [16, 16], strides = [1, 1]} : vector<16x20xf32> to vector<16x16xf32>
    %706 = vector.broadcast %25 : f32 to vector<16x16xf32>
    %707 = arith.mulf %706, %705 : vector<16x16xf32>
    %708 = arith.addf %704, %707 : vector<16x16xf32>
    %709 = vector.extract_strided_slice %696 {offsets = [0, 3], sizes = [16, 16], strides = [1, 1]} : vector<16x20xf32> to vector<16x16xf32>
    %710 = vector.broadcast %26 : f32 to vector<16x16xf32>
    %711 = arith.mulf %710, %709 : vector<16x16xf32>
    %712 = arith.addf %708, %711 : vector<16x16xf32>
    %713 = vector.extract_strided_slice %696 {offsets = [0, 4], sizes = [16, 16], strides = [1, 1]} : vector<16x20xf32> to vector<16x16xf32>
    %714 = vector.broadcast %27 : f32 to vector<16x16xf32>
    %715 = arith.mulf %714, %713 : vector<16x16xf32>
    %716 = arith.addf %712, %715 : vector<16x16xf32>
    %c0_369 = arith.constant 0 : index
    %c4_370 = arith.constant 4 : index
    %c0_371 = arith.constant 0 : index
    %717 = vector.load %arg4[%c0_369, %c4_370, %c0_371] : memref<2x20x20xf32, #tpu.memory_space<vmem>>, vector<1x16x20xf32>
    %718 = vector.shape_cast %717 : vector<1x16x20xf32> to vector<16x20xf32>
    %719 = vector.extract_strided_slice %718 {offsets = [0, 0], sizes = [16, 16], strides = [1, 1]} : vector<16x20xf32> to vector<16x16xf32>
    %720 = vector.broadcast %28 : f32 to vector<16x16xf32>
    %721 = arith.mulf %720, %719 : vector<16x16xf32>
    %722 = arith.addf %716, %721 : vector<16x16xf32>
    %723 = vector.extract_strided_slice %718 {offsets = [0, 1], sizes = [16, 16], strides = [1, 1]} : vector<16x20xf32> to vector<16x16xf32>
    %724 = vector.broadcast %29 : f32 to vector<16x16xf32>
    %725 = arith.mulf %724, %723 : vector<16x16xf32>
    %726 = arith.addf %722, %725 : vector<16x16xf32>
    %727 = vector.extract_strided_slice %718 {offsets = [0, 2], sizes = [16, 16], strides = [1, 1]} : vector<16x20xf32> to vector<16x16xf32>
    %728 = vector.broadcast %30 : f32 to vector<16x16xf32>
    %729 = arith.mulf %728, %727 : vector<16x16xf32>
    %730 = arith.addf %726, %729 : vector<16x16xf32>
    %731 = vector.extract_strided_slice %718 {offsets = [0, 3], sizes = [16, 16], strides = [1, 1]} : vector<16x20xf32> to vector<16x16xf32>
    %732 = vector.broadcast %31 : f32 to vector<16x16xf32>
    %733 = arith.mulf %732, %731 : vector<16x16xf32>
    %734 = arith.addf %730, %733 : vector<16x16xf32>
    %735 = vector.extract_strided_slice %718 {offsets = [0, 4], sizes = [16, 16], strides = [1, 1]} : vector<16x20xf32> to vector<16x16xf32>
    %736 = vector.broadcast %32 : f32 to vector<16x16xf32>
    %737 = arith.mulf %736, %735 : vector<16x16xf32>
    %738 = arith.addf %734, %737 : vector<16x16xf32>
    %c1_372 = arith.constant 1 : index
    %c0_373 = arith.constant 0 : index
    %c0_374 = arith.constant 0 : index
    %739 = vector.load %arg4[%c1_372, %c0_373, %c0_374] : memref<2x20x20xf32, #tpu.memory_space<vmem>>, vector<1x16x20xf32>
    %740 = vector.shape_cast %739 : vector<1x16x20xf32> to vector<16x20xf32>
    %741 = vector.extract_strided_slice %740 {offsets = [0, 0], sizes = [16, 16], strides = [1, 1]} : vector<16x20xf32> to vector<16x16xf32>
    %742 = vector.broadcast %33 : f32 to vector<16x16xf32>
    %743 = arith.mulf %742, %741 : vector<16x16xf32>
    %744 = arith.addf %738, %743 : vector<16x16xf32>
    %745 = vector.extract_strided_slice %740 {offsets = [0, 1], sizes = [16, 16], strides = [1, 1]} : vector<16x20xf32> to vector<16x16xf32>
    %746 = vector.broadcast %34 : f32 to vector<16x16xf32>
    %747 = arith.mulf %746, %745 : vector<16x16xf32>
    %748 = arith.addf %744, %747 : vector<16x16xf32>
    %749 = vector.extract_strided_slice %740 {offsets = [0, 2], sizes = [16, 16], strides = [1, 1]} : vector<16x20xf32> to vector<16x16xf32>
    %750 = vector.broadcast %35 : f32 to vector<16x16xf32>
    %751 = arith.mulf %750, %749 : vector<16x16xf32>
    %752 = arith.addf %748, %751 : vector<16x16xf32>
    %753 = vector.extract_strided_slice %740 {offsets = [0, 3], sizes = [16, 16], strides = [1, 1]} : vector<16x20xf32> to vector<16x16xf32>
    %754 = vector.broadcast %36 : f32 to vector<16x16xf32>
    %755 = arith.mulf %754, %753 : vector<16x16xf32>
    %756 = arith.addf %752, %755 : vector<16x16xf32>
    %757 = vector.extract_strided_slice %740 {offsets = [0, 4], sizes = [16, 16], strides = [1, 1]} : vector<16x20xf32> to vector<16x16xf32>
    %758 = vector.broadcast %37 : f32 to vector<16x16xf32>
    %759 = arith.mulf %758, %757 : vector<16x16xf32>
    %760 = arith.addf %756, %759 : vector<16x16xf32>
    %c1_375 = arith.constant 1 : index
    %c1_376 = arith.constant 1 : index
    %c0_377 = arith.constant 0 : index
    %761 = vector.load %arg4[%c1_375, %c1_376, %c0_377] : memref<2x20x20xf32, #tpu.memory_space<vmem>>, vector<1x16x20xf32>
    %762 = vector.shape_cast %761 : vector<1x16x20xf32> to vector<16x20xf32>
    %763 = vector.extract_strided_slice %762 {offsets = [0, 0], sizes = [16, 16], strides = [1, 1]} : vector<16x20xf32> to vector<16x16xf32>
    %764 = vector.broadcast %38 : f32 to vector<16x16xf32>
    %765 = arith.mulf %764, %763 : vector<16x16xf32>
    %766 = arith.addf %760, %765 : vector<16x16xf32>
    %767 = vector.extract_strided_slice %762 {offsets = [0, 1], sizes = [16, 16], strides = [1, 1]} : vector<16x20xf32> to vector<16x16xf32>
    %768 = vector.broadcast %39 : f32 to vector<16x16xf32>
    %769 = arith.mulf %768, %767 : vector<16x16xf32>
    %770 = arith.addf %766, %769 : vector<16x16xf32>
    %771 = vector.extract_strided_slice %762 {offsets = [0, 2], sizes = [16, 16], strides = [1, 1]} : vector<16x20xf32> to vector<16x16xf32>
    %772 = vector.broadcast %40 : f32 to vector<16x16xf32>
    %773 = arith.mulf %772, %771 : vector<16x16xf32>
    %774 = arith.addf %770, %773 : vector<16x16xf32>
    %775 = vector.extract_strided_slice %762 {offsets = [0, 3], sizes = [16, 16], strides = [1, 1]} : vector<16x20xf32> to vector<16x16xf32>
    %776 = vector.broadcast %41 : f32 to vector<16x16xf32>
    %777 = arith.mulf %776, %775 : vector<16x16xf32>
    %778 = arith.addf %774, %777 : vector<16x16xf32>
    %779 = vector.extract_strided_slice %762 {offsets = [0, 4], sizes = [16, 16], strides = [1, 1]} : vector<16x20xf32> to vector<16x16xf32>
    %780 = vector.broadcast %42 : f32 to vector<16x16xf32>
    %781 = arith.mulf %780, %779 : vector<16x16xf32>
    %782 = arith.addf %778, %781 : vector<16x16xf32>
    %c1_378 = arith.constant 1 : index
    %c2_379 = arith.constant 2 : index
    %c0_380 = arith.constant 0 : index
    %783 = vector.load %arg4[%c1_378, %c2_379, %c0_380] : memref<2x20x20xf32, #tpu.memory_space<vmem>>, vector<1x16x20xf32>
    %784 = vector.shape_cast %783 : vector<1x16x20xf32> to vector<16x20xf32>
    %785 = vector.extract_strided_slice %784 {offsets = [0, 0], sizes = [16, 16], strides = [1, 1]} : vector<16x20xf32> to vector<16x16xf32>
    %786 = vector.broadcast %43 : f32 to vector<16x16xf32>
    %787 = arith.mulf %786, %785 : vector<16x16xf32>
    %788 = arith.addf %782, %787 : vector<16x16xf32>
    %789 = vector.extract_strided_slice %784 {offsets = [0, 1], sizes = [16, 16], strides = [1, 1]} : vector<16x20xf32> to vector<16x16xf32>
    %790 = vector.broadcast %44 : f32 to vector<16x16xf32>
    %791 = arith.mulf %790, %789 : vector<16x16xf32>
    %792 = arith.addf %788, %791 : vector<16x16xf32>
    %793 = vector.extract_strided_slice %784 {offsets = [0, 2], sizes = [16, 16], strides = [1, 1]} : vector<16x20xf32> to vector<16x16xf32>
    %794 = vector.broadcast %45 : f32 to vector<16x16xf32>
    %795 = arith.mulf %794, %793 : vector<16x16xf32>
    %796 = arith.addf %792, %795 : vector<16x16xf32>
    %797 = vector.extract_strided_slice %784 {offsets = [0, 3], sizes = [16, 16], strides = [1, 1]} : vector<16x20xf32> to vector<16x16xf32>
    %798 = vector.broadcast %46 : f32 to vector<16x16xf32>
    %799 = arith.mulf %798, %797 : vector<16x16xf32>
    %800 = arith.addf %796, %799 : vector<16x16xf32>
    %801 = vector.extract_strided_slice %784 {offsets = [0, 4], sizes = [16, 16], strides = [1, 1]} : vector<16x20xf32> to vector<16x16xf32>
    %802 = vector.broadcast %47 : f32 to vector<16x16xf32>
    %803 = arith.mulf %802, %801 : vector<16x16xf32>
    %804 = arith.addf %800, %803 : vector<16x16xf32>
    %c1_381 = arith.constant 1 : index
    %c3_382 = arith.constant 3 : index
    %c0_383 = arith.constant 0 : index
    %805 = vector.load %arg4[%c1_381, %c3_382, %c0_383] : memref<2x20x20xf32, #tpu.memory_space<vmem>>, vector<1x16x20xf32>
    %806 = vector.shape_cast %805 : vector<1x16x20xf32> to vector<16x20xf32>
    %807 = vector.extract_strided_slice %806 {offsets = [0, 0], sizes = [16, 16], strides = [1, 1]} : vector<16x20xf32> to vector<16x16xf32>
    %808 = vector.broadcast %48 : f32 to vector<16x16xf32>
    %809 = arith.mulf %808, %807 : vector<16x16xf32>
    %810 = arith.addf %804, %809 : vector<16x16xf32>
    %811 = vector.extract_strided_slice %806 {offsets = [0, 1], sizes = [16, 16], strides = [1, 1]} : vector<16x20xf32> to vector<16x16xf32>
    %812 = vector.broadcast %49 : f32 to vector<16x16xf32>
    %813 = arith.mulf %812, %811 : vector<16x16xf32>
    %814 = arith.addf %810, %813 : vector<16x16xf32>
    %815 = vector.extract_strided_slice %806 {offsets = [0, 2], sizes = [16, 16], strides = [1, 1]} : vector<16x20xf32> to vector<16x16xf32>
    %816 = vector.broadcast %50 : f32 to vector<16x16xf32>
    %817 = arith.mulf %816, %815 : vector<16x16xf32>
    %818 = arith.addf %814, %817 : vector<16x16xf32>
    %819 = vector.extract_strided_slice %806 {offsets = [0, 3], sizes = [16, 16], strides = [1, 1]} : vector<16x20xf32> to vector<16x16xf32>
    %820 = vector.broadcast %51 : f32 to vector<16x16xf32>
    %821 = arith.mulf %820, %819 : vector<16x16xf32>
    %822 = arith.addf %818, %821 : vector<16x16xf32>
    %823 = vector.extract_strided_slice %806 {offsets = [0, 4], sizes = [16, 16], strides = [1, 1]} : vector<16x20xf32> to vector<16x16xf32>
    %824 = vector.broadcast %52 : f32 to vector<16x16xf32>
    %825 = arith.mulf %824, %823 : vector<16x16xf32>
    %826 = arith.addf %822, %825 : vector<16x16xf32>
    %c1_384 = arith.constant 1 : index
    %c4_385 = arith.constant 4 : index
    %c0_386 = arith.constant 0 : index
    %827 = vector.load %arg4[%c1_384, %c4_385, %c0_386] : memref<2x20x20xf32, #tpu.memory_space<vmem>>, vector<1x16x20xf32>
    %828 = vector.shape_cast %827 : vector<1x16x20xf32> to vector<16x20xf32>
    %829 = vector.extract_strided_slice %828 {offsets = [0, 0], sizes = [16, 16], strides = [1, 1]} : vector<16x20xf32> to vector<16x16xf32>
    %830 = vector.broadcast %53 : f32 to vector<16x16xf32>
    %831 = arith.mulf %830, %829 : vector<16x16xf32>
    %832 = arith.addf %826, %831 : vector<16x16xf32>
    %833 = vector.extract_strided_slice %828 {offsets = [0, 1], sizes = [16, 16], strides = [1, 1]} : vector<16x20xf32> to vector<16x16xf32>
    %834 = vector.broadcast %54 : f32 to vector<16x16xf32>
    %835 = arith.mulf %834, %833 : vector<16x16xf32>
    %836 = arith.addf %832, %835 : vector<16x16xf32>
    %837 = vector.extract_strided_slice %828 {offsets = [0, 2], sizes = [16, 16], strides = [1, 1]} : vector<16x20xf32> to vector<16x16xf32>
    %838 = vector.broadcast %55 : f32 to vector<16x16xf32>
    %839 = arith.mulf %838, %837 : vector<16x16xf32>
    %840 = arith.addf %836, %839 : vector<16x16xf32>
    %841 = vector.extract_strided_slice %828 {offsets = [0, 3], sizes = [16, 16], strides = [1, 1]} : vector<16x20xf32> to vector<16x16xf32>
    %842 = vector.broadcast %56 : f32 to vector<16x16xf32>
    %843 = arith.mulf %842, %841 : vector<16x16xf32>
    %844 = arith.addf %840, %843 : vector<16x16xf32>
    %845 = vector.extract_strided_slice %828 {offsets = [0, 4], sizes = [16, 16], strides = [1, 1]} : vector<16x20xf32> to vector<16x16xf32>
    %846 = vector.broadcast %57 : f32 to vector<16x16xf32>
    %847 = arith.mulf %846, %845 : vector<16x16xf32>
    %848 = arith.addf %844, %847 : vector<16x16xf32>
    %849 = arith.negf %848 : vector<16x16xf32>
    %850 = math.exp %849 : vector<16x16xf32>
    %cst_387 = arith.constant 1.000000e+00 : f32
    %851 = vector.broadcast %cst_387 : f32 to vector<16x16xf32>
    %852 = arith.addf %851, %850 : vector<16x16xf32>
    %853 = arith.divf %851, %852 : vector<16x16xf32>
    %cst_388 = arith.constant 0.000000e+00 : f32
    %854 = vector.broadcast %cst_388 : f32 to vector<8x16xf32>
    %c0_389 = arith.constant 0 : index
    %c0_390 = arith.constant 0 : index
    %c0_391 = arith.constant 0 : index
    %855 = vector.load %arg5[%c0_389, %c0_390, %c0_391] : memref<2x12x20xf32, #tpu.memory_space<vmem>>, vector<1x8x20xf32>
    %856 = vector.shape_cast %855 : vector<1x8x20xf32> to vector<8x20xf32>
    %857 = vector.extract_strided_slice %856 {offsets = [0, 0], sizes = [8, 16], strides = [1, 1]} : vector<8x20xf32> to vector<8x16xf32>
    %858 = vector.broadcast %58 : f32 to vector<8x16xf32>
    %859 = arith.mulf %858, %857 : vector<8x16xf32>
    %860 = arith.addf %854, %859 : vector<8x16xf32>
    %861 = vector.extract_strided_slice %856 {offsets = [0, 1], sizes = [8, 16], strides = [1, 1]} : vector<8x20xf32> to vector<8x16xf32>
    %862 = vector.broadcast %59 : f32 to vector<8x16xf32>
    %863 = arith.mulf %862, %861 : vector<8x16xf32>
    %864 = arith.addf %860, %863 : vector<8x16xf32>
    %865 = vector.extract_strided_slice %856 {offsets = [0, 2], sizes = [8, 16], strides = [1, 1]} : vector<8x20xf32> to vector<8x16xf32>
    %866 = vector.broadcast %60 : f32 to vector<8x16xf32>
    %867 = arith.mulf %866, %865 : vector<8x16xf32>
    %868 = arith.addf %864, %867 : vector<8x16xf32>
    %869 = vector.extract_strided_slice %856 {offsets = [0, 3], sizes = [8, 16], strides = [1, 1]} : vector<8x20xf32> to vector<8x16xf32>
    %870 = vector.broadcast %61 : f32 to vector<8x16xf32>
    %871 = arith.mulf %870, %869 : vector<8x16xf32>
    %872 = arith.addf %868, %871 : vector<8x16xf32>
    %873 = vector.extract_strided_slice %856 {offsets = [0, 4], sizes = [8, 16], strides = [1, 1]} : vector<8x20xf32> to vector<8x16xf32>
    %874 = vector.broadcast %62 : f32 to vector<8x16xf32>
    %875 = arith.mulf %874, %873 : vector<8x16xf32>
    %876 = arith.addf %872, %875 : vector<8x16xf32>
    %c0_392 = arith.constant 0 : index
    %c1_393 = arith.constant 1 : index
    %c0_394 = arith.constant 0 : index
    %877 = vector.load %arg5[%c0_392, %c1_393, %c0_394] : memref<2x12x20xf32, #tpu.memory_space<vmem>>, vector<1x8x20xf32>
    %878 = vector.shape_cast %877 : vector<1x8x20xf32> to vector<8x20xf32>
    %879 = vector.extract_strided_slice %878 {offsets = [0, 0], sizes = [8, 16], strides = [1, 1]} : vector<8x20xf32> to vector<8x16xf32>
    %880 = vector.broadcast %63 : f32 to vector<8x16xf32>
    %881 = arith.mulf %880, %879 : vector<8x16xf32>
    %882 = arith.addf %876, %881 : vector<8x16xf32>
    %883 = vector.extract_strided_slice %878 {offsets = [0, 1], sizes = [8, 16], strides = [1, 1]} : vector<8x20xf32> to vector<8x16xf32>
    %884 = vector.broadcast %64 : f32 to vector<8x16xf32>
    %885 = arith.mulf %884, %883 : vector<8x16xf32>
    %886 = arith.addf %882, %885 : vector<8x16xf32>
    %887 = vector.extract_strided_slice %878 {offsets = [0, 2], sizes = [8, 16], strides = [1, 1]} : vector<8x20xf32> to vector<8x16xf32>
    %888 = vector.broadcast %65 : f32 to vector<8x16xf32>
    %889 = arith.mulf %888, %887 : vector<8x16xf32>
    %890 = arith.addf %886, %889 : vector<8x16xf32>
    %891 = vector.extract_strided_slice %878 {offsets = [0, 3], sizes = [8, 16], strides = [1, 1]} : vector<8x20xf32> to vector<8x16xf32>
    %892 = vector.broadcast %66 : f32 to vector<8x16xf32>
    %893 = arith.mulf %892, %891 : vector<8x16xf32>
    %894 = arith.addf %890, %893 : vector<8x16xf32>
    %895 = vector.extract_strided_slice %878 {offsets = [0, 4], sizes = [8, 16], strides = [1, 1]} : vector<8x20xf32> to vector<8x16xf32>
    %896 = vector.broadcast %67 : f32 to vector<8x16xf32>
    %897 = arith.mulf %896, %895 : vector<8x16xf32>
    %898 = arith.addf %894, %897 : vector<8x16xf32>
    %c0_395 = arith.constant 0 : index
    %c2_396 = arith.constant 2 : index
    %c0_397 = arith.constant 0 : index
    %899 = vector.load %arg5[%c0_395, %c2_396, %c0_397] : memref<2x12x20xf32, #tpu.memory_space<vmem>>, vector<1x8x20xf32>
    %900 = vector.shape_cast %899 : vector<1x8x20xf32> to vector<8x20xf32>
    %901 = vector.extract_strided_slice %900 {offsets = [0, 0], sizes = [8, 16], strides = [1, 1]} : vector<8x20xf32> to vector<8x16xf32>
    %902 = vector.broadcast %68 : f32 to vector<8x16xf32>
    %903 = arith.mulf %902, %901 : vector<8x16xf32>
    %904 = arith.addf %898, %903 : vector<8x16xf32>
    %905 = vector.extract_strided_slice %900 {offsets = [0, 1], sizes = [8, 16], strides = [1, 1]} : vector<8x20xf32> to vector<8x16xf32>
    %906 = vector.broadcast %69 : f32 to vector<8x16xf32>
    %907 = arith.mulf %906, %905 : vector<8x16xf32>
    %908 = arith.addf %904, %907 : vector<8x16xf32>
    %909 = vector.extract_strided_slice %900 {offsets = [0, 2], sizes = [8, 16], strides = [1, 1]} : vector<8x20xf32> to vector<8x16xf32>
    %910 = vector.broadcast %70 : f32 to vector<8x16xf32>
    %911 = arith.mulf %910, %909 : vector<8x16xf32>
    %912 = arith.addf %908, %911 : vector<8x16xf32>
    %913 = vector.extract_strided_slice %900 {offsets = [0, 3], sizes = [8, 16], strides = [1, 1]} : vector<8x20xf32> to vector<8x16xf32>
    %914 = vector.broadcast %71 : f32 to vector<8x16xf32>
    %915 = arith.mulf %914, %913 : vector<8x16xf32>
    %916 = arith.addf %912, %915 : vector<8x16xf32>
    %917 = vector.extract_strided_slice %900 {offsets = [0, 4], sizes = [8, 16], strides = [1, 1]} : vector<8x20xf32> to vector<8x16xf32>
    %918 = vector.broadcast %72 : f32 to vector<8x16xf32>
    %919 = arith.mulf %918, %917 : vector<8x16xf32>
    %920 = arith.addf %916, %919 : vector<8x16xf32>
    %c0_398 = arith.constant 0 : index
    %c3_399 = arith.constant 3 : index
    %c0_400 = arith.constant 0 : index
    %921 = vector.load %arg5[%c0_398, %c3_399, %c0_400] : memref<2x12x20xf32, #tpu.memory_space<vmem>>, vector<1x8x20xf32>
    %922 = vector.shape_cast %921 : vector<1x8x20xf32> to vector<8x20xf32>
    %923 = vector.extract_strided_slice %922 {offsets = [0, 0], sizes = [8, 16], strides = [1, 1]} : vector<8x20xf32> to vector<8x16xf32>
    %924 = vector.broadcast %73 : f32 to vector<8x16xf32>
    %925 = arith.mulf %924, %923 : vector<8x16xf32>
    %926 = arith.addf %920, %925 : vector<8x16xf32>
    %927 = vector.extract_strided_slice %922 {offsets = [0, 1], sizes = [8, 16], strides = [1, 1]} : vector<8x20xf32> to vector<8x16xf32>
    %928 = vector.broadcast %74 : f32 to vector<8x16xf32>
    %929 = arith.mulf %928, %927 : vector<8x16xf32>
    %930 = arith.addf %926, %929 : vector<8x16xf32>
    %931 = vector.extract_strided_slice %922 {offsets = [0, 2], sizes = [8, 16], strides = [1, 1]} : vector<8x20xf32> to vector<8x16xf32>
    %932 = vector.broadcast %75 : f32 to vector<8x16xf32>
    %933 = arith.mulf %932, %931 : vector<8x16xf32>
    %934 = arith.addf %930, %933 : vector<8x16xf32>
    %935 = vector.extract_strided_slice %922 {offsets = [0, 3], sizes = [8, 16], strides = [1, 1]} : vector<8x20xf32> to vector<8x16xf32>
    %936 = vector.broadcast %76 : f32 to vector<8x16xf32>
    %937 = arith.mulf %936, %935 : vector<8x16xf32>
    %938 = arith.addf %934, %937 : vector<8x16xf32>
    %939 = vector.extract_strided_slice %922 {offsets = [0, 4], sizes = [8, 16], strides = [1, 1]} : vector<8x20xf32> to vector<8x16xf32>
    %940 = vector.broadcast %77 : f32 to vector<8x16xf32>
    %941 = arith.mulf %940, %939 : vector<8x16xf32>
    %942 = arith.addf %938, %941 : vector<8x16xf32>
    %c0_401 = arith.constant 0 : index
    %c4_402 = arith.constant 4 : index
    %c0_403 = arith.constant 0 : index
    %943 = vector.load %arg5[%c0_401, %c4_402, %c0_403] : memref<2x12x20xf32, #tpu.memory_space<vmem>>, vector<1x8x20xf32>
    %944 = vector.shape_cast %943 : vector<1x8x20xf32> to vector<8x20xf32>
    %945 = vector.extract_strided_slice %944 {offsets = [0, 0], sizes = [8, 16], strides = [1, 1]} : vector<8x20xf32> to vector<8x16xf32>
    %946 = vector.broadcast %78 : f32 to vector<8x16xf32>
    %947 = arith.mulf %946, %945 : vector<8x16xf32>
    %948 = arith.addf %942, %947 : vector<8x16xf32>
    %949 = vector.extract_strided_slice %944 {offsets = [0, 1], sizes = [8, 16], strides = [1, 1]} : vector<8x20xf32> to vector<8x16xf32>
    %950 = vector.broadcast %79 : f32 to vector<8x16xf32>
    %951 = arith.mulf %950, %949 : vector<8x16xf32>
    %952 = arith.addf %948, %951 : vector<8x16xf32>
    %953 = vector.extract_strided_slice %944 {offsets = [0, 2], sizes = [8, 16], strides = [1, 1]} : vector<8x20xf32> to vector<8x16xf32>
    %954 = vector.broadcast %80 : f32 to vector<8x16xf32>
    %955 = arith.mulf %954, %953 : vector<8x16xf32>
    %956 = arith.addf %952, %955 : vector<8x16xf32>
    %957 = vector.extract_strided_slice %944 {offsets = [0, 3], sizes = [8, 16], strides = [1, 1]} : vector<8x20xf32> to vector<8x16xf32>
    %958 = vector.broadcast %81 : f32 to vector<8x16xf32>
    %959 = arith.mulf %958, %957 : vector<8x16xf32>
    %960 = arith.addf %956, %959 : vector<8x16xf32>
    %961 = vector.extract_strided_slice %944 {offsets = [0, 4], sizes = [8, 16], strides = [1, 1]} : vector<8x20xf32> to vector<8x16xf32>
    %962 = vector.broadcast %82 : f32 to vector<8x16xf32>
    %963 = arith.mulf %962, %961 : vector<8x16xf32>
    %964 = arith.addf %960, %963 : vector<8x16xf32>
    %c1_404 = arith.constant 1 : index
    %c0_405 = arith.constant 0 : index
    %c0_406 = arith.constant 0 : index
    %965 = vector.load %arg5[%c1_404, %c0_405, %c0_406] : memref<2x12x20xf32, #tpu.memory_space<vmem>>, vector<1x8x20xf32>
    %966 = vector.shape_cast %965 : vector<1x8x20xf32> to vector<8x20xf32>
    %967 = vector.extract_strided_slice %966 {offsets = [0, 0], sizes = [8, 16], strides = [1, 1]} : vector<8x20xf32> to vector<8x16xf32>
    %968 = vector.broadcast %83 : f32 to vector<8x16xf32>
    %969 = arith.mulf %968, %967 : vector<8x16xf32>
    %970 = arith.addf %964, %969 : vector<8x16xf32>
    %971 = vector.extract_strided_slice %966 {offsets = [0, 1], sizes = [8, 16], strides = [1, 1]} : vector<8x20xf32> to vector<8x16xf32>
    %972 = vector.broadcast %84 : f32 to vector<8x16xf32>
    %973 = arith.mulf %972, %971 : vector<8x16xf32>
    %974 = arith.addf %970, %973 : vector<8x16xf32>
    %975 = vector.extract_strided_slice %966 {offsets = [0, 2], sizes = [8, 16], strides = [1, 1]} : vector<8x20xf32> to vector<8x16xf32>
    %976 = vector.broadcast %85 : f32 to vector<8x16xf32>
    %977 = arith.mulf %976, %975 : vector<8x16xf32>
    %978 = arith.addf %974, %977 : vector<8x16xf32>
    %979 = vector.extract_strided_slice %966 {offsets = [0, 3], sizes = [8, 16], strides = [1, 1]} : vector<8x20xf32> to vector<8x16xf32>
    %980 = vector.broadcast %86 : f32 to vector<8x16xf32>
    %981 = arith.mulf %980, %979 : vector<8x16xf32>
    %982 = arith.addf %978, %981 : vector<8x16xf32>
    %983 = vector.extract_strided_slice %966 {offsets = [0, 4], sizes = [8, 16], strides = [1, 1]} : vector<8x20xf32> to vector<8x16xf32>
    %984 = vector.broadcast %87 : f32 to vector<8x16xf32>
    %985 = arith.mulf %984, %983 : vector<8x16xf32>
    %986 = arith.addf %982, %985 : vector<8x16xf32>
    %c1_407 = arith.constant 1 : index
    %c1_408 = arith.constant 1 : index
    %c0_409 = arith.constant 0 : index
    %987 = vector.load %arg5[%c1_407, %c1_408, %c0_409] : memref<2x12x20xf32, #tpu.memory_space<vmem>>, vector<1x8x20xf32>
    %988 = vector.shape_cast %987 : vector<1x8x20xf32> to vector<8x20xf32>
    %989 = vector.extract_strided_slice %988 {offsets = [0, 0], sizes = [8, 16], strides = [1, 1]} : vector<8x20xf32> to vector<8x16xf32>
    %990 = vector.broadcast %88 : f32 to vector<8x16xf32>
    %991 = arith.mulf %990, %989 : vector<8x16xf32>
    %992 = arith.addf %986, %991 : vector<8x16xf32>
    %993 = vector.extract_strided_slice %988 {offsets = [0, 1], sizes = [8, 16], strides = [1, 1]} : vector<8x20xf32> to vector<8x16xf32>
    %994 = vector.broadcast %89 : f32 to vector<8x16xf32>
    %995 = arith.mulf %994, %993 : vector<8x16xf32>
    %996 = arith.addf %992, %995 : vector<8x16xf32>
    %997 = vector.extract_strided_slice %988 {offsets = [0, 2], sizes = [8, 16], strides = [1, 1]} : vector<8x20xf32> to vector<8x16xf32>
    %998 = vector.broadcast %90 : f32 to vector<8x16xf32>
    %999 = arith.mulf %998, %997 : vector<8x16xf32>
    %1000 = arith.addf %996, %999 : vector<8x16xf32>
    %1001 = vector.extract_strided_slice %988 {offsets = [0, 3], sizes = [8, 16], strides = [1, 1]} : vector<8x20xf32> to vector<8x16xf32>
    %1002 = vector.broadcast %91 : f32 to vector<8x16xf32>
    %1003 = arith.mulf %1002, %1001 : vector<8x16xf32>
    %1004 = arith.addf %1000, %1003 : vector<8x16xf32>
    %1005 = vector.extract_strided_slice %988 {offsets = [0, 4], sizes = [8, 16], strides = [1, 1]} : vector<8x20xf32> to vector<8x16xf32>
    %1006 = vector.broadcast %92 : f32 to vector<8x16xf32>
    %1007 = arith.mulf %1006, %1005 : vector<8x16xf32>
    %1008 = arith.addf %1004, %1007 : vector<8x16xf32>
    %c1_410 = arith.constant 1 : index
    %c2_411 = arith.constant 2 : index
    %c0_412 = arith.constant 0 : index
    %1009 = vector.load %arg5[%c1_410, %c2_411, %c0_412] : memref<2x12x20xf32, #tpu.memory_space<vmem>>, vector<1x8x20xf32>
    %1010 = vector.shape_cast %1009 : vector<1x8x20xf32> to vector<8x20xf32>
    %1011 = vector.extract_strided_slice %1010 {offsets = [0, 0], sizes = [8, 16], strides = [1, 1]} : vector<8x20xf32> to vector<8x16xf32>
    %1012 = vector.broadcast %93 : f32 to vector<8x16xf32>
    %1013 = arith.mulf %1012, %1011 : vector<8x16xf32>
    %1014 = arith.addf %1008, %1013 : vector<8x16xf32>
    %1015 = vector.extract_strided_slice %1010 {offsets = [0, 1], sizes = [8, 16], strides = [1, 1]} : vector<8x20xf32> to vector<8x16xf32>
    %1016 = vector.broadcast %94 : f32 to vector<8x16xf32>
    %1017 = arith.mulf %1016, %1015 : vector<8x16xf32>
    %1018 = arith.addf %1014, %1017 : vector<8x16xf32>
    %1019 = vector.extract_strided_slice %1010 {offsets = [0, 2], sizes = [8, 16], strides = [1, 1]} : vector<8x20xf32> to vector<8x16xf32>
    %1020 = vector.broadcast %95 : f32 to vector<8x16xf32>
    %1021 = arith.mulf %1020, %1019 : vector<8x16xf32>
    %1022 = arith.addf %1018, %1021 : vector<8x16xf32>
    %1023 = vector.extract_strided_slice %1010 {offsets = [0, 3], sizes = [8, 16], strides = [1, 1]} : vector<8x20xf32> to vector<8x16xf32>
    %1024 = vector.broadcast %96 : f32 to vector<8x16xf32>
    %1025 = arith.mulf %1024, %1023 : vector<8x16xf32>
    %1026 = arith.addf %1022, %1025 : vector<8x16xf32>
    %1027 = vector.extract_strided_slice %1010 {offsets = [0, 4], sizes = [8, 16], strides = [1, 1]} : vector<8x20xf32> to vector<8x16xf32>
    %1028 = vector.broadcast %97 : f32 to vector<8x16xf32>
    %1029 = arith.mulf %1028, %1027 : vector<8x16xf32>
    %1030 = arith.addf %1026, %1029 : vector<8x16xf32>
    %c1_413 = arith.constant 1 : index
    %c3_414 = arith.constant 3 : index
    %c0_415 = arith.constant 0 : index
    %1031 = vector.load %arg5[%c1_413, %c3_414, %c0_415] : memref<2x12x20xf32, #tpu.memory_space<vmem>>, vector<1x8x20xf32>
    %1032 = vector.shape_cast %1031 : vector<1x8x20xf32> to vector<8x20xf32>
    %1033 = vector.extract_strided_slice %1032 {offsets = [0, 0], sizes = [8, 16], strides = [1, 1]} : vector<8x20xf32> to vector<8x16xf32>
    %1034 = vector.broadcast %98 : f32 to vector<8x16xf32>
    %1035 = arith.mulf %1034, %1033 : vector<8x16xf32>
    %1036 = arith.addf %1030, %1035 : vector<8x16xf32>
    %1037 = vector.extract_strided_slice %1032 {offsets = [0, 1], sizes = [8, 16], strides = [1, 1]} : vector<8x20xf32> to vector<8x16xf32>
    %1038 = vector.broadcast %99 : f32 to vector<8x16xf32>
    %1039 = arith.mulf %1038, %1037 : vector<8x16xf32>
    %1040 = arith.addf %1036, %1039 : vector<8x16xf32>
    %1041 = vector.extract_strided_slice %1032 {offsets = [0, 2], sizes = [8, 16], strides = [1, 1]} : vector<8x20xf32> to vector<8x16xf32>
    %1042 = vector.broadcast %100 : f32 to vector<8x16xf32>
    %1043 = arith.mulf %1042, %1041 : vector<8x16xf32>
    %1044 = arith.addf %1040, %1043 : vector<8x16xf32>
    %1045 = vector.extract_strided_slice %1032 {offsets = [0, 3], sizes = [8, 16], strides = [1, 1]} : vector<8x20xf32> to vector<8x16xf32>
    %1046 = vector.broadcast %101 : f32 to vector<8x16xf32>
    %1047 = arith.mulf %1046, %1045 : vector<8x16xf32>
    %1048 = arith.addf %1044, %1047 : vector<8x16xf32>
    %1049 = vector.extract_strided_slice %1032 {offsets = [0, 4], sizes = [8, 16], strides = [1, 1]} : vector<8x20xf32> to vector<8x16xf32>
    %1050 = vector.broadcast %102 : f32 to vector<8x16xf32>
    %1051 = arith.mulf %1050, %1049 : vector<8x16xf32>
    %1052 = arith.addf %1048, %1051 : vector<8x16xf32>
    %c1_416 = arith.constant 1 : index
    %c4_417 = arith.constant 4 : index
    %c0_418 = arith.constant 0 : index
    %1053 = vector.load %arg5[%c1_416, %c4_417, %c0_418] : memref<2x12x20xf32, #tpu.memory_space<vmem>>, vector<1x8x20xf32>
    %1054 = vector.shape_cast %1053 : vector<1x8x20xf32> to vector<8x20xf32>
    %1055 = vector.extract_strided_slice %1054 {offsets = [0, 0], sizes = [8, 16], strides = [1, 1]} : vector<8x20xf32> to vector<8x16xf32>
    %1056 = vector.broadcast %103 : f32 to vector<8x16xf32>
    %1057 = arith.mulf %1056, %1055 : vector<8x16xf32>
    %1058 = arith.addf %1052, %1057 : vector<8x16xf32>
    %1059 = vector.extract_strided_slice %1054 {offsets = [0, 1], sizes = [8, 16], strides = [1, 1]} : vector<8x20xf32> to vector<8x16xf32>
    %1060 = vector.broadcast %104 : f32 to vector<8x16xf32>
    %1061 = arith.mulf %1060, %1059 : vector<8x16xf32>
    %1062 = arith.addf %1058, %1061 : vector<8x16xf32>
    %1063 = vector.extract_strided_slice %1054 {offsets = [0, 2], sizes = [8, 16], strides = [1, 1]} : vector<8x20xf32> to vector<8x16xf32>
    %1064 = vector.broadcast %105 : f32 to vector<8x16xf32>
    %1065 = arith.mulf %1064, %1063 : vector<8x16xf32>
    %1066 = arith.addf %1062, %1065 : vector<8x16xf32>
    %1067 = vector.extract_strided_slice %1054 {offsets = [0, 3], sizes = [8, 16], strides = [1, 1]} : vector<8x20xf32> to vector<8x16xf32>
    %1068 = vector.broadcast %106 : f32 to vector<8x16xf32>
    %1069 = arith.mulf %1068, %1067 : vector<8x16xf32>
    %1070 = arith.addf %1066, %1069 : vector<8x16xf32>
    %1071 = vector.extract_strided_slice %1054 {offsets = [0, 4], sizes = [8, 16], strides = [1, 1]} : vector<8x20xf32> to vector<8x16xf32>
    %1072 = vector.broadcast %107 : f32 to vector<8x16xf32>
    %1073 = arith.mulf %1072, %1071 : vector<8x16xf32>
    %1074 = arith.addf %1070, %1073 : vector<8x16xf32>
    %1075 = arith.negf %1074 : vector<8x16xf32>
    %1076 = math.exp %1075 : vector<8x16xf32>
    %cst_419 = arith.constant 1.000000e+00 : f32
    %1077 = vector.broadcast %cst_419 : f32 to vector<8x16xf32>
    %1078 = arith.addf %1077, %1076 : vector<8x16xf32>
    %1079 = arith.divf %1077, %1078 : vector<8x16xf32>
    %cst_420 = arith.constant 0.000000e+00 : f32
    %1080 = vector.broadcast %cst_420 : f32 to vector<8x16xf32>
    %c0_421 = arith.constant 0 : index
    %c0_422 = arith.constant 0 : index
    %c0_423 = arith.constant 0 : index
    %1081 = vector.load %arg6[%c0_421, %c0_422, %c0_423] : memref<2x12x20xf32, #tpu.memory_space<vmem>>, vector<1x8x20xf32>
    %1082 = vector.shape_cast %1081 : vector<1x8x20xf32> to vector<8x20xf32>
    %1083 = vector.extract_strided_slice %1082 {offsets = [0, 0], sizes = [8, 16], strides = [1, 1]} : vector<8x20xf32> to vector<8x16xf32>
    %1084 = vector.broadcast %108 : f32 to vector<8x16xf32>
    %1085 = arith.mulf %1084, %1083 : vector<8x16xf32>
    %1086 = arith.addf %1080, %1085 : vector<8x16xf32>
    %1087 = vector.extract_strided_slice %1082 {offsets = [0, 1], sizes = [8, 16], strides = [1, 1]} : vector<8x20xf32> to vector<8x16xf32>
    %1088 = vector.broadcast %113 : f32 to vector<8x16xf32>
    %1089 = arith.mulf %1088, %1087 : vector<8x16xf32>
    %1090 = arith.addf %1086, %1089 : vector<8x16xf32>
    %1091 = vector.extract_strided_slice %1082 {offsets = [0, 2], sizes = [8, 16], strides = [1, 1]} : vector<8x20xf32> to vector<8x16xf32>
    %1092 = vector.broadcast %118 : f32 to vector<8x16xf32>
    %1093 = arith.mulf %1092, %1091 : vector<8x16xf32>
    %1094 = arith.addf %1090, %1093 : vector<8x16xf32>
    %1095 = vector.extract_strided_slice %1082 {offsets = [0, 3], sizes = [8, 16], strides = [1, 1]} : vector<8x20xf32> to vector<8x16xf32>
    %1096 = vector.broadcast %123 : f32 to vector<8x16xf32>
    %1097 = arith.mulf %1096, %1095 : vector<8x16xf32>
    %1098 = arith.addf %1094, %1097 : vector<8x16xf32>
    %1099 = vector.extract_strided_slice %1082 {offsets = [0, 4], sizes = [8, 16], strides = [1, 1]} : vector<8x20xf32> to vector<8x16xf32>
    %1100 = vector.broadcast %128 : f32 to vector<8x16xf32>
    %1101 = arith.mulf %1100, %1099 : vector<8x16xf32>
    %1102 = arith.addf %1098, %1101 : vector<8x16xf32>
    %c0_424 = arith.constant 0 : index
    %c1_425 = arith.constant 1 : index
    %c0_426 = arith.constant 0 : index
    %1103 = vector.load %arg6[%c0_424, %c1_425, %c0_426] : memref<2x12x20xf32, #tpu.memory_space<vmem>>, vector<1x8x20xf32>
    %1104 = vector.shape_cast %1103 : vector<1x8x20xf32> to vector<8x20xf32>
    %1105 = vector.extract_strided_slice %1104 {offsets = [0, 0], sizes = [8, 16], strides = [1, 1]} : vector<8x20xf32> to vector<8x16xf32>
    %1106 = vector.broadcast %109 : f32 to vector<8x16xf32>
    %1107 = arith.mulf %1106, %1105 : vector<8x16xf32>
    %1108 = arith.addf %1102, %1107 : vector<8x16xf32>
    %1109 = vector.extract_strided_slice %1104 {offsets = [0, 1], sizes = [8, 16], strides = [1, 1]} : vector<8x20xf32> to vector<8x16xf32>
    %1110 = vector.broadcast %114 : f32 to vector<8x16xf32>
    %1111 = arith.mulf %1110, %1109 : vector<8x16xf32>
    %1112 = arith.addf %1108, %1111 : vector<8x16xf32>
    %1113 = vector.extract_strided_slice %1104 {offsets = [0, 2], sizes = [8, 16], strides = [1, 1]} : vector<8x20xf32> to vector<8x16xf32>
    %1114 = vector.broadcast %119 : f32 to vector<8x16xf32>
    %1115 = arith.mulf %1114, %1113 : vector<8x16xf32>
    %1116 = arith.addf %1112, %1115 : vector<8x16xf32>
    %1117 = vector.extract_strided_slice %1104 {offsets = [0, 3], sizes = [8, 16], strides = [1, 1]} : vector<8x20xf32> to vector<8x16xf32>
    %1118 = vector.broadcast %124 : f32 to vector<8x16xf32>
    %1119 = arith.mulf %1118, %1117 : vector<8x16xf32>
    %1120 = arith.addf %1116, %1119 : vector<8x16xf32>
    %1121 = vector.extract_strided_slice %1104 {offsets = [0, 4], sizes = [8, 16], strides = [1, 1]} : vector<8x20xf32> to vector<8x16xf32>
    %1122 = vector.broadcast %129 : f32 to vector<8x16xf32>
    %1123 = arith.mulf %1122, %1121 : vector<8x16xf32>
    %1124 = arith.addf %1120, %1123 : vector<8x16xf32>
    %c0_427 = arith.constant 0 : index
    %c2_428 = arith.constant 2 : index
    %c0_429 = arith.constant 0 : index
    %1125 = vector.load %arg6[%c0_427, %c2_428, %c0_429] : memref<2x12x20xf32, #tpu.memory_space<vmem>>, vector<1x8x20xf32>
    %1126 = vector.shape_cast %1125 : vector<1x8x20xf32> to vector<8x20xf32>
    %1127 = vector.extract_strided_slice %1126 {offsets = [0, 0], sizes = [8, 16], strides = [1, 1]} : vector<8x20xf32> to vector<8x16xf32>
    %1128 = vector.broadcast %110 : f32 to vector<8x16xf32>
    %1129 = arith.mulf %1128, %1127 : vector<8x16xf32>
    %1130 = arith.addf %1124, %1129 : vector<8x16xf32>
    %1131 = vector.extract_strided_slice %1126 {offsets = [0, 1], sizes = [8, 16], strides = [1, 1]} : vector<8x20xf32> to vector<8x16xf32>
    %1132 = vector.broadcast %115 : f32 to vector<8x16xf32>
    %1133 = arith.mulf %1132, %1131 : vector<8x16xf32>
    %1134 = arith.addf %1130, %1133 : vector<8x16xf32>
    %1135 = vector.extract_strided_slice %1126 {offsets = [0, 2], sizes = [8, 16], strides = [1, 1]} : vector<8x20xf32> to vector<8x16xf32>
    %1136 = vector.broadcast %120 : f32 to vector<8x16xf32>
    %1137 = arith.mulf %1136, %1135 : vector<8x16xf32>
    %1138 = arith.addf %1134, %1137 : vector<8x16xf32>
    %1139 = vector.extract_strided_slice %1126 {offsets = [0, 3], sizes = [8, 16], strides = [1, 1]} : vector<8x20xf32> to vector<8x16xf32>
    %1140 = vector.broadcast %125 : f32 to vector<8x16xf32>
    %1141 = arith.mulf %1140, %1139 : vector<8x16xf32>
    %1142 = arith.addf %1138, %1141 : vector<8x16xf32>
    %1143 = vector.extract_strided_slice %1126 {offsets = [0, 4], sizes = [8, 16], strides = [1, 1]} : vector<8x20xf32> to vector<8x16xf32>
    %1144 = vector.broadcast %130 : f32 to vector<8x16xf32>
    %1145 = arith.mulf %1144, %1143 : vector<8x16xf32>
    %1146 = arith.addf %1142, %1145 : vector<8x16xf32>
    %c0_430 = arith.constant 0 : index
    %c3_431 = arith.constant 3 : index
    %c0_432 = arith.constant 0 : index
    %1147 = vector.load %arg6[%c0_430, %c3_431, %c0_432] : memref<2x12x20xf32, #tpu.memory_space<vmem>>, vector<1x8x20xf32>
    %1148 = vector.shape_cast %1147 : vector<1x8x20xf32> to vector<8x20xf32>
    %1149 = vector.extract_strided_slice %1148 {offsets = [0, 0], sizes = [8, 16], strides = [1, 1]} : vector<8x20xf32> to vector<8x16xf32>
    %1150 = vector.broadcast %111 : f32 to vector<8x16xf32>
    %1151 = arith.mulf %1150, %1149 : vector<8x16xf32>
    %1152 = arith.addf %1146, %1151 : vector<8x16xf32>
    %1153 = vector.extract_strided_slice %1148 {offsets = [0, 1], sizes = [8, 16], strides = [1, 1]} : vector<8x20xf32> to vector<8x16xf32>
    %1154 = vector.broadcast %116 : f32 to vector<8x16xf32>
    %1155 = arith.mulf %1154, %1153 : vector<8x16xf32>
    %1156 = arith.addf %1152, %1155 : vector<8x16xf32>
    %1157 = vector.extract_strided_slice %1148 {offsets = [0, 2], sizes = [8, 16], strides = [1, 1]} : vector<8x20xf32> to vector<8x16xf32>
    %1158 = vector.broadcast %121 : f32 to vector<8x16xf32>
    %1159 = arith.mulf %1158, %1157 : vector<8x16xf32>
    %1160 = arith.addf %1156, %1159 : vector<8x16xf32>
    %1161 = vector.extract_strided_slice %1148 {offsets = [0, 3], sizes = [8, 16], strides = [1, 1]} : vector<8x20xf32> to vector<8x16xf32>
    %1162 = vector.broadcast %126 : f32 to vector<8x16xf32>
    %1163 = arith.mulf %1162, %1161 : vector<8x16xf32>
    %1164 = arith.addf %1160, %1163 : vector<8x16xf32>
    %1165 = vector.extract_strided_slice %1148 {offsets = [0, 4], sizes = [8, 16], strides = [1, 1]} : vector<8x20xf32> to vector<8x16xf32>
    %1166 = vector.broadcast %131 : f32 to vector<8x16xf32>
    %1167 = arith.mulf %1166, %1165 : vector<8x16xf32>
    %1168 = arith.addf %1164, %1167 : vector<8x16xf32>
    %c0_433 = arith.constant 0 : index
    %c4_434 = arith.constant 4 : index
    %c0_435 = arith.constant 0 : index
    %1169 = vector.load %arg6[%c0_433, %c4_434, %c0_435] : memref<2x12x20xf32, #tpu.memory_space<vmem>>, vector<1x8x20xf32>
    %1170 = vector.shape_cast %1169 : vector<1x8x20xf32> to vector<8x20xf32>
    %1171 = vector.extract_strided_slice %1170 {offsets = [0, 0], sizes = [8, 16], strides = [1, 1]} : vector<8x20xf32> to vector<8x16xf32>
    %1172 = vector.broadcast %112 : f32 to vector<8x16xf32>
    %1173 = arith.mulf %1172, %1171 : vector<8x16xf32>
    %1174 = arith.addf %1168, %1173 : vector<8x16xf32>
    %1175 = vector.extract_strided_slice %1170 {offsets = [0, 1], sizes = [8, 16], strides = [1, 1]} : vector<8x20xf32> to vector<8x16xf32>
    %1176 = vector.broadcast %117 : f32 to vector<8x16xf32>
    %1177 = arith.mulf %1176, %1175 : vector<8x16xf32>
    %1178 = arith.addf %1174, %1177 : vector<8x16xf32>
    %1179 = vector.extract_strided_slice %1170 {offsets = [0, 2], sizes = [8, 16], strides = [1, 1]} : vector<8x20xf32> to vector<8x16xf32>
    %1180 = vector.broadcast %122 : f32 to vector<8x16xf32>
    %1181 = arith.mulf %1180, %1179 : vector<8x16xf32>
    %1182 = arith.addf %1178, %1181 : vector<8x16xf32>
    %1183 = vector.extract_strided_slice %1170 {offsets = [0, 3], sizes = [8, 16], strides = [1, 1]} : vector<8x20xf32> to vector<8x16xf32>
    %1184 = vector.broadcast %127 : f32 to vector<8x16xf32>
    %1185 = arith.mulf %1184, %1183 : vector<8x16xf32>
    %1186 = arith.addf %1182, %1185 : vector<8x16xf32>
    %1187 = vector.extract_strided_slice %1170 {offsets = [0, 4], sizes = [8, 16], strides = [1, 1]} : vector<8x20xf32> to vector<8x16xf32>
    %1188 = vector.broadcast %132 : f32 to vector<8x16xf32>
    %1189 = arith.mulf %1188, %1187 : vector<8x16xf32>
    %1190 = arith.addf %1186, %1189 : vector<8x16xf32>
    %c1_436 = arith.constant 1 : index
    %c0_437 = arith.constant 0 : index
    %c0_438 = arith.constant 0 : index
    %1191 = vector.load %arg6[%c1_436, %c0_437, %c0_438] : memref<2x12x20xf32, #tpu.memory_space<vmem>>, vector<1x8x20xf32>
    %1192 = vector.shape_cast %1191 : vector<1x8x20xf32> to vector<8x20xf32>
    %1193 = vector.extract_strided_slice %1192 {offsets = [0, 0], sizes = [8, 16], strides = [1, 1]} : vector<8x20xf32> to vector<8x16xf32>
    %1194 = vector.broadcast %133 : f32 to vector<8x16xf32>
    %1195 = arith.mulf %1194, %1193 : vector<8x16xf32>
    %1196 = arith.addf %1190, %1195 : vector<8x16xf32>
    %1197 = vector.extract_strided_slice %1192 {offsets = [0, 1], sizes = [8, 16], strides = [1, 1]} : vector<8x20xf32> to vector<8x16xf32>
    %1198 = vector.broadcast %138 : f32 to vector<8x16xf32>
    %1199 = arith.mulf %1198, %1197 : vector<8x16xf32>
    %1200 = arith.addf %1196, %1199 : vector<8x16xf32>
    %1201 = vector.extract_strided_slice %1192 {offsets = [0, 2], sizes = [8, 16], strides = [1, 1]} : vector<8x20xf32> to vector<8x16xf32>
    %1202 = vector.broadcast %143 : f32 to vector<8x16xf32>
    %1203 = arith.mulf %1202, %1201 : vector<8x16xf32>
    %1204 = arith.addf %1200, %1203 : vector<8x16xf32>
    %1205 = vector.extract_strided_slice %1192 {offsets = [0, 3], sizes = [8, 16], strides = [1, 1]} : vector<8x20xf32> to vector<8x16xf32>
    %1206 = vector.broadcast %148 : f32 to vector<8x16xf32>
    %1207 = arith.mulf %1206, %1205 : vector<8x16xf32>
    %1208 = arith.addf %1204, %1207 : vector<8x16xf32>
    %1209 = vector.extract_strided_slice %1192 {offsets = [0, 4], sizes = [8, 16], strides = [1, 1]} : vector<8x20xf32> to vector<8x16xf32>
    %1210 = vector.broadcast %153 : f32 to vector<8x16xf32>
    %1211 = arith.mulf %1210, %1209 : vector<8x16xf32>
    %1212 = arith.addf %1208, %1211 : vector<8x16xf32>
    %c1_439 = arith.constant 1 : index
    %c1_440 = arith.constant 1 : index
    %c0_441 = arith.constant 0 : index
    %1213 = vector.load %arg6[%c1_439, %c1_440, %c0_441] : memref<2x12x20xf32, #tpu.memory_space<vmem>>, vector<1x8x20xf32>
    %1214 = vector.shape_cast %1213 : vector<1x8x20xf32> to vector<8x20xf32>
    %1215 = vector.extract_strided_slice %1214 {offsets = [0, 0], sizes = [8, 16], strides = [1, 1]} : vector<8x20xf32> to vector<8x16xf32>
    %1216 = vector.broadcast %134 : f32 to vector<8x16xf32>
    %1217 = arith.mulf %1216, %1215 : vector<8x16xf32>
    %1218 = arith.addf %1212, %1217 : vector<8x16xf32>
    %1219 = vector.extract_strided_slice %1214 {offsets = [0, 1], sizes = [8, 16], strides = [1, 1]} : vector<8x20xf32> to vector<8x16xf32>
    %1220 = vector.broadcast %139 : f32 to vector<8x16xf32>
    %1221 = arith.mulf %1220, %1219 : vector<8x16xf32>
    %1222 = arith.addf %1218, %1221 : vector<8x16xf32>
    %1223 = vector.extract_strided_slice %1214 {offsets = [0, 2], sizes = [8, 16], strides = [1, 1]} : vector<8x20xf32> to vector<8x16xf32>
    %1224 = vector.broadcast %144 : f32 to vector<8x16xf32>
    %1225 = arith.mulf %1224, %1223 : vector<8x16xf32>
    %1226 = arith.addf %1222, %1225 : vector<8x16xf32>
    %1227 = vector.extract_strided_slice %1214 {offsets = [0, 3], sizes = [8, 16], strides = [1, 1]} : vector<8x20xf32> to vector<8x16xf32>
    %1228 = vector.broadcast %149 : f32 to vector<8x16xf32>
    %1229 = arith.mulf %1228, %1227 : vector<8x16xf32>
    %1230 = arith.addf %1226, %1229 : vector<8x16xf32>
    %1231 = vector.extract_strided_slice %1214 {offsets = [0, 4], sizes = [8, 16], strides = [1, 1]} : vector<8x20xf32> to vector<8x16xf32>
    %1232 = vector.broadcast %154 : f32 to vector<8x16xf32>
    %1233 = arith.mulf %1232, %1231 : vector<8x16xf32>
    %1234 = arith.addf %1230, %1233 : vector<8x16xf32>
    %c1_442 = arith.constant 1 : index
    %c2_443 = arith.constant 2 : index
    %c0_444 = arith.constant 0 : index
    %1235 = vector.load %arg6[%c1_442, %c2_443, %c0_444] : memref<2x12x20xf32, #tpu.memory_space<vmem>>, vector<1x8x20xf32>
    %1236 = vector.shape_cast %1235 : vector<1x8x20xf32> to vector<8x20xf32>
    %1237 = vector.extract_strided_slice %1236 {offsets = [0, 0], sizes = [8, 16], strides = [1, 1]} : vector<8x20xf32> to vector<8x16xf32>
    %1238 = vector.broadcast %135 : f32 to vector<8x16xf32>
    %1239 = arith.mulf %1238, %1237 : vector<8x16xf32>
    %1240 = arith.addf %1234, %1239 : vector<8x16xf32>
    %1241 = vector.extract_strided_slice %1236 {offsets = [0, 1], sizes = [8, 16], strides = [1, 1]} : vector<8x20xf32> to vector<8x16xf32>
    %1242 = vector.broadcast %140 : f32 to vector<8x16xf32>
    %1243 = arith.mulf %1242, %1241 : vector<8x16xf32>
    %1244 = arith.addf %1240, %1243 : vector<8x16xf32>
    %1245 = vector.extract_strided_slice %1236 {offsets = [0, 2], sizes = [8, 16], strides = [1, 1]} : vector<8x20xf32> to vector<8x16xf32>
    %1246 = vector.broadcast %145 : f32 to vector<8x16xf32>
    %1247 = arith.mulf %1246, %1245 : vector<8x16xf32>
    %1248 = arith.addf %1244, %1247 : vector<8x16xf32>
    %1249 = vector.extract_strided_slice %1236 {offsets = [0, 3], sizes = [8, 16], strides = [1, 1]} : vector<8x20xf32> to vector<8x16xf32>
    %1250 = vector.broadcast %150 : f32 to vector<8x16xf32>
    %1251 = arith.mulf %1250, %1249 : vector<8x16xf32>
    %1252 = arith.addf %1248, %1251 : vector<8x16xf32>
    %1253 = vector.extract_strided_slice %1236 {offsets = [0, 4], sizes = [8, 16], strides = [1, 1]} : vector<8x20xf32> to vector<8x16xf32>
    %1254 = vector.broadcast %155 : f32 to vector<8x16xf32>
    %1255 = arith.mulf %1254, %1253 : vector<8x16xf32>
    %1256 = arith.addf %1252, %1255 : vector<8x16xf32>
    %c1_445 = arith.constant 1 : index
    %c3_446 = arith.constant 3 : index
    %c0_447 = arith.constant 0 : index
    %1257 = vector.load %arg6[%c1_445, %c3_446, %c0_447] : memref<2x12x20xf32, #tpu.memory_space<vmem>>, vector<1x8x20xf32>
    %1258 = vector.shape_cast %1257 : vector<1x8x20xf32> to vector<8x20xf32>
    %1259 = vector.extract_strided_slice %1258 {offsets = [0, 0], sizes = [8, 16], strides = [1, 1]} : vector<8x20xf32> to vector<8x16xf32>
    %1260 = vector.broadcast %136 : f32 to vector<8x16xf32>
    %1261 = arith.mulf %1260, %1259 : vector<8x16xf32>
    %1262 = arith.addf %1256, %1261 : vector<8x16xf32>
    %1263 = vector.extract_strided_slice %1258 {offsets = [0, 1], sizes = [8, 16], strides = [1, 1]} : vector<8x20xf32> to vector<8x16xf32>
    %1264 = vector.broadcast %141 : f32 to vector<8x16xf32>
    %1265 = arith.mulf %1264, %1263 : vector<8x16xf32>
    %1266 = arith.addf %1262, %1265 : vector<8x16xf32>
    %1267 = vector.extract_strided_slice %1258 {offsets = [0, 2], sizes = [8, 16], strides = [1, 1]} : vector<8x20xf32> to vector<8x16xf32>
    %1268 = vector.broadcast %146 : f32 to vector<8x16xf32>
    %1269 = arith.mulf %1268, %1267 : vector<8x16xf32>
    %1270 = arith.addf %1266, %1269 : vector<8x16xf32>
    %1271 = vector.extract_strided_slice %1258 {offsets = [0, 3], sizes = [8, 16], strides = [1, 1]} : vector<8x20xf32> to vector<8x16xf32>
    %1272 = vector.broadcast %151 : f32 to vector<8x16xf32>
    %1273 = arith.mulf %1272, %1271 : vector<8x16xf32>
    %1274 = arith.addf %1270, %1273 : vector<8x16xf32>
    %1275 = vector.extract_strided_slice %1258 {offsets = [0, 4], sizes = [8, 16], strides = [1, 1]} : vector<8x20xf32> to vector<8x16xf32>
    %1276 = vector.broadcast %156 : f32 to vector<8x16xf32>
    %1277 = arith.mulf %1276, %1275 : vector<8x16xf32>
    %1278 = arith.addf %1274, %1277 : vector<8x16xf32>
    %c1_448 = arith.constant 1 : index
    %c4_449 = arith.constant 4 : index
    %c0_450 = arith.constant 0 : index
    %1279 = vector.load %arg6[%c1_448, %c4_449, %c0_450] : memref<2x12x20xf32, #tpu.memory_space<vmem>>, vector<1x8x20xf32>
    %1280 = vector.shape_cast %1279 : vector<1x8x20xf32> to vector<8x20xf32>
    %1281 = vector.extract_strided_slice %1280 {offsets = [0, 0], sizes = [8, 16], strides = [1, 1]} : vector<8x20xf32> to vector<8x16xf32>
    %1282 = vector.broadcast %137 : f32 to vector<8x16xf32>
    %1283 = arith.mulf %1282, %1281 : vector<8x16xf32>
    %1284 = arith.addf %1278, %1283 : vector<8x16xf32>
    %1285 = vector.extract_strided_slice %1280 {offsets = [0, 1], sizes = [8, 16], strides = [1, 1]} : vector<8x20xf32> to vector<8x16xf32>
    %1286 = vector.broadcast %142 : f32 to vector<8x16xf32>
    %1287 = arith.mulf %1286, %1285 : vector<8x16xf32>
    %1288 = arith.addf %1284, %1287 : vector<8x16xf32>
    %1289 = vector.extract_strided_slice %1280 {offsets = [0, 2], sizes = [8, 16], strides = [1, 1]} : vector<8x20xf32> to vector<8x16xf32>
    %1290 = vector.broadcast %147 : f32 to vector<8x16xf32>
    %1291 = arith.mulf %1290, %1289 : vector<8x16xf32>
    %1292 = arith.addf %1288, %1291 : vector<8x16xf32>
    %1293 = vector.extract_strided_slice %1280 {offsets = [0, 3], sizes = [8, 16], strides = [1, 1]} : vector<8x20xf32> to vector<8x16xf32>
    %1294 = vector.broadcast %152 : f32 to vector<8x16xf32>
    %1295 = arith.mulf %1294, %1293 : vector<8x16xf32>
    %1296 = arith.addf %1292, %1295 : vector<8x16xf32>
    %1297 = vector.extract_strided_slice %1280 {offsets = [0, 4], sizes = [8, 16], strides = [1, 1]} : vector<8x20xf32> to vector<8x16xf32>
    %1298 = vector.broadcast %157 : f32 to vector<8x16xf32>
    %1299 = arith.mulf %1298, %1297 : vector<8x16xf32>
    %1300 = arith.addf %1296, %1299 : vector<8x16xf32>
    %1301 = arith.negf %1300 : vector<8x16xf32>
    %1302 = math.exp %1301 : vector<8x16xf32>
    %cst_451 = arith.constant 1.000000e+00 : f32
    %1303 = vector.broadcast %cst_451 : f32 to vector<8x16xf32>
    %1304 = arith.addf %1303, %1302 : vector<8x16xf32>
    %1305 = arith.divf %1303, %1304 : vector<8x16xf32>
    %1306 = arith.addf %627, %623 : vector<8x1xf32>
    %cst_452 = arith.constant 5.000000e-01 : f32
    %1307 = vector.broadcast %cst_452 : f32 to vector<8x1xf32>
    %1308 = arith.mulf %1307, %1306 : vector<8x1xf32>
    %1309 = vector.broadcast %161 : f32 to vector<8x1xf32>
    %1310 = arith.mulf %1309, %627 : vector<8x1xf32>
    %1311 = arith.addf %1308, %1310 : vector<8x1xf32>
    %1312 = vector.broadcast %162 : f32 to vector<8x1xf32>
    %1313 = arith.mulf %1312, %623 : vector<8x1xf32>
    %1314 = arith.addf %1311, %1313 : vector<8x1xf32>
    %c1_453 = arith.constant 1 : index
    %c0_454 = arith.constant 0 : index
    %1315 = vector.load %arg7[%c1_453, %c0_454] : memref<10x1xf32, #tpu.memory_space<vmem>>, vector<8x1xf32>
    tpu.vector_store %arg7[%c1_453, %c0_454], %1314 {strides = array<i32>} : memref<10x1xf32, #tpu.memory_space<vmem>>, vector<8x1xf32>,
    %cst_455 = arith.constant 0.000000e+00 : f32
    %1316 = vector.broadcast %cst_455 : f32 to vector<8x1xf32>
    %c0_456 = arith.constant 0 : index
    %c0_457 = arith.constant 0 : index
    %1317 = vector.load %arg7[%c0_456, %c0_457] : memref<10x1xf32, #tpu.memory_space<vmem>>, vector<8x1xf32>
    %1318 = vector.broadcast %158 : f32 to vector<8x1xf32>
    %1319 = arith.mulf %1318, %1317 : vector<8x1xf32>
    %1320 = arith.addf %1316, %1319 : vector<8x1xf32>
    %c1_458 = arith.constant 1 : index
    %c0_459 = arith.constant 0 : index
    %1321 = vector.load %arg7[%c1_458, %c0_459] : memref<10x1xf32, #tpu.memory_space<vmem>>, vector<8x1xf32>
    %1322 = vector.broadcast %159 : f32 to vector<8x1xf32>
    %1323 = arith.mulf %1322, %1321 : vector<8x1xf32>
    %1324 = arith.addf %1320, %1323 : vector<8x1xf32>
    %c2_460 = arith.constant 2 : index
    %c0_461 = arith.constant 0 : index
    %1325 = vector.load %arg7[%c2_460, %c0_461] : memref<10x1xf32, #tpu.memory_space<vmem>>, vector<8x1xf32>
    %1326 = vector.broadcast %160 : f32 to vector<8x1xf32>
    %1327 = arith.mulf %1326, %1325 : vector<8x1xf32>
    %1328 = arith.addf %1324, %1327 : vector<8x1xf32>
    %1329 = vector.broadcast %163 : f32 to vector<8x1xf32>
    %1330 = arith.addf %1328, %1329 : vector<8x1xf32>
    %1331 = arith.negf %1330 : vector<8x1xf32>
    %1332 = math.exp %1331 : vector<8x1xf32>
    %cst_462 = arith.constant 1.000000e+00 : f32
    %1333 = vector.broadcast %cst_462 : f32 to vector<8x1xf32>
    %1334 = arith.addf %1333, %1332 : vector<8x1xf32>
    %1335 = arith.divf %1333, %1334 : vector<8x1xf32>
    %1336 = vector.extract_strided_slice %853 {offsets = [0, 0], sizes = [1, 16], strides = [1, 1]} : vector<16x16xf32> to vector<1x16xf32>
    %1337 = vector.broadcast %1336 : vector<1x16xf32> to vector<8x16xf32>
    %1338 = arith.addf %1337, %1079 : vector<8x16xf32>
    %1339 = vector.extract_strided_slice %1305 {offsets = [0, 0], sizes = [8, 1], strides = [1, 1]} : vector<8x16xf32> to vector<8x1xf32>
    %1340 = vector.broadcast %1339 : vector<8x1xf32> to vector<8x16xf32>
    %1341 = arith.addf %1338, %1340 : vector<8x16xf32>
    %1342 = vector.broadcast %1335 : vector<8x1xf32> to vector<8x16xf32>
    %1343 = arith.addf %1341, %1342 : vector<8x16xf32>
    %c0_463 = arith.constant 0 : index
    %c0_464 = arith.constant 0 : index
    %1344 = vector.load %arg8[%c0_463, %c0_464] : memref<8x256xf32, #tpu.memory_space<vmem>>, vector<8x16xf32>
    tpu.vector_store %arg8[%c0_463, %c0_464], %1343 {strides = array<i32>} : memref<8x256xf32, #tpu.memory_space<vmem>>, vector<8x16xf32>,
    %1345 = vector.extract_strided_slice %853 {offsets = [1, 0], sizes = [1, 16], strides = [1, 1]} : vector<16x16xf32> to vector<1x16xf32>
    %1346 = vector.broadcast %1345 : vector<1x16xf32> to vector<8x16xf32>
    %1347 = arith.addf %1346, %1079 : vector<8x16xf32>
    %1348 = vector.extract_strided_slice %1305 {offsets = [0, 1], sizes = [8, 1], strides = [1, 1]} : vector<8x16xf32> to vector<8x1xf32>
    %1349 = vector.broadcast %1348 : vector<8x1xf32> to vector<8x16xf32>
    %1350 = arith.addf %1347, %1349 : vector<8x16xf32>
    %1351 = vector.broadcast %1335 : vector<8x1xf32> to vector<8x16xf32>
    %1352 = arith.addf %1350, %1351 : vector<8x16xf32>
    %c0_465 = arith.constant 0 : index
    %c16_466 = arith.constant 16 : index
    %1353 = vector.load %arg8[%c0_465, %c16_466] : memref<8x256xf32, #tpu.memory_space<vmem>>, vector<8x16xf32>
    tpu.vector_store %arg8[%c0_465, %c16_466], %1352 {strides = array<i32>} : memref<8x256xf32, #tpu.memory_space<vmem>>, vector<8x16xf32>,
    %1354 = vector.extract_strided_slice %853 {offsets = [2, 0], sizes = [1, 16], strides = [1, 1]} : vector<16x16xf32> to vector<1x16xf32>
    %1355 = vector.broadcast %1354 : vector<1x16xf32> to vector<8x16xf32>
    %1356 = arith.addf %1355, %1079 : vector<8x16xf32>
    %1357 = vector.extract_strided_slice %1305 {offsets = [0, 2], sizes = [8, 1], strides = [1, 1]} : vector<8x16xf32> to vector<8x1xf32>
    %1358 = vector.broadcast %1357 : vector<8x1xf32> to vector<8x16xf32>
    %1359 = arith.addf %1356, %1358 : vector<8x16xf32>
    %1360 = vector.broadcast %1335 : vector<8x1xf32> to vector<8x16xf32>
    %1361 = arith.addf %1359, %1360 : vector<8x16xf32>
    %c0_467 = arith.constant 0 : index
    %c32_468 = arith.constant 32 : index
    %1362 = vector.load %arg8[%c0_467, %c32_468] : memref<8x256xf32, #tpu.memory_space<vmem>>, vector<8x16xf32>
    tpu.vector_store %arg8[%c0_467, %c32_468], %1361 {strides = array<i32>} : memref<8x256xf32, #tpu.memory_space<vmem>>, vector<8x16xf32>,
    %1363 = vector.extract_strided_slice %853 {offsets = [3, 0], sizes = [1, 16], strides = [1, 1]} : vector<16x16xf32> to vector<1x16xf32>
    %1364 = vector.broadcast %1363 : vector<1x16xf32> to vector<8x16xf32>
    %1365 = arith.addf %1364, %1079 : vector<8x16xf32>
    %1366 = vector.extract_strided_slice %1305 {offsets = [0, 3], sizes = [8, 1], strides = [1, 1]} : vector<8x16xf32> to vector<8x1xf32>
    %1367 = vector.broadcast %1366 : vector<8x1xf32> to vector<8x16xf32>
    %1368 = arith.addf %1365, %1367 : vector<8x16xf32>
    %1369 = vector.broadcast %1335 : vector<8x1xf32> to vector<8x16xf32>
    %1370 = arith.addf %1368, %1369 : vector<8x16xf32>
    %c0_469 = arith.constant 0 : index
    %c48_470 = arith.constant 48 : index
    %1371 = vector.load %arg8[%c0_469, %c48_470] : memref<8x256xf32, #tpu.memory_space<vmem>>, vector<8x16xf32>
    tpu.vector_store %arg8[%c0_469, %c48_470], %1370 {strides = array<i32>} : memref<8x256xf32, #tpu.memory_space<vmem>>, vector<8x16xf32>,
    %1372 = vector.extract_strided_slice %853 {offsets = [4, 0], sizes = [1, 16], strides = [1, 1]} : vector<16x16xf32> to vector<1x16xf32>
    %1373 = vector.broadcast %1372 : vector<1x16xf32> to vector<8x16xf32>
    %1374 = arith.addf %1373, %1079 : vector<8x16xf32>
    %1375 = vector.extract_strided_slice %1305 {offsets = [0, 4], sizes = [8, 1], strides = [1, 1]} : vector<8x16xf32> to vector<8x1xf32>
    %1376 = vector.broadcast %1375 : vector<8x1xf32> to vector<8x16xf32>
    %1377 = arith.addf %1374, %1376 : vector<8x16xf32>
    %1378 = vector.broadcast %1335 : vector<8x1xf32> to vector<8x16xf32>
    %1379 = arith.addf %1377, %1378 : vector<8x16xf32>
    %c0_471 = arith.constant 0 : index
    %c64_472 = arith.constant 64 : index
    %1380 = vector.load %arg8[%c0_471, %c64_472] : memref<8x256xf32, #tpu.memory_space<vmem>>, vector<8x16xf32>
    tpu.vector_store %arg8[%c0_471, %c64_472], %1379 {strides = array<i32>} : memref<8x256xf32, #tpu.memory_space<vmem>>, vector<8x16xf32>,
    %1381 = vector.extract_strided_slice %853 {offsets = [5, 0], sizes = [1, 16], strides = [1, 1]} : vector<16x16xf32> to vector<1x16xf32>
    %1382 = vector.broadcast %1381 : vector<1x16xf32> to vector<8x16xf32>
    %1383 = arith.addf %1382, %1079 : vector<8x16xf32>
    %1384 = vector.extract_strided_slice %1305 {offsets = [0, 5], sizes = [8, 1], strides = [1, 1]} : vector<8x16xf32> to vector<8x1xf32>
    %1385 = vector.broadcast %1384 : vector<8x1xf32> to vector<8x16xf32>
    %1386 = arith.addf %1383, %1385 : vector<8x16xf32>
    %1387 = vector.broadcast %1335 : vector<8x1xf32> to vector<8x16xf32>
    %1388 = arith.addf %1386, %1387 : vector<8x16xf32>
    %c0_473 = arith.constant 0 : index
    %c80_474 = arith.constant 80 : index
    %1389 = vector.load %arg8[%c0_473, %c80_474] : memref<8x256xf32, #tpu.memory_space<vmem>>, vector<8x16xf32>
    tpu.vector_store %arg8[%c0_473, %c80_474], %1388 {strides = array<i32>} : memref<8x256xf32, #tpu.memory_space<vmem>>, vector<8x16xf32>,
    %1390 = vector.extract_strided_slice %853 {offsets = [6, 0], sizes = [1, 16], strides = [1, 1]} : vector<16x16xf32> to vector<1x16xf32>
    %1391 = vector.broadcast %1390 : vector<1x16xf32> to vector<8x16xf32>
    %1392 = arith.addf %1391, %1079 : vector<8x16xf32>
    %1393 = vector.extract_strided_slice %1305 {offsets = [0, 6], sizes = [8, 1], strides = [1, 1]} : vector<8x16xf32> to vector<8x1xf32>
    %1394 = vector.broadcast %1393 : vector<8x1xf32> to vector<8x16xf32>
    %1395 = arith.addf %1392, %1394 : vector<8x16xf32>
    %1396 = vector.broadcast %1335 : vector<8x1xf32> to vector<8x16xf32>
    %1397 = arith.addf %1395, %1396 : vector<8x16xf32>
    %c0_475 = arith.constant 0 : index
    %c96_476 = arith.constant 96 : index
    %1398 = vector.load %arg8[%c0_475, %c96_476] : memref<8x256xf32, #tpu.memory_space<vmem>>, vector<8x16xf32>
    tpu.vector_store %arg8[%c0_475, %c96_476], %1397 {strides = array<i32>} : memref<8x256xf32, #tpu.memory_space<vmem>>, vector<8x16xf32>,
    %1399 = vector.extract_strided_slice %853 {offsets = [7, 0], sizes = [1, 16], strides = [1, 1]} : vector<16x16xf32> to vector<1x16xf32>
    %1400 = vector.broadcast %1399 : vector<1x16xf32> to vector<8x16xf32>
    %1401 = arith.addf %1400, %1079 : vector<8x16xf32>
    %1402 = vector.extract_strided_slice %1305 {offsets = [0, 7], sizes = [8, 1], strides = [1, 1]} : vector<8x16xf32> to vector<8x1xf32>
    %1403 = vector.broadcast %1402 : vector<8x1xf32> to vector<8x16xf32>
    %1404 = arith.addf %1401, %1403 : vector<8x16xf32>
    %1405 = vector.broadcast %1335 : vector<8x1xf32> to vector<8x16xf32>
    %1406 = arith.addf %1404, %1405 : vector<8x16xf32>
    %c0_477 = arith.constant 0 : index
    %c112_478 = arith.constant 112 : index
    %1407 = vector.load %arg8[%c0_477, %c112_478] : memref<8x256xf32, #tpu.memory_space<vmem>>, vector<8x16xf32>
    tpu.vector_store %arg8[%c0_477, %c112_478], %1406 {strides = array<i32>} : memref<8x256xf32, #tpu.memory_space<vmem>>, vector<8x16xf32>,
    %1408 = vector.extract_strided_slice %853 {offsets = [8, 0], sizes = [1, 16], strides = [1, 1]} : vector<16x16xf32> to vector<1x16xf32>
    %1409 = vector.broadcast %1408 : vector<1x16xf32> to vector<8x16xf32>
    %1410 = arith.addf %1409, %1079 : vector<8x16xf32>
    %1411 = vector.extract_strided_slice %1305 {offsets = [0, 8], sizes = [8, 1], strides = [1, 1]} : vector<8x16xf32> to vector<8x1xf32>
    %1412 = vector.broadcast %1411 : vector<8x1xf32> to vector<8x16xf32>
    %1413 = arith.addf %1410, %1412 : vector<8x16xf32>
    %1414 = vector.broadcast %1335 : vector<8x1xf32> to vector<8x16xf32>
    %1415 = arith.addf %1413, %1414 : vector<8x16xf32>
    %c0_479 = arith.constant 0 : index
    %c128_480 = arith.constant 128 : index
    %1416 = vector.load %arg8[%c0_479, %c128_480] : memref<8x256xf32, #tpu.memory_space<vmem>>, vector<8x16xf32>
    tpu.vector_store %arg8[%c0_479, %c128_480], %1415 {strides = array<i32>} : memref<8x256xf32, #tpu.memory_space<vmem>>, vector<8x16xf32>,
    %1417 = vector.extract_strided_slice %853 {offsets = [9, 0], sizes = [1, 16], strides = [1, 1]} : vector<16x16xf32> to vector<1x16xf32>
    %1418 = vector.broadcast %1417 : vector<1x16xf32> to vector<8x16xf32>
    %1419 = arith.addf %1418, %1079 : vector<8x16xf32>
    %1420 = vector.extract_strided_slice %1305 {offsets = [0, 9], sizes = [8, 1], strides = [1, 1]} : vector<8x16xf32> to vector<8x1xf32>
    %1421 = vector.broadcast %1420 : vector<8x1xf32> to vector<8x16xf32>
    %1422 = arith.addf %1419, %1421 : vector<8x16xf32>
    %1423 = vector.broadcast %1335 : vector<8x1xf32> to vector<8x16xf32>
    %1424 = arith.addf %1422, %1423 : vector<8x16xf32>
    %c0_481 = arith.constant 0 : index
    %c144_482 = arith.constant 144 : index
    %1425 = vector.load %arg8[%c0_481, %c144_482] : memref<8x256xf32, #tpu.memory_space<vmem>>, vector<8x16xf32>
    tpu.vector_store %arg8[%c0_481, %c144_482], %1424 {strides = array<i32>} : memref<8x256xf32, #tpu.memory_space<vmem>>, vector<8x16xf32>,
    %1426 = vector.extract_strided_slice %853 {offsets = [10, 0], sizes = [1, 16], strides = [1, 1]} : vector<16x16xf32> to vector<1x16xf32>
    %1427 = vector.broadcast %1426 : vector<1x16xf32> to vector<8x16xf32>
    %1428 = arith.addf %1427, %1079 : vector<8x16xf32>
    %1429 = vector.extract_strided_slice %1305 {offsets = [0, 10], sizes = [8, 1], strides = [1, 1]} : vector<8x16xf32> to vector<8x1xf32>
    %1430 = vector.broadcast %1429 : vector<8x1xf32> to vector<8x16xf32>
    %1431 = arith.addf %1428, %1430 : vector<8x16xf32>
    %1432 = vector.broadcast %1335 : vector<8x1xf32> to vector<8x16xf32>
    %1433 = arith.addf %1431, %1432 : vector<8x16xf32>
    %c0_483 = arith.constant 0 : index
    %c160_484 = arith.constant 160 : index
    %1434 = vector.load %arg8[%c0_483, %c160_484] : memref<8x256xf32, #tpu.memory_space<vmem>>, vector<8x16xf32>
    tpu.vector_store %arg8[%c0_483, %c160_484], %1433 {strides = array<i32>} : memref<8x256xf32, #tpu.memory_space<vmem>>, vector<8x16xf32>,
    %1435 = vector.extract_strided_slice %853 {offsets = [11, 0], sizes = [1, 16], strides = [1, 1]} : vector<16x16xf32> to vector<1x16xf32>
    %1436 = vector.broadcast %1435 : vector<1x16xf32> to vector<8x16xf32>
    %1437 = arith.addf %1436, %1079 : vector<8x16xf32>
    %1438 = vector.extract_strided_slice %1305 {offsets = [0, 11], sizes = [8, 1], strides = [1, 1]} : vector<8x16xf32> to vector<8x1xf32>
    %1439 = vector.broadcast %1438 : vector<8x1xf32> to vector<8x16xf32>
    %1440 = arith.addf %1437, %1439 : vector<8x16xf32>
    %1441 = vector.broadcast %1335 : vector<8x1xf32> to vector<8x16xf32>
    %1442 = arith.addf %1440, %1441 : vector<8x16xf32>
    %c0_485 = arith.constant 0 : index
    %c176_486 = arith.constant 176 : index
    %1443 = vector.load %arg8[%c0_485, %c176_486] : memref<8x256xf32, #tpu.memory_space<vmem>>, vector<8x16xf32>
    tpu.vector_store %arg8[%c0_485, %c176_486], %1442 {strides = array<i32>} : memref<8x256xf32, #tpu.memory_space<vmem>>, vector<8x16xf32>,
    %1444 = vector.extract_strided_slice %853 {offsets = [12, 0], sizes = [1, 16], strides = [1, 1]} : vector<16x16xf32> to vector<1x16xf32>
    %1445 = vector.broadcast %1444 : vector<1x16xf32> to vector<8x16xf32>
    %1446 = arith.addf %1445, %1079 : vector<8x16xf32>
    %1447 = vector.extract_strided_slice %1305 {offsets = [0, 12], sizes = [8, 1], strides = [1, 1]} : vector<8x16xf32> to vector<8x1xf32>
    %1448 = vector.broadcast %1447 : vector<8x1xf32> to vector<8x16xf32>
    %1449 = arith.addf %1446, %1448 : vector<8x16xf32>
    %1450 = vector.broadcast %1335 : vector<8x1xf32> to vector<8x16xf32>
    %1451 = arith.addf %1449, %1450 : vector<8x16xf32>
    %c0_487 = arith.constant 0 : index
    %c192_488 = arith.constant 192 : index
    %1452 = vector.load %arg8[%c0_487, %c192_488] : memref<8x256xf32, #tpu.memory_space<vmem>>, vector<8x16xf32>
    tpu.vector_store %arg8[%c0_487, %c192_488], %1451 {strides = array<i32>} : memref<8x256xf32, #tpu.memory_space<vmem>>, vector<8x16xf32>,
    %1453 = vector.extract_strided_slice %853 {offsets = [13, 0], sizes = [1, 16], strides = [1, 1]} : vector<16x16xf32> to vector<1x16xf32>
    %1454 = vector.broadcast %1453 : vector<1x16xf32> to vector<8x16xf32>
    %1455 = arith.addf %1454, %1079 : vector<8x16xf32>
    %1456 = vector.extract_strided_slice %1305 {offsets = [0, 13], sizes = [8, 1], strides = [1, 1]} : vector<8x16xf32> to vector<8x1xf32>
    %1457 = vector.broadcast %1456 : vector<8x1xf32> to vector<8x16xf32>
    %1458 = arith.addf %1455, %1457 : vector<8x16xf32>
    %1459 = vector.broadcast %1335 : vector<8x1xf32> to vector<8x16xf32>
    %1460 = arith.addf %1458, %1459 : vector<8x16xf32>
    %c0_489 = arith.constant 0 : index
    %c208_490 = arith.constant 208 : index
    %1461 = vector.load %arg8[%c0_489, %c208_490] : memref<8x256xf32, #tpu.memory_space<vmem>>, vector<8x16xf32>
    tpu.vector_store %arg8[%c0_489, %c208_490], %1460 {strides = array<i32>} : memref<8x256xf32, #tpu.memory_space<vmem>>, vector<8x16xf32>,
    %1462 = vector.extract_strided_slice %853 {offsets = [14, 0], sizes = [1, 16], strides = [1, 1]} : vector<16x16xf32> to vector<1x16xf32>
    %1463 = vector.broadcast %1462 : vector<1x16xf32> to vector<8x16xf32>
    %1464 = arith.addf %1463, %1079 : vector<8x16xf32>
    %1465 = vector.extract_strided_slice %1305 {offsets = [0, 14], sizes = [8, 1], strides = [1, 1]} : vector<8x16xf32> to vector<8x1xf32>
    %1466 = vector.broadcast %1465 : vector<8x1xf32> to vector<8x16xf32>
    %1467 = arith.addf %1464, %1466 : vector<8x16xf32>
    %1468 = vector.broadcast %1335 : vector<8x1xf32> to vector<8x16xf32>
    %1469 = arith.addf %1467, %1468 : vector<8x16xf32>
    %c0_491 = arith.constant 0 : index
    %c224_492 = arith.constant 224 : index
    %1470 = vector.load %arg8[%c0_491, %c224_492] : memref<8x256xf32, #tpu.memory_space<vmem>>, vector<8x16xf32>
    tpu.vector_store %arg8[%c0_491, %c224_492], %1469 {strides = array<i32>} : memref<8x256xf32, #tpu.memory_space<vmem>>, vector<8x16xf32>,
    %1471 = vector.extract_strided_slice %853 {offsets = [15, 0], sizes = [1, 16], strides = [1, 1]} : vector<16x16xf32> to vector<1x16xf32>
    %1472 = vector.broadcast %1471 : vector<1x16xf32> to vector<8x16xf32>
    %1473 = arith.addf %1472, %1079 : vector<8x16xf32>
    %1474 = vector.extract_strided_slice %1305 {offsets = [0, 15], sizes = [8, 1], strides = [1, 1]} : vector<8x16xf32> to vector<8x1xf32>
    %1475 = vector.broadcast %1474 : vector<8x1xf32> to vector<8x16xf32>
    %1476 = arith.addf %1473, %1475 : vector<8x16xf32>
    %1477 = vector.broadcast %1335 : vector<8x1xf32> to vector<8x16xf32>
    %1478 = arith.addf %1476, %1477 : vector<8x16xf32>
    %c0_493 = arith.constant 0 : index
    %c240_494 = arith.constant 240 : index
    %1479 = vector.load %arg8[%c0_493, %c240_494] : memref<8x256xf32, #tpu.memory_space<vmem>>, vector<8x16xf32>
    tpu.vector_store %arg8[%c0_493, %c240_494], %1478 {strides = array<i32>} : memref<8x256xf32, #tpu.memory_space<vmem>>, vector<8x16xf32>,
    %c0_495 = arith.constant 0 : index
    %c0_496 = arith.constant 0 : index
    %c0_497 = arith.constant 0 : index
    %1480 = vector.load %arg2[%c0_495, %c0_496, %c0_497] : memref<1x8x256xf32, #tpu.memory_space<vmem>>, vector<1x8x256xf32>
    %1481 = vector.shape_cast %1480 : vector<1x8x256xf32> to vector<8x256xf32>
    %cst_498 = arith.constant 2.500000e-01 : f32
    %1482 = vector.broadcast %cst_498 : f32 to vector<8x256xf32>
    %1483 = arith.mulf %1482, %1481 : vector<8x256xf32>
    %c0_499 = arith.constant 0 : index
    %c0_500 = arith.constant 0 : index
    %1484 = vector.load %arg8[%c0_499, %c0_500] : memref<8x256xf32, #tpu.memory_space<vmem>>, vector<8x256xf32>
    %1485 = arith.mulf %1483, %1484 : vector<8x256xf32>
    %c0_501 = arith.constant 0 : index
    %c0_502 = arith.constant 0 : index
    %c0_503 = arith.constant 0 : index
    %1486 = vector.load %arg3[%c0_501, %c0_502, %c0_503] : memref<1x8x256xf32, #tpu.memory_space<vmem>>, vector<1x8x256xf32>
    %1487 = vector.shape_cast %1486 : vector<1x8x256xf32> to vector<8x256xf32>
    %1488 = vector.shape_cast %1485 : vector<8x256xf32> to vector<1x8x256xf32>
    tpu.vector_store %arg3[%c0_501, %c0_502, %c0_503], %1488 {strides = array<i32>} : memref<1x8x256xf32, #tpu.memory_space<vmem>>, vector<1x8x256xf32>,
    return
  }
  func.func @transform_0(%arg0: i32, %arg1: memref<156xf32, #tpu.memory_space<smem>>) -> (i32, i32, i32) {
    %c0_i32 = arith.constant 0 : i32
    %c0_i32_0 = arith.constant 0 : i32
    %c0_i32_1 = arith.constant 0 : i32
    return %arg0, %c0_i32, %c0_i32_0 : i32, i32, i32
  }
  func.func @transform_1(%arg0: i32, %arg1: memref<156xf32, #tpu.memory_space<smem>>) -> (i32, i32, i32) {
    %c0_i32 = arith.constant 0 : i32
    %c0_i32_0 = arith.constant 0 : i32
    %c0_i32_1 = arith.constant 0 : i32
    return %arg0, %c0_i32, %c0_i32_0 : i32, i32, i32
  }
}

</mosaic_0001>

<llo_original>
// kernel: tpu_custom_call.1
$region0: #{tpu_custom_call.1}
  #allocation0 [shape = 'u32[]', space=smem, size = 0x4, offset = 0x4, fixed_abs, tag = 'smem constant byte address 0x4 - core index']
  #allocation1 [shape = 'u32[72,128]{1,0:T(1,128)}', space=vmem, size = 0x9000, scoped, tag = 'internal scratch']
  #allocation2 [shape = 'f32[2,20,20]{2,1,0:T(8,128)}', space=vmem, size = 0x6000, scoped, tag = 'scratch operand']
  #allocation3 [shape = 'f32[2,12,20]{2,1,0:T(8,128)}', space=vmem, size = 0x4000, scoped, tag = 'scratch operand']
  #allocation4 [shape = 'f32[2,12,20]{2,1,0:T(8,128)}', space=vmem, size = 0x4000, scoped, tag = 'scratch operand']
  #allocation5 [shape = 'f32[10,1]{1,0:T(8,128)}', space=vmem, size = 0x2000, scoped, tag = 'scratch operand']
  #allocation6 [shape = 'f32[8,256]{1,0:T(8,128)}', space=vmem, size = 0x2000, scoped, tag = 'scratch operand']
  #allocation7 [shape = 's32[1]{0}', space=sflag, size = 0x4, scoped, tag = 'scoped memory for tpu_custom_call.1']
  #allocation8 [shape = 'u8[1024]{0}', space=smem, size = 0x400, scoped, tag = 'prefetched SMEM operand 0']
  %s0 = inlined_call_operand.hbm [shape: f32[156], index: 0, kind: input, shape index: {}]
  %s1 = inlined_call_operand.hbm [shape: f32[2,8,256], index: 1, kind: input, shape index: {}]
  %s2 = inlined_call_operand.hbm [shape: f32[2,8,256], index: 2, kind: output, shape index: {}]
  %s3 = sld [smem:[#allocation0]]
  $region41: #{tpu_custom_call.1} parent=0
    _
  %s5 = ssub.s32 1, %s3
  %s6 = scalar_select 0, %s5, %s3
  %s8 = sshll.u32 %s0, 4
  %s9 = int_to_ptr.hbm [resolvable:$true] %s8
  %11 = dma.hbm_to_smem %s9, 32, [#allocation8], [#allocation7]
  %13 = dma.done [#allocation7], 32
  %14 = sfence
  $region1: #{tpu_custom_call.1} parent=0
    #allocation9 [shape = 'u8[16384]{0}', space=vmem, size = 0x4000, scoped, tag = 'input window, operand 1']
    #allocation10 [shape = 's32[2]{0}', space=sflag, size = 0x8, scoped, tag = 'scoped memory for tpu_custom_call.1']
    #allocation11 [shape = 's32[2]{0}', space=sflag, size = 0x8, scoped, tag = 'scoped memory for tpu_custom_call.1']
    #allocation12 [shape = 'u8[16384]{0}', space=vmem, size = 0x4000, scoped, tag = 'output window, operand 0']
    %15 = vsyncpa [#allocation10], 0
    %s16 = scalar_lea.sflag [#allocation10], 1
    %17 = vsyncpa %s16, 0
    %18 = vsyncpa [#allocation11], 0
    %s19 = scalar_lea.sflag [#allocation11], 1
    %20 = vsyncpa %s19, 0
    loop: start=0, step=1, limit=4
    $region2: #{tpu_custom_call.1} parent=1 // loop_pre_header
      _
    $region3: #{tpu_custom_call.1} parent=1 // loop_header
      %s22 = sphi 0, %s26
      %p23 = scmp.ge.s32.totalorder %s22, 4
      %s32 = sphi 0, %s34
      %s35 = sphi 0, %s32
      %s36 = sphi 0, %s35
      %s52 = sphi 0, %s36
      %s58 = sphi 0, %s60
      %s61 = sphi 0, %s58
      %s62 = sphi 0, %s61
      %s78 = sphi 0, %s62
    $region4: #{tpu_custom_call.1} parent=1 // loop_header_branch
      %25 = sbr.rel (%p23) target = $region8
    $region5: #{tpu_custom_call.1} parent=1 // loop_body
      %s27 = ssub.s32 %s22, 1
      %s28 = ssub.s32 %s22, 2
      %s29 = sadd.s32 %s22, 1
      %s30 = ssub.s32 %s22, %s29
      %p31 = scmp.eq.s32.totalorder %s30, 0
      %s33 = sadd.s32 %s32, 1
      %s34 = scalar_select %p31, %s32, %s33
      %p37 = pneg %p31
      %p38 = scmp.eq.s32.totalorder %s22, 1
      %p39 = por %p37, %p38
      %p40 = scmp.ne.s32.totalorder %s32, %s35
      %p41 = scmp.eq.s32.totalorder %s22, 0
      %p42 = por %p40, %p41
      %p43 = scmp.ne.s32.totalorder %s32, %s35
      %p44 = scmp.eq.s32.totalorder %s27, 1
      %p45 = por %p43, %p44
      %p46 = scmp.ne.s32.totalorder %s35, %s36
      %p47 = scmp.eq.s32.totalorder %s27, 0
      %p48 = por %p46, %p47
      %p49 = scmp.ne.s32.totalorder %s35, %s36
      %p50 = scmp.eq.s32.totalorder %s28, 1
      %p51 = por %p49, %p50
      %p53 = scmp.ne.s32.totalorder %s36, %s52
      %p54 = scmp.eq.s32.totalorder %s28, 0
      %p55 = por %p53, %p54
      %s56 = ssub.s32 %s22, %s29
      %p57 = scmp.eq.s32.totalorder %s56, 0
      %s59 = sadd.s32 %s58, 1
      %s60 = scalar_select %p57, %s58, %s59
      %p63 = pneg %p57
      %p64 = scmp.eq.s32.totalorder %s22, 1
      %p65 = por %p63, %p64
      %p66 = scmp.ne.s32.totalorder %s58, %s61
      %p67 = scmp.eq.s32.totalorder %s22, 0
      %p68 = por %p66, %p67
      %p69 = scmp.ne.s32.totalorder %s58, %s61
      %p70 = scmp.eq.s32.totalorder %s27, 1
      %p71 = por %p69, %p70
      %p72 = scmp.ne.s32.totalorder %s61, %s62
      %p73 = scmp.eq.s32.totalorder %s27, 0
      %p74 = por %p72, %p73
      %p75 = scmp.ne.s32.totalorder %s61, %s62
      %p76 = scmp.eq.s32.totalorder %s28, 1
      %p77 = por %p75, %p76
      %p79 = scmp.ne.s32.totalorder %s62, %s78
      %p80 = scmp.eq.s32.totalorder %s28, 0
      %p81 = por %p79, %p80
      %p82 = scmp.le.s32.totalorder 1, %s22
      %p83 = scmp.lt.s32.totalorder %s22, 3
      %p84 = pnand %p82, %p83
      %p85 = pneg %p84
      // Predicated region
      $region9: #{tpu_custom_call.1} parent=5 // pred_check
        _
      $region10: #{tpu_custom_call.1} parent=5 // pred_check_branch
        %87 = sbr.rel (%p84) target = $region12
      $region11: #{tpu_custom_call.1} parent=5 // pred_region
        %s88 = ssub.s32 %s22, 1
      $region12: #{tpu_custom_call.1} parent=5 // pred_fallthru
        _
      %p89 = scmp.lt.s32.totalorder %s22, 2
      // Predicated region
      $region13: #{tpu_custom_call.1} parent=5 // pred_check
        %p90 = pneg %p89
      $region14: #{tpu_custom_call.1} parent=5 // pred_check_branch
        %92 = sbr.rel (%p90) target = $region16
      $region15: #{tpu_custom_call.1} parent=5 // pred_region
        // Predicated region
        $region17: #{tpu_custom_call.1} parent=15 // pred_check
          %p93 = pneg %p42
        $region18: #{tpu_custom_call.1} parent=15 // pred_check_branch
          %95 = sbr.rel (%p93) target = $region20
        $region19: #{tpu_custom_call.1} parent=15 // pred_region
          %s96 = sand.u32 %s32, 1
          %s97 = scalar_lea.sflag [#allocation10], %s96
          %s98 = sand.u32 %s32, 1
          %s99 = smul.addr %s98, 16
          %s100 = scalar_lea.vmem [#allocation9], %s99
          %102 = vsyncadd %s97, 0
          %s103 = smul.addr %s22, 2
          %s104 = smul.addr %s103, 8
          %s105 = scalar_lea.hbm %s1, %s104
          %s107 = sshll.u32 %s105, 4
          %s108 = int_to_ptr.hbm [resolvable:$true] %s107
          %s109 = sshll.u32 %s100, 4
          %s110 = int_to_ptr.vmem [resolvable:$true] %s109
          %112 = dma.hbm_to_vmem [thread:$0]  %s108, 256, %s110, %s97
        $region20: #{tpu_custom_call.1} parent=15 // pred_fallthru
          _
      $region16: #{tpu_custom_call.1} parent=5 // pred_fallthru
        _
      %p113 = scmp.le.s32.totalorder 1, %s22
      %p114 = scmp.lt.s32.totalorder %s22, 3
      %p115 = pnand %p113, %p114
      %p116 = pneg %p115
      // Predicated region
      $region21: #{tpu_custom_call.1} parent=5 // pred_check
        _
      $region22: #{tpu_custom_call.1} parent=5 // pred_check_branch
        %118 = sbr.rel (%p115) target = $region24
      $region23: #{tpu_custom_call.1} parent=5 // pred_region
        %s119 = ssub.s32 %s22, 1
        %s120 = sand.u32 %s35, 1
        %s121 = scalar_lea.sflag [#allocation10], %s120
        %s122 = sand.u32 %s35, 1
        %s123 = smul.addr %s122, 16
        %s124 = scalar_lea.vmem [#allocation9], %s123
        // Predicated region
        $region25: #{tpu_custom_call.1} parent=23 // pred_check
          %p125 = pneg %p48
        $region26: #{tpu_custom_call.1} parent=23 // pred_check_branch
          %127 = sbr.rel (%p125) target = $region28
        $region27: #{tpu_custom_call.1} parent=23 // pred_region
          %129 = dma.done %s121, 256
        $region28: #{tpu_custom_call.1} parent=23 // pred_fallthru
          _
        %s130 = sand.u32 %s35, 1
        %s131 = scalar_lea.sflag [#allocation10], %s130
        %s132 = sand.u32 %s35, 1
        %s133 = smul.addr %s132, 16
        %s134 = scalar_lea.vmem [#allocation9], %s133
        %p135 = pneg %p48
        %p136 = pneg %p45
        %p137 = pneg %p74
        %p138 = pneg %p71
        %s139 = sand.u32 %s61, 1
        %s140 = scalar_lea.sflag [#allocation11], %s139
        %s141 = sand.u32 %s61, 1
        %s142 = smul.addr %s141, 16
        %s143 = scalar_lea.vmem [#allocation12], %s142
        %vm144 = vcmask 162816
        %145 = vst.msk [vmem:[#allocation2] sm:$0xff] %vm144, 0.0
        %146 = vst.msk [vmem:[#allocation2 + $0x8] sm:$0xff] %vm144, 0.0
        %vm147 = vcmask 158720
        %148 = vst.msk [vmem:[#allocation2 + $0x10] sm:$0xf] %vm147, 0.0
        %149 = vst.msk [vmem:[#allocation2 + $0x18] sm:$0xff] %vm144, 0.0
        %150 = vst.msk [vmem:[#allocation2 + $0x20] sm:$0xff] %vm144, 0.0
        %151 = vst.msk [vmem:[#allocation2 + $0x28] sm:$0xf] %vm147, 0.0
        %152 = vst.msk [vmem:[#allocation3] sm:$0xff] %vm144, 0.0
        %153 = vst.msk [vmem:[#allocation3 + $0x8] sm:$0xf] %vm147, 0.0
        %154 = vst.msk [vmem:[#allocation3 + $0x10] sm:$0xff] %vm144, 0.0
        %155 = vst.msk [vmem:[#allocation3 + $0x18] sm:$0xf] %vm147, 0.0
        %156 = vst.msk [vmem:[#allocation4] sm:$0xff] %vm144, 0.0
        %157 = vst.msk [vmem:[#allocation4 + $0x8] sm:$0xf] %vm147, 0.0
        %158 = vst.msk [vmem:[#allocation4 + $0x10] sm:$0xff] %vm144, 0.0
        %159 = vst.msk [vmem:[#allocation4 + $0x18] sm:$0xf] %vm147, 0.0
        %vm160 = vcmask 7168
        %161 = vst.msk [vmem:[#allocation5] sm:$0xff] %vm160, 0.0
        %vm162 = vcmask 1024
        %163 = vst.msk [vmem:[#allocation5 + $0x8] sm:$0x3] %vm162, 0.0
        %s164 = sld [smem:[#allocation8]]
        %s165 = sld [smem:[#allocation8 + $0x1]]
        %s166 = sld [smem:[#allocation8 + $0x2]]
        %s167 = sld [smem:[#allocation8 + $0x3]]
        %s168 = sld [smem:[#allocation8 + $0x4]]
        %s169 = sld [smem:[#allocation8 + $0x5]]
        %s170 = sld [smem:[#allocation8 + $0x6]]
        %s171 = sld [smem:[#allocation8 + $0x7]]
        %s172 = sld [smem:[#allocation8 + $0x8]]
        %s173 = sld [smem:[#allocation8 + $0x9]]
        %s174 = sld [smem:[#allocation8 + $0xa]]
        %s175 = sld [smem:[#allocation8 + $0xb]]
        %s176 = sld [smem:[#allocation8 + $0xc]]
        %s177 = sld [smem:[#allocation8 + $0xd]]
        %s178 = sld [smem:[#allocation8 + $0xe]]
        %s179 = sld [smem:[#allocation8 + $0xf]]
        %s180 = sld [smem:[#allocation8 + $0x10]]
        %s181 = sld [smem:[#allocation8 + $0x11]]
        %s182 = sld [smem:[#allocation8 + $0x12]]
        %s183 = sld [smem:[#allocation8 + $0x13]]
        %s184 = sld [smem:[#allocation8 + $0x14]]
        %s185 = sld [smem:[#allocation8 + $0x15]]
        %s186 = sld [smem:[#allocation8 + $0x16]]
        %s187 = sld [smem:[#allocation8 + $0x17]]
        %s188 = sld [smem:[#allocation8 + $0x18]]
        %s189 = sld [smem:[#allocation8 + $0x19]]
        %s190 = sld [smem:[#allocation8 + $0x1a]]
        %s191 = sld [smem:[#allocation8 + $0x1b]]
        %s192 = sld [smem:[#allocation8 + $0x1c]]
        %s193 = sld [smem:[#allocation8 + $0x1d]]
        %s194 = sld [smem:[#allocation8 + $0x1e]]
        %s195 = sld [smem:[#allocation8 + $0x1f]]
        %s196 = sld [smem:[#allocation8 + $0x20]]
        %s197 = sld [smem:[#allocation8 + $0x21]]
        %s198 = sld [smem:[#allocation8 + $0x22]]
        %s199 = sld [smem:[#allocation8 + $0x23]]
        %s200 = sld [smem:[#allocation8 + $0x24]]
        %s201 = sld [smem:[#allocation8 + $0x25]]
        %s202 = sld [smem:[#allocation8 + $0x26]]
        %s203 = sld [smem:[#allocation8 + $0x27]]
        %s204 = sld [smem:[#allocation8 + $0x28]]
        %s205 = sld [smem:[#allocation8 + $0x29]]
        %s206 = sld [smem:[#allocation8 + $0x2a]]
        %s207 = sld [smem:[#allocation8 + $0x2b]]
        %s208 = sld [smem:[#allocation8 + $0x2c]]
        %s209 = sld [smem:[#allocation8 + $0x2d]]
        %s210 = sld [smem:[#allocation8 + $0x2e]]
        %s211 = sld [smem:[#allocation8 + $0x2f]]
        %s212 = sld [smem:[#allocation8 + $0x30]]
        %s213 = sld [smem:[#allocation8 + $0x31]]
        %s214 = sld [smem:[#allocation8 + $0x32]]
        %s215 = sld [smem:[#allocation8 + $0x33]]
        %s216 = sld [smem:[#allocation8 + $0x34]]
        %s217 = sld [smem:[#allocation8 + $0x35]]
        %s218 = sld [smem:[#allocation8 + $0x36]]
        %s219 = sld [smem:[#allocation8 + $0x37]]
        %s220 = sld [smem:[#allocation8 + $0x38]]
        %s221 = sld [smem:[#allocation8 + $0x39]]
        %s222 = sld [smem:[#allocation8 + $0x3a]]
        %s223 = sld [smem:[#allocation8 + $0x3b]]
        %s224 = sld [smem:[#allocation8 + $0x3c]]
        %s225 = sld [smem:[#allocation8 + $0x3d]]
        %s226 = sld [smem:[#allocation8 + $0x3e]]
        %s227 = sld [smem:[#allocation8 + $0x3f]]
        %s228 = sld [smem:[#allocation8 + $0x40]]
        %s229 = sld [smem:[#allocation8 + $0x41]]
        %s230 = sld [smem:[#allocation8 + $0x42]]
        %s231 = sld [smem:[#allocation8 + $0x43]]
        %s232 = sld [smem:[#allocation8 + $0x44]]
        %s233 = sld [smem:[#allocation8 + $0x45]]
        %s234 = sld [smem:[#allocation8 + $0x46]]
        %s235 = sld [smem:[#allocation8 + $0x47]]
        %s236 = sld [smem:[#allocation8 + $0x48]]
        %s237 = sld [smem:[#allocation8 + $0x49]]
        %s238 = sld [smem:[#allocation8 + $0x4a]]
        %s239 = sld [smem:[#allocation8 + $0x4b]]
        %s240 = sld [smem:[#allocation8 + $0x4c]]
        %s241 = sld [smem:[#allocation8 + $0x4d]]
        %s242 = sld [smem:[#allocation8 + $0x4e]]
        %s243 = sld [smem:[#allocation8 + $0x4f]]
        %s244 = sld [smem:[#allocation8 + $0x50]]
        %s245 = sld [smem:[#allocation8 + $0x51]]
        %s246 = sld [smem:[#allocation8 + $0x52]]
        %s247 = sld [smem:[#allocation8 + $0x53]]
        %s248 = sld [smem:[#allocation8 + $0x54]]
        %s249 = sld [smem:[#allocation8 + $0x55]]
        %s250 = sld [smem:[#allocation8 + $0x56]]
        %s251 = sld [smem:[#allocation8 + $0x57]]
        %s252 = sld [smem:[#allocation8 + $0x58]]
        %s253 = sld [smem:[#allocation8 + $0x59]]
        %s254 = sld [smem:[#allocation8 + $0x5a]]
        %s255 = sld [smem:[#allocation8 + $0x5b]]
        %s256 = sld [smem:[#allocation8 + $0x5c]]
        %s257 = sld [smem:[#allocation8 + $0x5d]]
        %s258 = sld [smem:[#allocation8 + $0x5e]]
        %s259 = sld [smem:[#allocation8 + $0x5f]]
        %s260 = sld [smem:[#allocation8 + $0x60]]
        %s261 = sld [smem:[#allocation8 + $0x61]]
        %s262 = sld [smem:[#allocation8 + $0x62]]
        %s263 = sld [smem:[#allocation8 + $0x63]]
        %s264 = sld [smem:[#allocation8 + $0x64]]
        %s265 = sld [smem:[#allocation8 + $0x65]]
        %s266 = sld [smem:[#allocation8 + $0x66]]
        %s267 = sld [smem:[#allocation8 + $0x67]]
        %s268 = sld [smem:[#allocation8 + $0x68]]
        %s269 = sld [smem:[#allocation8 + $0x69]]
        %s270 = sld [smem:[#allocation8 + $0x6a]]
        %s271 = sld [smem:[#allocation8 + $0x6b]]
        %s272 = sld [smem:[#allocation8 + $0x6c]]
        %s273 = sld [smem:[#allocation8 + $0x6d]]
        %s274 = sld [smem:[#allocation8 + $0x6e]]
        %s275 = sld [smem:[#allocation8 + $0x6f]]
        %s276 = sld [smem:[#allocation8 + $0x70]]
        %s277 = sld [smem:[#allocation8 + $0x71]]
        %s278 = sld [smem:[#allocation8 + $0x72]]
        %s279 = sld [smem:[#allocation8 + $0x73]]
        %s280 = sld [smem:[#allocation8 + $0x74]]
        %s281 = sld [smem:[#allocation8 + $0x75]]
        %s282 = sld [smem:[#allocation8 + $0x76]]
        %s283 = sld [smem:[#allocation8 + $0x77]]
        %s284 = sld [smem:[#allocation8 + $0x78]]
        %s285 = sld [smem:[#allocation8 + $0x79]]
        %s286 = sld [smem:[#allocation8 + $0x7a]]
        %s287 = sld [smem:[#allocation8 + $0x7b]]
        %s288 = sld [smem:[#allocation8 + $0x7c]]
        %s289 = sld [smem:[#allocation8 + $0x7d]]
        %s290 = sld [smem:[#allocation8 + $0x7e]]
        %s291 = sld [smem:[#allocation8 + $0x7f]]
        %s292 = sld [smem:[#allocation8 + $0x80]]
        %s293 = sld [smem:[#allocation8 + $0x81]]
        %s294 = sld [smem:[#allocation8 + $0x82]]
        %s295 = sld [smem:[#allocation8 + $0x83]]
        %s296 = sld [smem:[#allocation8 + $0x84]]
        %s297 = sld [smem:[#allocation8 + $0x85]]
        %s298 = sld [smem:[#allocation8 + $0x86]]
        %s299 = sld [smem:[#allocation8 + $0x87]]
        %s300 = sld [smem:[#allocation8 + $0x88]]
        %s301 = sld [smem:[#allocation8 + $0x89]]
        %s302 = sld [smem:[#allocation8 + $0x8a]]
        %s303 = sld [smem:[#allocation8 + $0x8b]]
        %s304 = sld [smem:[#allocation8 + $0x8c]]
        %s305 = sld [smem:[#allocation8 + $0x8d]]
        %s306 = sld [smem:[#allocation8 + $0x8e]]
        %s307 = sld [smem:[#allocation8 + $0x8f]]
        %s308 = sld [smem:[#allocation8 + $0x90]]
        %s309 = sld [smem:[#allocation8 + $0x91]]
        %s310 = sld [smem:[#allocation8 + $0x92]]
        %s311 = sld [smem:[#allocation8 + $0x93]]
        %s312 = sld [smem:[#allocation8 + $0x94]]
        %s313 = sld [smem:[#allocation8 + $0x95]]
        %s314 = sld [smem:[#allocation8 + $0x99]]
        %s315 = sld [smem:[#allocation8 + $0x9a]]
        %s316 = sld [smem:[#allocation8 + $0x9b]]
        %s317 = sld [smem:[#allocation8 + $0x96]]
        %s318 = sld [smem:[#allocation8 + $0x97]]
        %s319 = sld [smem:[#allocation8 + $0x98]]
        %v320 = vld [vmem:[%s124] sm:$0xff]
        %v321 = vadd.f32 %v320, 0.0
        %vm322 = vcmask 130048
        %v323 = vsel %vm322, %v320, -inf
        %v324 = vrot.slane %v323, 4
        %v325 = vmax.f32 %v323, %v324
        %v326 = vrot.slane %v325, 2
        %v327 = vmax.f32 %v325, %v326
        %v328 = vrot.slane %v327, 1
        %v329 = vmax.f32 %v327, %v328
        %331 = vrot.lane.b32.xlu0 %v329, 2
        %v332 = vpop.permute.xlu0 %331
        %vm334 = vcmask 139280
        %335 = vst.msk [vmem:[#allocation2 + $0x2] sm:$0x1] %vm334, %v332
        %v336 = vsel %vm322, %v320, 0.0
        %v337 = vrot.slane %v336, 4
        %v338 = vadd.f32 %v336, %v337
        %v339 = vrot.slane %v338, 2
        %v340 = vadd.f32 %v338, %v339
        %v341 = vrot.slane %v340, 1
        %v342 = vadd.f32 %v340, %v341
        %v343 = vmul.f32 %v342, 0.125
        %345 = vrot.lane.b32.xlu0 %v343, 2
        %v346 = vpop.permute.xlu0 %345
        %s348 = scalar_lea.vmem [#allocation2], 24
        %349 = vst.msk [vmem:[%s348 + $0x2] sm:$0x1] %vm334, %v346
        %350 = vmax.xlane.f32.xlu0 %v323
        %v351 = vpop.xlane.xlu0 %350
        %vm352 = vcmask 23568
        %353 = vst.msk [vmem:[#allocation4 + $0x2] sm:$0xff] %vm352, %v351
        %354 = vadd.xlane.f32.xlu0 %v336
        %v355 = vpop.xlane.xlu0 %354
        %v356 = vmul.f32 %v355, 0.0625
        %s357 = scalar_lea.vmem [#allocation4], 16
        %358 = vst.msk [vmem:[%s357 + $0x2] sm:$0xff] %vm352, %v356
        %v359 = vld [vmem:[%s124] sm:$0xff]
        %361 = vrot.lane.b32.xlu0 %v359, 112
        %v362 = vpop.permute.xlu0 %361
        %v364 = vmax.f32 %v320, %v362
        %v365 = vadd.f32 %v321, %v362
        %vm366 = vcmask 261248
        %v367 = vsel %vm366, %v359, -inf
        %v368 = vrot.slane %v367, 4
        %v369 = vmax.f32 %v367, %v368
        %v370 = vrot.slane %v369, 2
        %v371 = vmax.f32 %v369, %v370
        %v372 = vrot.slane %v371, 1
        %v373 = vmax.f32 %v371, %v372
        %375 = vrot.lane.b32.xlu0 %v373, 114
        %v376 = vpop.permute.xlu0 %375
        %378 = vst.msk [vmem:[#allocation2 + $0x3] sm:$0x1] %vm334, %v376
        %v379 = vsel %vm366, %v359, 0.0
        %v380 = vrot.slane %v379, 4
        %v381 = vadd.f32 %v379, %v380
        %v382 = vrot.slane %v381, 2
        %v383 = vadd.f32 %v381, %v382
        %v384 = vrot.slane %v383, 1
        %v385 = vadd.f32 %v383, %v384
        %v386 = vmul.f32 %v385, 0.125
        %388 = vrot.lane.b32.xlu0 %v386, 114
        %v389 = vpop.permute.xlu0 %388
        %391 = vst.msk [vmem:[%s348 + $0x3] sm:$0x1] %vm334, %v389
        %392 = vmax.xlane.f32.xlu0 %v367
        %v393 = vpop.xlane.xlu0 %392
        %vm394 = vcmask 31768
        %395 = vst.msk [vmem:[#allocation4 + $0x2] sm:$0xff] %vm394, %v393
        %v396 = vsel %vm322, %v362, 0.0
        %397 = vadd.xlane.f32.xlu0 %v396
        %v398 = vpop.xlane.xlu0 %397
        %v399 = vmul.f32 %v398, 0.0625
        %400 = vst.msk [vmem:[%s357 + $0x2] sm:$0xff] %vm394, %v399
        %v401 = vld [vmem:[%s124] sm:$0xff]
        %403 = vrot.lane.b32.xlu0 %v401, 96
        %v404 = vpop.permute.xlu0 %403
        %v406 = vmax.f32 %v364, %v404
        %v407 = vadd.f32 %v365, %v404
        %vm408 = vcmask 392448
        %v409 = vsel %vm408, %v401, -inf
        %v410 = vrot.slane %v409, 4
        %v411 = vmax.f32 %v409, %v410
        %v412 = vrot.slane %v411, 2
        %v413 = vmax.f32 %v411, %v412
        %v414 = vrot.slane %v413, 1
        %v415 = vmax.f32 %v413, %v414
        %417 = vrot.lane.b32.xlu0 %v415, 98
        %v418 = vpop.permute.xlu0 %417
        %420 = vst.msk [vmem:[#allocation2 + $0x4] sm:$0x1] %vm334, %v418
        %v421 = vsel %vm408, %v401, 0.0
        %v422 = vrot.slane %v421, 4
        %v423 = vadd.f32 %v421, %v422
        %v424 = vrot.slane %v423, 2
        %v425 = vadd.f32 %v423, %v424
        %v426 = vrot.slane %v425, 1
        %v427 = vadd.f32 %v425, %v426
        %v428 = vmul.f32 %v427, 0.125
        %430 = vrot.lane.b32.xlu0 %v428, 98
        %v431 = vpop.permute.xlu0 %430
        %433 = vst.msk [vmem:[%s348 + $0x4] sm:$0x1] %vm334, %v431
        %434 = vmax.xlane.f32.xlu0 %v409
        %v435 = vpop.xlane.xlu0 %434
        %vm436 = vcmask 39968
        %437 = vst.msk [vmem:[#allocation4 + $0x2] sm:$0xff] %vm436, %v435
        %v438 = vsel %vm322, %v404, 0.0
        %439 = vadd.xlane.f32.xlu0 %v438
        %v440 = vpop.xlane.xlu0 %439
        %v441 = vmul.f32 %v440, 0.0625
        %442 = vst.msk [vmem:[%s357 + $0x2] sm:$0xff] %vm436, %v441
        %v443 = vld [vmem:[%s124] sm:$0xff]
        %445 = vrot.lane.b32.xlu0 %v443, 80
        %v446 = vpop.permute.xlu0 %445
        %v448 = vmax.f32 %v406, %v446
        %v449 = vadd.f32 %v407, %v446
        %vm450 = vcmask 523648
        %v451 = vsel %vm450, %v443, -inf
        %v452 = vrot.slane %v451, 4
        %v453 = vmax.f32 %v451, %v452
        %v454 = vrot.slane %v453, 2
        %v455 = vmax.f32 %v453, %v454
        %v456 = vrot.slane %v455, 1
        %v457 = vmax.f32 %v455, %v456
        %459 = vrot.lane.b32.xlu0 %v457, 82
        %v460 = vpop.permute.xlu0 %459
        %462 = vst.msk [vmem:[#allocation2 + $0x5] sm:$0x1] %vm334, %v460
        %v463 = vsel %vm450, %v443, 0.0
        %v464 = vrot.slane %v463, 4
        %v465 = vadd.f32 %v463, %v464
        %v466 = vrot.slane %v465, 2
        %v467 = vadd.f32 %v465, %v466
        %v468 = vrot.slane %v467, 1
        %v469 = vadd.f32 %v467, %v468
        %v470 = vmul.f32 %v469, 0.125
        %472 = vrot.lane.b32.xlu0 %v470, 82
        %v473 = vpop.permute.xlu0 %472
        %475 = vst.msk [vmem:[%s348 + $0x5] sm:$0x1] %vm334, %v473
        %476 = vmax.xlane.f32.xlu0 %v451
        %v477 = vpop.xlane.xlu0 %476
        %vm478 = vcmask 48168
        %479 = vst.msk [vmem:[#allocation4 + $0x2] sm:$0xff] %vm478, %v477
        %v480 = vsel %vm322, %v446, 0.0
        %481 = vadd.xlane.f32.xlu0 %v480
        %v482 = vpop.xlane.xlu0 %481
        %v483 = vmul.f32 %v482, 0.0625
        %484 = vst.msk [vmem:[%s357 + $0x2] sm:$0xff] %vm478, %v483
        %v485 = vld [vmem:[%s124] sm:$0xff]
        %487 = vrot.lane.b32.xlu0 %v485, 64
        %v488 = vpop.permute.xlu0 %487
        %v490 = vmax.f32 %v448, %v488
        %v491 = vadd.f32 %v449, %v488
        %vm492 = vcmask 654848
        %v493 = vsel %vm492, %v485, -inf
        %v494 = vrot.slane %v493, 4
        %v495 = vmax.f32 %v493, %v494
        %v496 = vrot.slane %v495, 2
        %v497 = vmax.f32 %v495, %v496
        %v498 = vrot.slane %v497, 1
        %v499 = vmax.f32 %v497, %v498
        %501 = vrot.lane.b32.xlu0 %v499, 66
        %v502 = vpop.permute.xlu0 %501
        %504 = vst.msk [vmem:[#allocation2 + $0x6] sm:$0x1] %vm334, %v502
        %v505 = vsel %vm492, %v485, 0.0
        %v506 = vrot.slane %v505, 4
        %v507 = vadd.f32 %v505, %v506
        %v508 = vrot.slane %v507, 2
        %v509 = vadd.f32 %v507, %v508
        %v510 = vrot.slane %v509, 1
        %v511 = vadd.f32 %v509, %v510
        %v512 = vmul.f32 %v511, 0.125
        %514 = vrot.lane.b32.xlu0 %v512, 66
        %v515 = vpop.permute.xlu0 %514
        %517 = vst.msk [vmem:[%s348 + $0x6] sm:$0x1] %vm334, %v515
        %518 = vmax.xlane.f32.xlu0 %v493
        %v519 = vpop.xlane.xlu0 %518
        %vm520 = vcmask 56368
        %521 = vst.msk [vmem:[#allocation4 + $0x2] sm:$0xff] %vm520, %v519
        %v522 = vsel %vm322, %v488, 0.0
        %523 = vadd.xlane.f32.xlu0 %v522
        %v524 = vpop.xlane.xlu0 %523
        %v525 = vmul.f32 %v524, 0.0625
        %526 = vst.msk [vmem:[%s357 + $0x2] sm:$0xff] %vm520, %v525
        %v527 = vld [vmem:[%s124] sm:$0xff]
        %529 = vrot.lane.b32.xlu0 %v527, 48
        %v530 = vpop.permute.xlu0 %529
        %v532 = vmax.f32 %v490, %v530
        %v533 = vadd.f32 %v491, %v530
        %vm534 = vcmask 786048
        %v535 = vsel %vm534, %v527, -inf
        %v536 = vrot.slane %v535, 4
        %v537 = vmax.f32 %v535, %v536
        %v538 = vrot.slane %v537, 2
        %v539 = vmax.f32 %v537, %v538
        %v540 = vrot.slane %v539, 1
        %v541 = vmax.f32 %v539, %v540
        %543 = vrot.lane.b32.xlu0 %v541, 50
        %v544 = vpop.permute.xlu0 %543
        %546 = vst.msk [vmem:[#allocation2 + $0x7] sm:$0x1] %vm334, %v544
        %v547 = vsel %vm534, %v527, 0.0
        %v548 = vrot.slane %v547, 4
        %v549 = vadd.f32 %v547, %v548
        %v550 = vrot.slane %v549, 2
        %v551 = vadd.f32 %v549, %v550
        %v552 = vrot.slane %v551, 1
        %v553 = vadd.f32 %v551, %v552
        %v554 = vmul.f32 %v553, 0.125
        %556 = vrot.lane.b32.xlu0 %v554, 50
        %v557 = vpop.permute.xlu0 %556
        %559 = vst.msk [vmem:[%s348 + $0x7] sm:$0x1] %vm334, %v557
        %560 = vmax.xlane.f32.xlu0 %v535
        %v561 = vpop.xlane.xlu0 %560
        %vm562 = vcmask 64568
        %563 = vst.msk [vmem:[#allocation4 + $0x2] sm:$0xff] %vm562, %v561
        %v564 = vsel %vm322, %v530, 0.0
        %565 = vadd.xlane.f32.xlu0 %v564
        %v566 = vpop.xlane.xlu0 %565
        %v567 = vmul.f32 %v566, 0.0625
        %568 = vst.msk [vmem:[%s357 + $0x2] sm:$0xff] %vm562, %v567
        %v569 = vld [vmem:[%s124] sm:$0xff]
        %571 = vrot.lane.b32.xlu0 %v569, 32
        %v572 = vpop.permute.xlu0 %571
        %v574 = vmax.f32 %v532, %v572
        %v575 = vadd.f32 %v533, %v572
        %vm576 = vcmask 917248
        %v577 = vsel %vm576, %v569, -inf
        %v578 = vrot.slane %v577, 4
        %v579 = vmax.f32 %v577, %v578
        %v580 = vrot.slane %v579, 2
        %v581 = vmax.f32 %v579, %v580
        %v582 = vrot.slane %v581, 1
        %v583 = vmax.f32 %v581, %v582
        %585 = vrot.lane.b32.xlu0 %v583, 34
        %v586 = vpop.permute.xlu0 %585
        %588 = vst.msk [vmem:[#allocation2 + $0x8] sm:$0x1] %vm334, %v586
        %v589 = vsel %vm576, %v569, 0.0
        %v590 = vrot.slane %v589, 4
        %v591 = vadd.f32 %v589, %v590
        %v592 = vrot.slane %v591, 2
        %v593 = vadd.f32 %v591, %v592
        %v594 = vrot.slane %v593, 1
        %v595 = vadd.f32 %v593, %v594
        %v596 = vmul.f32 %v595, 0.125
        %598 = vrot.lane.b32.xlu0 %v596, 34
        %v599 = vpop.permute.xlu0 %598
        %601 = vst.msk [vmem:[%s348 + $0x8] sm:$0x1] %vm334, %v599
        %602 = vmax.xlane.f32.xlu0 %v577
        %v603 = vpop.xlane.xlu0 %602
        %vm604 = vcmask 72768
        %605 = vst.msk [vmem:[#allocation4 + $0x2] sm:$0xff] %vm604, %v603
        %v606 = vsel %vm322, %v572, 0.0
        %607 = vadd.xlane.f32.xlu0 %v606
        %v608 = vpop.xlane.xlu0 %607
        %v609 = vmul.f32 %v608, 0.0625
        %610 = vst.msk [vmem:[%s357 + $0x2] sm:$0xff] %vm604, %v609
        %v611 = vld [vmem:[%s124] sm:$0xff]
        %613 = vrot.lane.b32.xlu0 %v611, 16
        %v614 = vpop.permute.xlu0 %613
        %v616 = vmax.f32 %v574, %v614
        %v617 = vadd.f32 %v575, %v614
        %vm618 = vcmask 1048448
        %v619 = vsel %vm618, %v611, -inf
        %v620 = vrot.slane %v619, 4
        %v621 = vmax.f32 %v619, %v620
        %v622 = vrot.slane %v621, 2
        %v623 = vmax.f32 %v621, %v622
        %v624 = vrot.slane %v623, 1
        %v625 = vmax.f32 %v623, %v624
        %627 = vrot.lane.b32.xlu0 %v625, 18
        %v628 = vpop.permute.xlu0 %627
        %630 = vst.msk [vmem:[#allocation2 + $0x9] sm:$0x1] %vm334, %v628
        %v631 = vsel %vm618, %v611, 0.0
        %v632 = vrot.slane %v631, 4
        %v633 = vadd.f32 %v631, %v632
        %v634 = vrot.slane %v633, 2
        %v635 = vadd.f32 %v633, %v634
        %v636 = vrot.slane %v635, 1
        %v637 = vadd.f32 %v635, %v636
        %v638 = vmul.f32 %v637, 0.125
        %640 = vrot.lane.b32.xlu0 %v638, 18
        %v641 = vpop.permute.xlu0 %640
        %643 = vst.msk [vmem:[%s348 + $0x9] sm:$0x1] %vm334, %v641
        %644 = vmax.xlane.f32.xlu0 %v619
        %v645 = vpop.xlane.xlu0 %644
        %vm646 = vcmask 80968
        %647 = vst.msk [vmem:[#allocation4 + $0x2] sm:$0xff] %vm646, %v645
        %v648 = vsel %vm322, %v614, 0.0
        %649 = vadd.xlane.f32.xlu0 %v648
        %v650 = vpop.xlane.xlu0 %649
        %v651 = vmul.f32 %v650, 0.0625
        %652 = vst.msk [vmem:[%s357 + $0x2] sm:$0xff] %vm646, %v651
        %v653 = vld [vmem:[%s124 + $0x8] sm:$0xff]
        %v654 = vmax.f32 %v616, %v653
        %v655 = vadd.f32 %v617, %v653
        %v656 = vsel %vm322, %v653, -inf
        %v657 = vrot.slane %v656, 4
        %v658 = vmax.f32 %v656, %v657
        %v659 = vrot.slane %v658, 2
        %v660 = vmax.f32 %v658, %v659
        %v661 = vrot.slane %v660, 1
        %v662 = vmax.f32 %v660, %v661
        %664 = vrot.lane.b32.xlu0 %v662, 2
        %v665 = vpop.permute.xlu0 %664
        %667 = vst.msk [vmem:[#allocation2 + $0xa] sm:$0x1] %vm334, %v665
        %v668 = vsel %vm322, %v653, 0.0
        %v669 = vrot.slane %v668, 4
        %v670 = vadd.f32 %v668, %v669
        %v671 = vrot.slane %v670, 2
        %v672 = vadd.f32 %v670, %v671
        %v673 = vrot.slane %v672, 1
        %v674 = vadd.f32 %v672, %v673
        %v675 = vmul.f32 %v674, 0.125
        %677 = vrot.lane.b32.xlu0 %v675, 2
        %v678 = vpop.permute.xlu0 %677
        %680 = vst.msk [vmem:[%s348 + $0xa] sm:$0x1] %vm334, %v678
        %681 = vmax.xlane.f32.xlu0 %v656
        %v682 = vpop.xlane.xlu0 %681
        %vm683 = vcmask 89168
        %684 = vst.msk [vmem:[#allocation4 + $0x2] sm:$0xff] %vm683, %v682
        %685 = vadd.xlane.f32.xlu0 %v668
        %v686 = vpop.xlane.xlu0 %685
        %v687 = vmul.f32 %v686, 0.0625
        %688 = vst.msk [vmem:[%s357 + $0x2] sm:$0xff] %vm683, %v687
        %v689 = vld [vmem:[%s124 + $0x8] sm:$0xff]
        %691 = vrot.lane.b32.xlu0 %v689, 112
        %v692 = vpop.permute.xlu0 %691
        %v694 = vmax.f32 %v654, %v692
        %v695 = vadd.f32 %v655, %v692
        %v696 = vsel %vm366, %v689, -inf
        %v697 = vrot.slane %v696, 4
        %v698 = vmax.f32 %v696, %v697
        %v699 = vrot.slane %v698, 2
        %v700 = vmax.f32 %v698, %v699
        %v701 = vrot.slane %v700, 1
        %v702 = vmax.f32 %v700, %v701
        %704 = vrot.lane.b32.xlu0 %v702, 114
        %v705 = vpop.permute.xlu0 %704
        %707 = vst.msk [vmem:[#allocation2 + $0xb] sm:$0x1] %vm334, %v705
        %v708 = vsel %vm366, %v689, 0.0
        %v709 = vrot.slane %v708, 4
        %v710 = vadd.f32 %v708, %v709
        %v711 = vrot.slane %v710, 2
        %v712 = vadd.f32 %v710, %v711
        %v713 = vrot.slane %v712, 1
        %v714 = vadd.f32 %v712, %v713
        %v715 = vmul.f32 %v714, 0.125
        %717 = vrot.lane.b32.xlu0 %v715, 114
        %v718 = vpop.permute.xlu0 %717
        %720 = vst.msk [vmem:[%s348 + $0xb] sm:$0x1] %vm334, %v718
        %721 = vmax.xlane.f32.xlu0 %v696
        %v722 = vpop.xlane.xlu0 %721
        %vm723 = vcmask 97368
        %724 = vst.msk [vmem:[#allocation4 + $0x2] sm:$0xff] %vm723, %v722
        %v725 = vsel %vm322, %v692, 0.0
        %726 = vadd.xlane.f32.xlu0 %v725
        %v727 = vpop.xlane.xlu0 %726
        %v728 = vmul.f32 %v727, 0.0625
        %729 = vst.msk [vmem:[%s357 + $0x2] sm:$0xff] %vm723, %v728
        %v730 = vld [vmem:[%s124 + $0x8] sm:$0xff]
        %732 = vrot.lane.b32.xlu0 %v730, 96
        %v733 = vpop.permute.xlu0 %732
        %v735 = vmax.f32 %v694, %v733
        %v736 = vadd.f32 %v695, %v733
        %v737 = vsel %vm408, %v730, -inf
        %v738 = vrot.slane %v737, 4
        %v739 = vmax.f32 %v737, %v738
        %v740 = vrot.slane %v739, 2
        %v741 = vmax.f32 %v739, %v740
        %v742 = vrot.slane %v741, 1
        %v743 = vmax.f32 %v741, %v742
        %745 = vrot.lane.b32.xlu0 %v743, 98
        %v746 = vpop.permute.xlu0 %745
        %748 = vst.msk [vmem:[#allocation2 + $0xc] sm:$0x1] %vm334, %v746
        %v749 = vsel %vm408, %v730, 0.0
        %v750 = vrot.slane %v749, 4
        %v751 = vadd.f32 %v749, %v750
        %v752 = vrot.slane %v751, 2
        %v753 = vadd.f32 %v751, %v752
        %v754 = vrot.slane %v753, 1
        %v755 = vadd.f32 %v753, %v754
        %v756 = vmul.f32 %v755, 0.125
        %758 = vrot.lane.b32.xlu0 %v756, 98
        %v759 = vpop.permute.xlu0 %758
        %761 = vst.msk [vmem:[%s348 + $0xc] sm:$0x1] %vm334, %v759
        %762 = vmax.xlane.f32.xlu0 %v737
        %v763 = vpop.xlane.xlu0 %762
        %vm764 = vcmask 105568
        %765 = vst.msk [vmem:[#allocation4 + $0x2] sm:$0xff] %vm764, %v763
        %v766 = vsel %vm322, %v733, 0.0
        %767 = vadd.xlane.f32.xlu0 %v766
        %v768 = vpop.xlane.xlu0 %767
        %v769 = vmul.f32 %v768, 0.0625
        %770 = vst.msk [vmem:[%s357 + $0x2] sm:$0xff] %vm764, %v769
        %v771 = vld [vmem:[%s124 + $0x8] sm:$0xff]
        %773 = vrot.lane.b32.xlu0 %v771, 80
        %v774 = vpop.permute.xlu0 %773
        %v776 = vmax.f32 %v735, %v774
        %v777 = vadd.f32 %v736, %v774
        %v778 = vsel %vm450, %v771, -inf
        %v779 = vrot.slane %v778, 4
        %v780 = vmax.f32 %v778, %v779
        %v781 = vrot.slane %v780, 2
        %v782 = vmax.f32 %v780, %v781
        %v783 = vrot.slane %v782, 1
        %v784 = vmax.f32 %v782, %v783
        %786 = vrot.lane.b32.xlu0 %v784, 82
        %v787 = vpop.permute.xlu0 %786
        %789 = vst.msk [vmem:[#allocation2 + $0xd] sm:$0x1] %vm334, %v787
        %v790 = vsel %vm450, %v771, 0.0
        %v791 = vrot.slane %v790, 4
        %v792 = vadd.f32 %v790, %v791
        %v793 = vrot.slane %v792, 2
        %v794 = vadd.f32 %v792, %v793
        %v795 = vrot.slane %v794, 1
        %v796 = vadd.f32 %v794, %v795
        %v797 = vmul.f32 %v796, 0.125
        %799 = vrot.lane.b32.xlu0 %v797, 82
        %v800 = vpop.permute.xlu0 %799
        %802 = vst.msk [vmem:[%s348 + $0xd] sm:$0x1] %vm334, %v800
        %803 = vmax.xlane.f32.xlu0 %v778
        %v804 = vpop.xlane.xlu0 %803
        %vm805 = vcmask 113768
        %806 = vst.msk [vmem:[#allocation4 + $0x2] sm:$0xff] %vm805, %v804
        %v807 = vsel %vm322, %v774, 0.0
        %808 = vadd.xlane.f32.xlu0 %v807
        %v809 = vpop.xlane.xlu0 %808
        %v810 = vmul.f32 %v809, 0.0625
        %811 = vst.msk [vmem:[%s357 + $0x2] sm:$0xff] %vm805, %v810
        %v812 = vld [vmem:[%s124 + $0x8] sm:$0xff]
        %814 = vrot.lane.b32.xlu0 %v812, 64
        %v815 = vpop.permute.xlu0 %814
        %v817 = vmax.f32 %v776, %v815
        %v818 = vadd.f32 %v777, %v815
        %v819 = vsel %vm492, %v812, -inf
        %v820 = vrot.slane %v819, 4
        %v821 = vmax.f32 %v819, %v820
        %v822 = vrot.slane %v821, 2
        %v823 = vmax.f32 %v821, %v822
        %v824 = vrot.slane %v823, 1
        %v825 = vmax.f32 %v823, %v824
        %827 = vrot.lane.b32.xlu0 %v825, 66
        %v828 = vpop.permute.xlu0 %827
        %830 = vst.msk [vmem:[#allocation2 + $0xe] sm:$0x1] %vm334, %v828
        %v831 = vsel %vm492, %v812, 0.0
        %v832 = vrot.slane %v831, 4
        %v833 = vadd.f32 %v831, %v832
        %v834 = vrot.slane %v833, 2
        %v835 = vadd.f32 %v833, %v834
        %v836 = vrot.slane %v835, 1
        %v837 = vadd.f32 %v835, %v836
        %v838 = vmul.f32 %v837, 0.125
        %840 = vrot.lane.b32.xlu0 %v838, 66
        %v841 = vpop.permute.xlu0 %840
        %843 = vst.msk [vmem:[%s348 + $0xe] sm:$0x1] %vm334, %v841
        %844 = vmax.xlane.f32.xlu0 %v819
        %v845 = vpop.xlane.xlu0 %844
        %vm846 = vcmask 121968
        %847 = vst.msk [vmem:[#allocation4 + $0x2] sm:$0xff] %vm846, %v845
        %v848 = vsel %vm322, %v815, 0.0
        %849 = vadd.xlane.f32.xlu0 %v848
        %v850 = vpop.xlane.xlu0 %849
        %v851 = vmul.f32 %v850, 0.0625
        %852 = vst.msk [vmem:[%s357 + $0x2] sm:$0xff] %vm846, %v851
        %v853 = vld [vmem:[%s124 + $0x8] sm:$0xff]
        %855 = vrot.lane.b32.xlu0 %v853, 48
        %v856 = vpop.permute.xlu0 %855
        %v858 = vmax.f32 %v817, %v856
        %v859 = vadd.f32 %v818, %v856
        %v860 = vsel %vm534, %v853, -inf
        %v861 = vrot.slane %v860, 4
        %v862 = vmax.f32 %v860, %v861
        %v863 = vrot.slane %v862, 2
        %v864 = vmax.f32 %v862, %v863
        %v865 = vrot.slane %v864, 1
        %v866 = vmax.f32 %v864, %v865
        %868 = vrot.lane.b32.xlu0 %v866, 50
        %v869 = vpop.permute.xlu0 %868
        %871 = vst.msk [vmem:[#allocation2 + $0xf] sm:$0x1] %vm334, %v869
        %v872 = vsel %vm534, %v853, 0.0
        %v873 = vrot.slane %v872, 4
        %v874 = vadd.f32 %v872, %v873
        %v875 = vrot.slane %v874, 2
        %v876 = vadd.f32 %v874, %v875
        %v877 = vrot.slane %v876, 1
        %v878 = vadd.f32 %v876, %v877
        %v879 = vmul.f32 %v878, 0.125
        %881 = vrot.lane.b32.xlu0 %v879, 50
        %v882 = vpop.permute.xlu0 %881
        %884 = vst.msk [vmem:[%s348 + $0xf] sm:$0x1] %vm334, %v882
        %885 = vmax.xlane.f32.xlu0 %v860
        %v886 = vpop.xlane.xlu0 %885
        %vm887 = vcmask 130168
        %888 = vst.msk [vmem:[#allocation4 + $0x2] sm:$0xff] %vm887, %v886
        %v889 = vsel %vm322, %v856, 0.0
        %890 = vadd.xlane.f32.xlu0 %v889
        %v891 = vpop.xlane.xlu0 %890
        %v892 = vmul.f32 %v891, 0.0625
        %893 = vst.msk [vmem:[%s357 + $0x2] sm:$0xff] %vm887, %v892
        %v894 = vld [vmem:[%s124 + $0x8] sm:$0xff]
        %896 = vrot.lane.b32.xlu0 %v894, 32
        %v897 = vpop.permute.xlu0 %896
        %v899 = vmax.f32 %v858, %v897
        %v900 = vadd.f32 %v859, %v897
        %v901 = vsel %vm576, %v894, -inf
        %v902 = vrot.slane %v901, 4
        %v903 = vmax.f32 %v901, %v902
        %v904 = vrot.slane %v903, 2
        %v905 = vmax.f32 %v903, %v904
        %v906 = vrot.slane %v905, 1
        %v907 = vmax.f32 %v905, %v906
        %909 = vrot.lane.b32.xlu0 %v907, 34
        %v910 = vpop.permute.xlu0 %909
        %912 = vst.msk [vmem:[#allocation2 + $0x10] sm:$0x1] %vm334, %v910
        %v913 = vsel %vm576, %v894, 0.0
        %v914 = vrot.slane %v913, 4
        %v915 = vadd.f32 %v913, %v914
        %v916 = vrot.slane %v915, 2
        %v917 = vadd.f32 %v915, %v916
        %v918 = vrot.slane %v917, 1
        %v919 = vadd.f32 %v917, %v918
        %v920 = vmul.f32 %v919, 0.125
        %922 = vrot.lane.b32.xlu0 %v920, 34
        %v923 = vpop.permute.xlu0 %922
        %925 = vst.msk [vmem:[%s348 + $0x10] sm:$0x1] %vm334, %v923
        %926 = vmax.xlane.f32.xlu0 %v901
        %v927 = vpop.xlane.xlu0 %926
        %vm928 = vcmask 138368
        %929 = vst.msk [vmem:[#allocation4 + $0x2] sm:$0xff] %vm928, %v927
        %v930 = vsel %vm322, %v897, 0.0
        %931 = vadd.xlane.f32.xlu0 %v930
        %v932 = vpop.xlane.xlu0 %931
        %v933 = vmul.f32 %v932, 0.0625
        %934 = vst.msk [vmem:[%s357 + $0x2] sm:$0xff] %vm928, %v933
        %v935 = vld [vmem:[%s124 + $0x8] sm:$0xff]
        %937 = vrot.lane.b32.xlu0 %v935, 16
        %v938 = vpop.permute.xlu0 %937
        %v940 = vmax.f32 %v899, %v938
        %v941 = vadd.f32 %v900, %v938
        %v942 = vsel %vm618, %v935, -inf
        %v943 = vrot.slane %v942, 4
        %v944 = vmax.f32 %v942, %v943
        %v945 = vrot.slane %v944, 2
        %v946 = vmax.f32 %v944, %v945
        %v947 = vrot.slane %v946, 1
        %v948 = vmax.f32 %v946, %v947
        %950 = vrot.lane.b32.xlu0 %v948, 18
        %v951 = vpop.permute.xlu0 %950
        %953 = vst.msk [vmem:[#allocation2 + $0x11] sm:$0x1] %vm334, %v951
        %v954 = vsel %vm618, %v935, 0.0
        %v955 = vrot.slane %v954, 4
        %v956 = vadd.f32 %v954, %v955
        %v957 = vrot.slane %v956, 2
        %v958 = vadd.f32 %v956, %v957
        %v959 = vrot.slane %v958, 1
        %v960 = vadd.f32 %v958, %v959
        %v961 = vmul.f32 %v960, 0.125
        %963 = vrot.lane.b32.xlu0 %v961, 18
        %v964 = vpop.permute.xlu0 %963
        %966 = vst.msk [vmem:[%s348 + $0x11] sm:$0x1] %vm334, %v964
        %967 = vmax.xlane.f32.xlu0 %v942
        %v968 = vpop.xlane.xlu0 %967
        %vm969 = vcmask 146568
        %970 = vst.msk [vmem:[#allocation4 + $0x2] sm:$0xff] %vm969, %v968
        %v971 = vsel %vm322, %v938, 0.0
        %972 = vadd.xlane.f32.xlu0 %v971
        %v973 = vpop.xlane.xlu0 %972
        %v974 = vmul.f32 %v973, 0.0625
        %975 = vst.msk [vmem:[%s357 + $0x2] sm:$0xff] %vm969, %v974
        %977 = vrot.lane.b32.xlu0 %v940, 2
        %v978 = vpop.permute.xlu0 %977
        %vm980 = vcmask 146448
        %981 = vst.msk [vmem:[#allocation3 + $0x2] sm:$0xff] %vm980, %v978
        %v982 = vmul.f32 %v941, 0.0625
        %984 = vrot.lane.b32.xlu0 %v982, 2
        %v985 = vpop.permute.xlu0 %984
        %s987 = scalar_lea.vmem [#allocation3], 16
        %988 = vst.msk [vmem:[%s987 + $0x2] sm:$0xff] %vm980, %v985
        %v989 = vsel %vm322, %v940, -inf
        %990 = vmax.xlane.f32.xlu0 %v989
        %v991 = vpop.xlane.xlu0 %990
        %v992 = vsel %vm322, %v941, 0.0
        %993 = vadd.xlane.f32.xlu0 %v992
        %v994 = vpop.xlane.xlu0 %993
        %v995 = vmul.f32 %v994, 0.00390625
        %v996 = vld [vmem:[#allocation2] sm:$0xff]
        %v997 = vld [vmem:[#allocation2 + $0x8] sm:$0xff]
        %v998 = vstv %s164
        %v999 = vmul.f32 %v998, %v996
        %v1000 = vmul.f32 %v998, %v997
        %v1001 = vadd.f32 %v999, 0.0
        %v1002 = vadd.f32 %v1000, 0.0
        %v1003 = vstv %s165
        %v1004 = vmul.f32 %v1003, %v996
        %v1005 = vmul.f32 %v1003, %v997
        %1008 = vrot.lane.b32.xlu0 %v1004, 127
        %v1009 = vpop.permute.xlu0 %1008
        %1010 = vrot.lane.b32.xlu0 %v1005, 127
        %v1011 = vpop.permute.xlu0 %1010
        %v1014 = vadd.f32 %v1001, %v1009
        %v1015 = vadd.f32 %v1002, %v1011
        %v1016 = vstv %s166
        %v1017 = vmul.f32 %v1016, %v996
        %v1018 = vmul.f32 %v1016, %v997
        %1021 = vrot.lane.b32.xlu0 %v1017, 126
        %v1022 = vpop.permute.xlu0 %1021
        %1023 = vrot.lane.b32.xlu0 %v1018, 126
        %v1024 = vpop.permute.xlu0 %1023
        %v1027 = vadd.f32 %v1014, %v1022
        %v1028 = vadd.f32 %v1015, %v1024
        %v1029 = vstv %s167
        %v1030 = vmul.f32 %v1029, %v996
        %v1031 = vmul.f32 %v1029, %v997
        %1034 = vrot.lane.b32.xlu0 %v1030, 125
        %v1035 = vpop.permute.xlu0 %1034
        %1036 = vrot.lane.b32.xlu0 %v1031, 125
        %v1037 = vpop.permute.xlu0 %1036
        %v1040 = vadd.f32 %v1027, %v1035
        %v1041 = vadd.f32 %v1028, %v1037
        %v1042 = vstv %s168
        %v1043 = vmul.f32 %v1042, %v996
        %v1044 = vmul.f32 %v1042, %v997
        %1047 = vrot.lane.b32.xlu0 %v1043, 124
        %v1048 = vpop.permute.xlu0 %1047
        %1049 = vrot.lane.b32.xlu0 %v1044, 124
        %v1050 = vpop.permute.xlu0 %1049
        %v1053 = vadd.f32 %v1040, %v1048
        %v1054 = vadd.f32 %v1041, %v1050
        %v1055 = vld [vmem:[#allocation2 + $0x1] sm:$0xff]
        %v1056 = vld [vmem:[#allocation2 + $0x9] sm:$0xff]
        %v1057 = vstv %s169
        %v1058 = vmul.f32 %v1057, %v1055
        %v1059 = vmul.f32 %v1057, %v1056
        %v1060 = vadd.f32 %v1053, %v1058
        %v1061 = vadd.f32 %v1054, %v1059
        %v1062 = vstv %s170
        %v1063 = vmul.f32 %v1062, %v1055
        %v1064 = vmul.f32 %v1062, %v1056
        %1067 = vrot.lane.b32.xlu0 %v1063, 127
        %v1068 = vpop.permute.xlu0 %1067
        %1069 = vrot.lane.b32.xlu0 %v1064, 127
        %v1070 = vpop.permute.xlu0 %1069
        %v1073 = vadd.f32 %v1060, %v1068
        %v1074 = vadd.f32 %v1061, %v1070
        %v1075 = vstv %s171
        %v1076 = vmul.f32 %v1075, %v1055
        %v1077 = vmul.f32 %v1075, %v1056
        %1080 = vrot.lane.b32.xlu0 %v1076, 126
        %v1081 = vpop.permute.xlu0 %1080
        %1082 = vrot.lane.b32.xlu0 %v1077, 126
        %v1083 = vpop.permute.xlu0 %1082
        %v1086 = vadd.f32 %v1073, %v1081
        %v1087 = vadd.f32 %v1074, %v1083
        %v1088 = vstv %s172
        %v1089 = vmul.f32 %v1088, %v1055
        %v1090 = vmul.f32 %v1088, %v1056
        %1093 = vrot.lane.b32.xlu0 %v1089, 125
        %v1094 = vpop.permute.xlu0 %1093
        %1095 = vrot.lane.b32.xlu0 %v1090, 125
        %v1096 = vpop.permute.xlu0 %1095
        %v1099 = vadd.f32 %v1086, %v1094
        %v1100 = vadd.f32 %v1087, %v1096
        %v1101 = vstv %s173
        %v1102 = vmul.f32 %v1101, %v1055
        %v1103 = vmul.f32 %v1101, %v1056
        %1106 = vrot.lane.b32.xlu0 %v1102, 124
        %v1107 = vpop.permute.xlu0 %1106
        %1108 = vrot.lane.b32.xlu0 %v1103, 124
        %v1109 = vpop.permute.xlu0 %1108
        %v1112 = vadd.f32 %v1099, %v1107
        %v1113 = vadd.f32 %v1100, %v1109
        %v1114 = vld [vmem:[#allocation2 + $0x2] sm:$0xff]
        %v1115 = vld [vmem:[#allocation2 + $0xa] sm:$0xff]
        %v1116 = vstv %s174
        %v1117 = vmul.f32 %v1116, %v1114
        %v1118 = vmul.f32 %v1116, %v1115
        %v1119 = vadd.f32 %v1112, %v1117
        %v1120 = vadd.f32 %v1113, %v1118
        %v1121 = vstv %s175
        %v1122 = vmul.f32 %v1121, %v1114
        %v1123 = vmul.f32 %v1121, %v1115
        %1126 = vrot.lane.b32.xlu0 %v1122, 127
        %v1127 = vpop.permute.xlu0 %1126
        %1128 = vrot.lane.b32.xlu0 %v1123, 127
        %v1129 = vpop.permute.xlu0 %1128
        %v1132 = vadd.f32 %v1119, %v1127
        %v1133 = vadd.f32 %v1120, %v1129
        %v1134 = vstv %s176
        %v1135 = vmul.f32 %v1134, %v1114
        %v1136 = vmul.f32 %v1134, %v1115
        %1139 = vrot.lane.b32.xlu0 %v1135, 126
        %v1140 = vpop.permute.xlu0 %1139
        %1141 = vrot.lane.b32.xlu0 %v1136, 126
        %v1142 = vpop.permute.xlu0 %1141
        %v1145 = vadd.f32 %v1132, %v1140
        %v1146 = vadd.f32 %v1133, %v1142
        %v1147 = vstv %s177
        %v1148 = vmul.f32 %v1147, %v1114
        %v1149 = vmul.f32 %v1147, %v1115
        %1152 = vrot.lane.b32.xlu0 %v1148, 125
        %v1153 = vpop.permute.xlu0 %1152
        %1154 = vrot.lane.b32.xlu0 %v1149, 125
        %v1155 = vpop.permute.xlu0 %1154
        %v1158 = vadd.f32 %v1145, %v1153
        %v1159 = vadd.f32 %v1146, %v1155
        %v1160 = vstv %s178
        %v1161 = vmul.f32 %v1160, %v1114
        %v1162 = vmul.f32 %v1160, %v1115
        %1165 = vrot.lane.b32.xlu0 %v1161, 124
        %v1166 = vpop.permute.xlu0 %1165
        %1167 = vrot.lane.b32.xlu0 %v1162, 124
        %v1168 = vpop.permute.xlu0 %1167
        %v1171 = vadd.f32 %v1158, %v1166
        %v1172 = vadd.f32 %v1159, %v1168
        %v1173 = vld [vmem:[#allocation2 + $0x3] sm:$0xff]
        %v1174 = vld [vmem:[#allocation2 + $0xb] sm:$0xff]
        %v1175 = vstv %s179
        %v1176 = vmul.f32 %v1175, %v1173
        %v1177 = vmul.f32 %v1175, %v1174
        %v1178 = vadd.f32 %v1171, %v1176
        %v1179 = vadd.f32 %v1172, %v1177
        %v1180 = vstv %s180
        %v1181 = vmul.f32 %v1180, %v1173
        %v1182 = vmul.f32 %v1180, %v1174
        %1185 = vrot.lane.b32.xlu0 %v1181, 127
        %v1186 = vpop.permute.xlu0 %1185
        %1187 = vrot.lane.b32.xlu0 %v1182, 127
        %v1188 = vpop.permute.xlu0 %1187
        %v1191 = vadd.f32 %v1178, %v1186
        %v1192 = vadd.f32 %v1179, %v1188
        %v1193 = vstv %s181
        %v1194 = vmul.f32 %v1193, %v1173
        %v1195 = vmul.f32 %v1193, %v1174
        %1198 = vrot.lane.b32.xlu0 %v1194, 126
        %v1199 = vpop.permute.xlu0 %1198
        %1200 = vrot.lane.b32.xlu0 %v1195, 126
        %v1201 = vpop.permute.xlu0 %1200
        %v1204 = vadd.f32 %v1191, %v1199
        %v1205 = vadd.f32 %v1192, %v1201
        %v1206 = vstv %s182
        %v1207 = vmul.f32 %v1206, %v1173
        %v1208 = vmul.f32 %v1206, %v1174
        %1211 = vrot.lane.b32.xlu0 %v1207, 125
        %v1212 = vpop.permute.xlu0 %1211
        %1213 = vrot.lane.b32.xlu0 %v1208, 125
        %v1214 = vpop.permute.xlu0 %1213
        %v1217 = vadd.f32 %v1204, %v1212
        %v1218 = vadd.f32 %v1205, %v1214
        %v1219 = vstv %s183
        %v1220 = vmul.f32 %v1219, %v1173
        %v1221 = vmul.f32 %v1219, %v1174
        %1224 = vrot.lane.b32.xlu0 %v1220, 124
        %v1225 = vpop.permute.xlu0 %1224
        %1226 = vrot.lane.b32.xlu0 %v1221, 124
        %v1227 = vpop.permute.xlu0 %1226
        %v1230 = vadd.f32 %v1217, %v1225
        %v1231 = vadd.f32 %v1218, %v1227
        %v1232 = vld [vmem:[#allocation2 + $0x4] sm:$0xff]
        %v1233 = vld [vmem:[#allocation2 + $0xc] sm:$0xff]
        %v1234 = vstv %s184
        %v1235 = vmul.f32 %v1234, %v1232
        %v1236 = vmul.f32 %v1234, %v1233
        %v1237 = vadd.f32 %v1230, %v1235
        %v1238 = vadd.f32 %v1231, %v1236
        %v1239 = vstv %s185
        %v1240 = vmul.f32 %v1239, %v1232
        %v1241 = vmul.f32 %v1239, %v1233
        %1244 = vrot.lane.b32.xlu0 %v1240, 127
        %v1245 = vpop.permute.xlu0 %1244
        %1246 = vrot.lane.b32.xlu0 %v1241, 127
        %v1247 = vpop.permute.xlu0 %1246
        %v1250 = vadd.f32 %v1237, %v1245
        %v1251 = vadd.f32 %v1238, %v1247
        %v1252 = vstv %s186
        %v1253 = vmul.f32 %v1252, %v1232
        %v1254 = vmul.f32 %v1252, %v1233
        %1257 = vrot.lane.b32.xlu0 %v1253, 126
        %v1258 = vpop.permute.xlu0 %1257
        %1259 = vrot.lane.b32.xlu0 %v1254, 126
        %v1260 = vpop.permute.xlu0 %1259
        %v1263 = vadd.f32 %v1250, %v1258
        %v1264 = vadd.f32 %v1251, %v1260
        %v1265 = vstv %s187
        %v1266 = vmul.f32 %v1265, %v1232
        %v1267 = vmul.f32 %v1265, %v1233
        %1270 = vrot.lane.b32.xlu0 %v1266, 125
        %v1271 = vpop.permute.xlu0 %1270
        %1272 = vrot.lane.b32.xlu0 %v1267, 125
        %v1273 = vpop.permute.xlu0 %1272
        %v1276 = vadd.f32 %v1263, %v1271
        %v1277 = vadd.f32 %v1264, %v1273
        %v1278 = vstv %s188
        %v1279 = vmul.f32 %v1278, %v1232
        %v1280 = vmul.f32 %v1278, %v1233
        %1283 = vrot.lane.b32.xlu0 %v1279, 124
        %v1284 = vpop.permute.xlu0 %1283
        %1285 = vrot.lane.b32.xlu0 %v1280, 124
        %v1286 = vpop.permute.xlu0 %1285
        %v1289 = vadd.f32 %v1276, %v1284
        %v1290 = vadd.f32 %v1277, %v1286
        %v1291 = vld [vmem:[%s348] sm:$0xff]
        %v1292 = vld [vmem:[%s348 + $0x8] sm:$0xff]
        %v1293 = vstv %s189
        %v1294 = vmul.f32 %v1293, %v1291
        %v1295 = vmul.f32 %v1293, %v1292
        %v1296 = vadd.f32 %v1289, %v1294
        %v1297 = vadd.f32 %v1290, %v1295
        %v1298 = vstv %s190
        %v1299 = vmul.f32 %v1298, %v1291
        %v1300 = vmul.f32 %v1298, %v1292
        %1303 = vrot.lane.b32.xlu0 %v1299, 127
        %v1304 = vpop.permute.xlu0 %1303
        %1305 = vrot.lane.b32.xlu0 %v1300, 127
        %v1306 = vpop.permute.xlu0 %1305
        %v1309 = vadd.f32 %v1296, %v1304
        %v1310 = vadd.f32 %v1297, %v1306
        %v1311 = vstv %s191
        %v1312 = vmul.f32 %v1311, %v1291
        %v1313 = vmul.f32 %v1311, %v1292
        %1316 = vrot.lane.b32.xlu0 %v1312, 126
        %v1317 = vpop.permute.xlu0 %1316
        %1318 = vrot.lane.b32.xlu0 %v1313, 126
        %v1319 = vpop.permute.xlu0 %1318
        %v1322 = vadd.f32 %v1309, %v1317
        %v1323 = vadd.f32 %v1310, %v1319
        %v1324 = vstv %s192
        %v1325 = vmul.f32 %v1324, %v1291
        %v1326 = vmul.f32 %v1324, %v1292
        %1329 = vrot.lane.b32.xlu0 %v1325, 125
        %v1330 = vpop.permute.xlu0 %1329
        %1331 = vrot.lane.b32.xlu0 %v1326, 125
        %v1332 = vpop.permute.xlu0 %1331
        %v1335 = vadd.f32 %v1322, %v1330
        %v1336 = vadd.f32 %v1323, %v1332
        %v1337 = vstv %s193
        %v1338 = vmul.f32 %v1337, %v1291
        %v1339 = vmul.f32 %v1337, %v1292
        %1342 = vrot.lane.b32.xlu0 %v1338, 124
        %v1343 = vpop.permute.xlu0 %1342
        %1344 = vrot.lane.b32.xlu0 %v1339, 124
        %v1345 = vpop.permute.xlu0 %1344
        %v1348 = vadd.f32 %v1335, %v1343
        %v1349 = vadd.f32 %v1336, %v1345
        %v1350 = vld [vmem:[%s348 + $0x1] sm:$0xff]
        %v1351 = vld [vmem:[%s348 + $0x9] sm:$0xff]
        %v1352 = vstv %s194
        %v1353 = vmul.f32 %v1352, %v1350
        %v1354 = vmul.f32 %v1352, %v1351
        %v1355 = vadd.f32 %v1348, %v1353
        %v1356 = vadd.f32 %v1349, %v1354
        %v1357 = vstv %s195
        %v1358 = vmul.f32 %v1357, %v1350
        %v1359 = vmul.f32 %v1357, %v1351
        %1362 = vrot.lane.b32.xlu0 %v1358, 127
        %v1363 = vpop.permute.xlu0 %1362
        %1364 = vrot.lane.b32.xlu0 %v1359, 127
        %v1365 = vpop.permute.xlu0 %1364
        %v1368 = vadd.f32 %v1355, %v1363
        %v1369 = vadd.f32 %v1356, %v1365
        %v1370 = vstv %s196
        %v1371 = vmul.f32 %v1370, %v1350
        %v1372 = vmul.f32 %v1370, %v1351
        %1375 = vrot.lane.b32.xlu0 %v1371, 126
        %v1376 = vpop.permute.xlu0 %1375
        %1377 = vrot.lane.b32.xlu0 %v1372, 126
        %v1378 = vpop.permute.xlu0 %1377
        %v1381 = vadd.f32 %v1368, %v1376
        %v1382 = vadd.f32 %v1369, %v1378
        %v1383 = vstv %s197
        %v1384 = vmul.f32 %v1383, %v1350
        %v1385 = vmul.f32 %v1383, %v1351
        %1388 = vrot.lane.b32.xlu0 %v1384, 125
        %v1389 = vpop.permute.xlu0 %1388
        %1390 = vrot.lane.b32.xlu0 %v1385, 125
        %v1391 = vpop.permute.xlu0 %1390
        %v1394 = vadd.f32 %v1381, %v1389
        %v1395 = vadd.f32 %v1382, %v1391
        %v1396 = vstv %s198
        %v1397 = vmul.f32 %v1396, %v1350
        %v1398 = vmul.f32 %v1396, %v1351
        %1401 = vrot.lane.b32.xlu0 %v1397, 124
        %v1402 = vpop.permute.xlu0 %1401
        %1403 = vrot.lane.b32.xlu0 %v1398, 124
        %v1404 = vpop.permute.xlu0 %1403
        %v1407 = vadd.f32 %v1394, %v1402
        %v1408 = vadd.f32 %v1395, %v1404
        %v1409 = vld [vmem:[%s348 + $0x2] sm:$0xff]
        %v1410 = vld [vmem:[%s348 + $0xa] sm:$0xff]
        %v1411 = vstv %s199
        %v1412 = vmul.f32 %v1411, %v1409
        %v1413 = vmul.f32 %v1411, %v1410
        %v1414 = vadd.f32 %v1407, %v1412
        %v1415 = vadd.f32 %v1408, %v1413
        %v1416 = vstv %s200
        %v1417 = vmul.f32 %v1416, %v1409
        %v1418 = vmul.f32 %v1416, %v1410
        %1421 = vrot.lane.b32.xlu0 %v1417, 127
        %v1422 = vpop.permute.xlu0 %1421
        %1423 = vrot.lane.b32.xlu0 %v1418, 127
        %v1424 = vpop.permute.xlu0 %1423
        %v1427 = vadd.f32 %v1414, %v1422
        %v1428 = vadd.f32 %v1415, %v1424
        %v1429 = vstv %s201
        %v1430 = vmul.f32 %v1429, %v1409
        %v1431 = vmul.f32 %v1429, %v1410
        %1434 = vrot.lane.b32.xlu0 %v1430, 126
        %v1435 = vpop.permute.xlu0 %1434
        %1436 = vrot.lane.b32.xlu0 %v1431, 126
        %v1437 = vpop.permute.xlu0 %1436
        %v1440 = vadd.f32 %v1427, %v1435
        %v1441 = vadd.f32 %v1428, %v1437
        %v1442 = vstv %s202
        %v1443 = vmul.f32 %v1442, %v1409
        %v1444 = vmul.f32 %v1442, %v1410
        %1447 = vrot.lane.b32.xlu0 %v1443, 125
        %v1448 = vpop.permute.xlu0 %1447
        %1449 = vrot.lane.b32.xlu0 %v1444, 125
        %v1450 = vpop.permute.xlu0 %1449
        %v1453 = vadd.f32 %v1440, %v1448
        %v1454 = vadd.f32 %v1441, %v1450
        %v1455 = vstv %s203
        %v1456 = vmul.f32 %v1455, %v1409
        %v1457 = vmul.f32 %v1455, %v1410
        %1460 = vrot.lane.b32.xlu0 %v1456, 124
        %v1461 = vpop.permute.xlu0 %1460
        %1462 = vrot.lane.b32.xlu0 %v1457, 124
        %v1463 = vpop.permute.xlu0 %1462
        %v1466 = vadd.f32 %v1453, %v1461
        %v1467 = vadd.f32 %v1454, %v1463
        %v1468 = vld [vmem:[%s348 + $0x3] sm:$0xff]
        %v1469 = vld [vmem:[%s348 + $0xb] sm:$0xff]
        %v1470 = vstv %s204
        %v1471 = vmul.f32 %v1470, %v1468
        %v1472 = vmul.f32 %v1470, %v1469
        %v1473 = vadd.f32 %v1466, %v1471
        %v1474 = vadd.f32 %v1467, %v1472
        %v1475 = vstv %s205
        %v1476 = vmul.f32 %v1475, %v1468
        %v1477 = vmul.f32 %v1475, %v1469
        %1480 = vrot.lane.b32.xlu0 %v1476, 127
        %v1481 = vpop.permute.xlu0 %1480
        %1482 = vrot.lane.b32.xlu0 %v1477, 127
        %v1483 = vpop.permute.xlu0 %1482
        %v1486 = vadd.f32 %v1473, %v1481
        %v1487 = vadd.f32 %v1474, %v1483
        %v1488 = vstv %s206
        %v1489 = vmul.f32 %v1488, %v1468
        %v1490 = vmul.f32 %v1488, %v1469
        %1493 = vrot.lane.b32.xlu0 %v1489, 126
        %v1494 = vpop.permute.xlu0 %1493
        %1495 = vrot.lane.b32.xlu0 %v1490, 126
        %v1496 = vpop.permute.xlu0 %1495
        %v1499 = vadd.f32 %v1486, %v1494
        %v1500 = vadd.f32 %v1487, %v1496
        %v1501 = vstv %s207
        %v1502 = vmul.f32 %v1501, %v1468
        %v1503 = vmul.f32 %v1501, %v1469
        %1506 = vrot.lane.b32.xlu0 %v1502, 125
        %v1507 = vpop.permute.xlu0 %1506
        %1508 = vrot.lane.b32.xlu0 %v1503, 125
        %v1509 = vpop.permute.xlu0 %1508
        %v1512 = vadd.f32 %v1499, %v1507
        %v1513 = vadd.f32 %v1500, %v1509
        %v1514 = vstv %s208
        %v1515 = vmul.f32 %v1514, %v1468
        %v1516 = vmul.f32 %v1514, %v1469
        %1519 = vrot.lane.b32.xlu0 %v1515, 124
        %v1520 = vpop.permute.xlu0 %1519
        %1521 = vrot.lane.b32.xlu0 %v1516, 124
        %v1522 = vpop.permute.xlu0 %1521
        %v1525 = vadd.f32 %v1512, %v1520
        %v1526 = vadd.f32 %v1513, %v1522
        %v1527 = vld [vmem:[%s348 + $0x4] sm:$0xff]
        %v1528 = vld [vmem:[%s348 + $0xc] sm:$0xff]
        %v1529 = vstv %s209
        %v1530 = vmul.f32 %v1529, %v1527
        %v1531 = vmul.f32 %v1529, %v1528
        %v1532 = vadd.f32 %v1525, %v1530
        %v1533 = vadd.f32 %v1526, %v1531
        %v1534 = vstv %s210
        %v1535 = vmul.f32 %v1534, %v1527
        %v1536 = vmul.f32 %v1534, %v1528
        %1539 = vrot.lane.b32.xlu0 %v1535, 127
        %v1540 = vpop.permute.xlu0 %1539
        %1541 = vrot.lane.b32.xlu0 %v1536, 127
        %v1542 = vpop.permute.xlu0 %1541
        %v1545 = vadd.f32 %v1532, %v1540
        %v1546 = vadd.f32 %v1533, %v1542
        %v1547 = vstv %s211
        %v1548 = vmul.f32 %v1547, %v1527
        %v1549 = vmul.f32 %v1547, %v1528
        %1552 = vrot.lane.b32.xlu0 %v1548, 126
        %v1553 = vpop.permute.xlu0 %1552
        %1554 = vrot.lane.b32.xlu0 %v1549, 126
        %v1555 = vpop.permute.xlu0 %1554
        %v1558 = vadd.f32 %v1545, %v1553
        %v1559 = vadd.f32 %v1546, %v1555
        %v1560 = vstv %s212
        %v1561 = vmul.f32 %v1560, %v1527
        %v1562 = vmul.f32 %v1560, %v1528
        %1565 = vrot.lane.b32.xlu0 %v1561, 125
        %v1566 = vpop.permute.xlu0 %1565
        %1567 = vrot.lane.b32.xlu0 %v1562, 125
        %v1568 = vpop.permute.xlu0 %1567
        %v1571 = vadd.f32 %v1558, %v1566
        %v1572 = vadd.f32 %v1559, %v1568
        %v1573 = vstv %s213
        %v1574 = vmul.f32 %v1573, %v1527
        %v1575 = vmul.f32 %v1573, %v1528
        %1578 = vrot.lane.b32.xlu0 %v1574, 124
        %v1579 = vpop.permute.xlu0 %1578
        %1580 = vrot.lane.b32.xlu0 %v1575, 124
        %v1581 = vpop.permute.xlu0 %1580
        %v1584 = vadd.f32 %v1571, %v1579
        %v1585 = vadd.f32 %v1572, %v1581
        %v1586 = vxor.u32 %v1584, 2147483648
        %v1587 = vxor.u32 %v1585, 2147483648
        %v1588 = vmul.f32 %v1586, 1.442695
        %v1589 = vpow.pop %v1588
        %v1590 = vmul.f32 %v1587, 1.442695
        %v1591 = vpow.pop %v1590
        %v1592 = vadd.f32 %v1589, 1.0
        %v1593 = vadd.f32 %v1591, 1.0
        %v1594 = vrcp.pop %v1592
        %v1595 = vmul.f32 %v1592, %v1594
        %v1596 = vsub.f32 1.0, %v1595
        %v1597 = vmul.f32 %v1594, %v1596
        %v1598 = vadd.f32 %v1594, %v1597
        %vm1599 = vweird.f32 %v1592
        %vm1600 = vweird.f32 %v1594
        %vm1601 = vmor %vm1599, %vm1600
        %v1602 = vsel %vm1601, %v1594, %v1598
        %v1603 = vand.u32 2147483647, %v1592
        %vm1604 = vcmp.eq.f32.partialorder %v1603, 8.507059e+37
        %v1605 = vand.u32 %v1592, 2147483648
        %v1606 = vor.u32 1.1754944e-38, %v1605
        %v1607 = vsel %vm1604, %v1606, %v1602
        %v1608 = vmul.f32 1.0, %v1607
        %v1609 = vrcp.pop %v1593
        %v1610 = vmul.f32 %v1593, %v1609
        %v1611 = vsub.f32 1.0, %v1610
        %v1612 = vmul.f32 %v1609, %v1611
        %v1613 = vadd.f32 %v1609, %v1612
        %vm1614 = vweird.f32 %v1593
        %vm1615 = vweird.f32 %v1609
        %vm1616 = vmor %vm1614, %vm1615
        %v1617 = vsel %vm1616, %v1609, %v1613
        %v1618 = vand.u32 2147483647, %v1593
        %vm1619 = vcmp.eq.f32.partialorder %v1618, 8.507059e+37
        %v1620 = vand.u32 %v1593, 2147483648
        %v1621 = vor.u32 1.1754944e-38, %v1620
        %v1622 = vsel %vm1619, %v1621, %v1617
        %v1623 = vmul.f32 1.0, %v1622
        %v1624 = vld [vmem:[#allocation3] sm:$0xff]
        %v1625 = vstv %s214
        %v1626 = vmul.f32 %v1625, %v1624
        %v1627 = vadd.f32 %v1626, 0.0
        %v1628 = vstv %s215
        %v1629 = vmul.f32 %v1628, %v1624
        %1631 = vrot.lane.b32.xlu0 %v1629, 127
        %v1632 = vpop.permute.xlu0 %1631
        %v1634 = vadd.f32 %v1627, %v1632
        %v1635 = vstv %s216
        %v1636 = vmul.f32 %v1635, %v1624
        %1638 = vrot.lane.b32.xlu0 %v1636, 126
        %v1639 = vpop.permute.xlu0 %1638
        %v1641 = vadd.f32 %v1634, %v1639
        %v1642 = vstv %s217
        %v1643 = vmul.f32 %v1642, %v1624
        %1645 = vrot.lane.b32.xlu0 %v1643, 125
        %v1646 = vpop.permute.xlu0 %1645
        %v1648 = vadd.f32 %v1641, %v1646
        %v1649 = vstv %s218
        %v1650 = vmul.f32 %v1649, %v1624
        %1652 = vrot.lane.b32.xlu0 %v1650, 124
        %v1653 = vpop.permute.xlu0 %1652
        %v1655 = vadd.f32 %v1648, %v1653
        %v1656 = vld [vmem:[#allocation3 + $0x1] sm:$0xff]
        %v1657 = vstv %s219
        %v1658 = vmul.f32 %v1657, %v1656
        %v1659 = vadd.f32 %v1655, %v1658
        %v1660 = vstv %s220
        %v1661 = vmul.f32 %v1660, %v1656
        %1663 = vrot.lane.b32.xlu0 %v1661, 127
        %v1664 = vpop.permute.xlu0 %1663
        %v1666 = vadd.f32 %v1659, %v1664
        %v1667 = vstv %s221
        %v1668 = vmul.f32 %v1667, %v1656
        %1670 = vrot.lane.b32.xlu0 %v1668, 126
        %v1671 = vpop.permute.xlu0 %1670
        %v1673 = vadd.f32 %v1666, %v1671
        %v1674 = vstv %s222
        %v1675 = vmul.f32 %v1674, %v1656
        %1677 = vrot.lane.b32.xlu0 %v1675, 125
        %v1678 = vpop.permute.xlu0 %1677
        %v1680 = vadd.f32 %v1673, %v1678
        %v1681 = vstv %s223
        %v1682 = vmul.f32 %v1681, %v1656
        %1684 = vrot.lane.b32.xlu0 %v1682, 124
        %v1685 = vpop.permute.xlu0 %1684
        %v1687 = vadd.f32 %v1680, %v1685
        %v1688 = vld [vmem:[#allocation3 + $0x2] sm:$0xff]
        %v1689 = vstv %s224
        %v1690 = vmul.f32 %v1689, %v1688
        %v1691 = vadd.f32 %v1687, %v1690
        %v1692 = vstv %s225
        %v1693 = vmul.f32 %v1692, %v1688
        %1695 = vrot.lane.b32.xlu0 %v1693, 127
        %v1696 = vpop.permute.xlu0 %1695
        %v1698 = vadd.f32 %v1691, %v1696
        %v1699 = vstv %s226
        %v1700 = vmul.f32 %v1699, %v1688
        %1702 = vrot.lane.b32.xlu0 %v1700, 126
        %v1703 = vpop.permute.xlu0 %1702
        %v1705 = vadd.f32 %v1698, %v1703
        %v1706 = vstv %s227
        %v1707 = vmul.f32 %v1706, %v1688
        %1709 = vrot.lane.b32.xlu0 %v1707, 125
        %v1710 = vpop.permute.xlu0 %1709
        %v1712 = vadd.f32 %v1705, %v1710
        %v1713 = vstv %s228
        %v1714 = vmul.f32 %v1713, %v1688
        %1716 = vrot.lane.b32.xlu0 %v1714, 124
        %v1717 = vpop.permute.xlu0 %1716
        %v1719 = vadd.f32 %v1712, %v1717
        %v1720 = vld [vmem:[#allocation3 + $0x3] sm:$0xff]
        %v1721 = vstv %s229
        %v1722 = vmul.f32 %v1721, %v1720
        %v1723 = vadd.f32 %v1719, %v1722
        %v1724 = vstv %s230
        %v1725 = vmul.f32 %v1724, %v1720
        %1727 = vrot.lane.b32.xlu0 %v1725, 127
        %v1728 = vpop.permute.xlu0 %1727
        %v1730 = vadd.f32 %v1723, %v1728
        %v1731 = vstv %s231
        %v1732 = vmul.f32 %v1731, %v1720
        %1734 = vrot.lane.b32.xlu0 %v1732, 126
        %v1735 = vpop.permute.xlu0 %1734
        %v1737 = vadd.f32 %v1730, %v1735
        %v1738 = vstv %s232
        %v1739 = vmul.f32 %v1738, %v1720
        %1741 = vrot.lane.b32.xlu0 %v1739, 125
        %v1742 = vpop.permute.xlu0 %1741
        %v1744 = vadd.f32 %v1737, %v1742
        %v1745 = vstv %s233
        %v1746 = vmul.f32 %v1745, %v1720
        %1748 = vrot.lane.b32.xlu0 %v1746, 124
        %v1749 = vpop.permute.xlu0 %1748
        %v1751 = vadd.f32 %v1744, %v1749
        %v1752 = vld [vmem:[#allocation3 + $0x4] sm:$0xff]
        %v1753 = vstv %s234
        %v1754 = vmul.f32 %v1753, %v1752
        %v1755 = vadd.f32 %v1751, %v1754
        %v1756 = vstv %s235
        %v1757 = vmul.f32 %v1756, %v1752
        %1759 = vrot.lane.b32.xlu0 %v1757, 127
        %v1760 = vpop.permute.xlu0 %1759
        %v1762 = vadd.f32 %v1755, %v1760
        %v1763 = vstv %s236
        %v1764 = vmul.f32 %v1763, %v1752
        %1766 = vrot.lane.b32.xlu0 %v1764, 126
        %v1767 = vpop.permute.xlu0 %1766
        %v1769 = vadd.f32 %v1762, %v1767
        %v1770 = vstv %s237
        %v1771 = vmul.f32 %v1770, %v1752
        %1773 = vrot.lane.b32.xlu0 %v1771, 125
        %v1774 = vpop.permute.xlu0 %1773
        %v1776 = vadd.f32 %v1769, %v1774
        %v1777 = vstv %s238
        %v1778 = vmul.f32 %v1777, %v1752
        %1780 = vrot.lane.b32.xlu0 %v1778, 124
        %v1781 = vpop.permute.xlu0 %1780
        %v1783 = vadd.f32 %v1776, %v1781
        %v1784 = vld [vmem:[%s987] sm:$0xff]
        %v1785 = vstv %s239
        %v1786 = vmul.f32 %v1785, %v1784
        %v1787 = vadd.f32 %v1783, %v1786
        %v1788 = vstv %s240
        %v1789 = vmul.f32 %v1788, %v1784
        %1791 = vrot.lane.b32.xlu0 %v1789, 127
        %v1792 = vpop.permute.xlu0 %1791
        %v1794 = vadd.f32 %v1787, %v1792
        %v1795 = vstv %s241
        %v1796 = vmul.f32 %v1795, %v1784
        %1798 = vrot.lane.b32.xlu0 %v1796, 126
        %v1799 = vpop.permute.xlu0 %1798
        %v1801 = vadd.f32 %v1794, %v1799
        %v1802 = vstv %s242
        %v1803 = vmul.f32 %v1802, %v1784
        %1805 = vrot.lane.b32.xlu0 %v1803, 125
        %v1806 = vpop.permute.xlu0 %1805
        %v1808 = vadd.f32 %v1801, %v1806
        %v1809 = vstv %s243
        %v1810 = vmul.f32 %v1809, %v1784
        %1812 = vrot.lane.b32.xlu0 %v1810, 124
        %v1813 = vpop.permute.xlu0 %1812
        %v1815 = vadd.f32 %v1808, %v1813
        %v1816 = vld [vmem:[%s987 + $0x1] sm:$0xff]
        %v1817 = vstv %s244
        %v1818 = vmul.f32 %v1817, %v1816
        %v1819 = vadd.f32 %v1815, %v1818
        %v1820 = vstv %s245
        %v1821 = vmul.f32 %v1820, %v1816
        %1823 = vrot.lane.b32.xlu0 %v1821, 127
        %v1824 = vpop.permute.xlu0 %1823
        %v1826 = vadd.f32 %v1819, %v1824
        %v1827 = vstv %s246
        %v1828 = vmul.f32 %v1827, %v1816
        %1830 = vrot.lane.b32.xlu0 %v1828, 126
        %v1831 = vpop.permute.xlu0 %1830
        %v1833 = vadd.f32 %v1826, %v1831
        %v1834 = vstv %s247
        %v1835 = vmul.f32 %v1834, %v1816
        %1837 = vrot.lane.b32.xlu0 %v1835, 125
        %v1838 = vpop.permute.xlu0 %1837
        %v1840 = vadd.f32 %v1833, %v1838
        %v1841 = vstv %s248
        %v1842 = vmul.f32 %v1841, %v1816
        %1844 = vrot.lane.b32.xlu0 %v1842, 124
        %v1845 = vpop.permute.xlu0 %1844
        %v1847 = vadd.f32 %v1840, %v1845
        %v1848 = vld [vmem:[%s987 + $0x2] sm:$0xff]
        %v1849 = vstv %s249
        %v1850 = vmul.f32 %v1849, %v1848
        %v1851 = vadd.f32 %v1847, %v1850
        %v1852 = vstv %s250
        %v1853 = vmul.f32 %v1852, %v1848
        %1855 = vrot.lane.b32.xlu0 %v1853, 127
        %v1856 = vpop.permute.xlu0 %1855
        %v1858 = vadd.f32 %v1851, %v1856
        %v1859 = vstv %s251
        %v1860 = vmul.f32 %v1859, %v1848
        %1862 = vrot.lane.b32.xlu0 %v1860, 126
        %v1863 = vpop.permute.xlu0 %1862
        %v1865 = vadd.f32 %v1858, %v1863
        %v1866 = vstv %s252
        %v1867 = vmul.f32 %v1866, %v1848
        %1869 = vrot.lane.b32.xlu0 %v1867, 125
        %v1870 = vpop.permute.xlu0 %1869
        %v1872 = vadd.f32 %v1865, %v1870
        %v1873 = vstv %s253
        %v1874 = vmul.f32 %v1873, %v1848
        %1876 = vrot.lane.b32.xlu0 %v1874, 124
        %v1877 = vpop.permute.xlu0 %1876
        %v1879 = vadd.f32 %v1872, %v1877
        %v1880 = vld [vmem:[%s987 + $0x3] sm:$0xff]
        %v1881 = vstv %s254
        %v1882 = vmul.f32 %v1881, %v1880
        %v1883 = vadd.f32 %v1879, %v1882
        %v1884 = vstv %s255
        %v1885 = vmul.f32 %v1884, %v1880
        %1887 = vrot.lane.b32.xlu0 %v1885, 127
        %v1888 = vpop.permute.xlu0 %1887
        %v1890 = vadd.f32 %v1883, %v1888
        %v1891 = vstv %s256
        %v1892 = vmul.f32 %v1891, %v1880
        %1894 = vrot.lane.b32.xlu0 %v1892, 126
        %v1895 = vpop.permute.xlu0 %1894
        %v1897 = vadd.f32 %v1890, %v1895
        %v1898 = vstv %s257
        %v1899 = vmul.f32 %v1898, %v1880
        %1901 = vrot.lane.b32.xlu0 %v1899, 125
        %v1902 = vpop.permute.xlu0 %1901
        %v1904 = vadd.f32 %v1897, %v1902
        %v1905 = vstv %s258
        %v1906 = vmul.f32 %v1905, %v1880
        %1908 = vrot.lane.b32.xlu0 %v1906, 124
        %v1909 = vpop.permute.xlu0 %1908
        %v1911 = vadd.f32 %v1904, %v1909
        %v1912 = vld [vmem:[%s987 + $0x4] sm:$0xff]
        %v1913 = vstv %s259
        %v1914 = vmul.f32 %v1913, %v1912
        %v1915 = vadd.f32 %v1911, %v1914
        %v1916 = vstv %s260
        %v1917 = vmul.f32 %v1916, %v1912
        %1919 = vrot.lane.b32.xlu0 %v1917, 127
        %v1920 = vpop.permute.xlu0 %1919
        %v1922 = vadd.f32 %v1915, %v1920
        %v1923 = vstv %s261
        %v1924 = vmul.f32 %v1923, %v1912
        %1926 = vrot.lane.b32.xlu0 %v1924, 126
        %v1927 = vpop.permute.xlu0 %1926
        %v1929 = vadd.f32 %v1922, %v1927
        %v1930 = vstv %s262
        %v1931 = vmul.f32 %v1930, %v1912
        %1933 = vrot.lane.b32.xlu0 %v1931, 125
        %v1934 = vpop.permute.xlu0 %1933
        %v1936 = vadd.f32 %v1929, %v1934
        %v1937 = vstv %s263
        %v1938 = vmul.f32 %v1937, %v1912
        %1940 = vrot.lane.b32.xlu0 %v1938, 124
        %v1941 = vpop.permute.xlu0 %1940
        %v1943 = vadd.f32 %v1936, %v1941
        %v1944 = vxor.u32 %v1943, 2147483648
        %v1945 = vmul.f32 %v1944, 1.442695
        %v1946 = vpow.pop %v1945
        %v1947 = vadd.f32 %v1946, 1.0
        %v1948 = vrcp.pop %v1947
        %v1949 = vmul.f32 %v1947, %v1948
        %v1950 = vsub.f32 1.0, %v1949
        %v1951 = vmul.f32 %v1948, %v1950
        %v1952 = vadd.f32 %v1948, %v1951
        %vm1953 = vweird.f32 %v1947
        %vm1954 = vweird.f32 %v1948
        %vm1955 = vmor %vm1953, %vm1954
        %v1956 = vsel %vm1955, %v1948, %v1952
        %v1957 = vand.u32 2147483647, %v1947
        %vm1958 = vcmp.eq.f32.partialorder %v1957, 8.507059e+37
        %v1959 = vand.u32 %v1947, 2147483648
        %v1960 = vor.u32 1.1754944e-38, %v1959
        %v1961 = vsel %vm1958, %v1960, %v1956
        %v1962 = vmul.f32 1.0, %v1961
        %v1963 = vld [vmem:[#allocation4] sm:$0xff]
        %v1964 = vstv %s264
        %v1965 = vmul.f32 %v1964, %v1963
        %v1966 = vadd.f32 %v1965, 0.0
        %v1967 = vstv %s269
        %v1968 = vmul.f32 %v1967, %v1963
        %1970 = vrot.lane.b32.xlu0 %v1968, 127
        %v1971 = vpop.permute.xlu0 %1970
        %v1973 = vadd.f32 %v1966, %v1971
        %v1974 = vstv %s274
        %v1975 = vmul.f32 %v1974, %v1963
        %1977 = vrot.lane.b32.xlu0 %v1975, 126
        %v1978 = vpop.permute.xlu0 %1977
        %v1980 = vadd.f32 %v1973, %v1978
        %v1981 = vstv %s279
        %v1982 = vmul.f32 %v1981, %v1963
        %1984 = vrot.lane.b32.xlu0 %v1982, 125
        %v1985 = vpop.permute.xlu0 %1984
        %v1987 = vadd.f32 %v1980, %v1985
        %v1988 = vstv %s284
        %v1989 = vmul.f32 %v1988, %v1963
        %1991 = vrot.lane.b32.xlu0 %v1989, 124
        %v1992 = vpop.permute.xlu0 %1991
        %v1994 = vadd.f32 %v1987, %v1992
        %v1995 = vld [vmem:[#allocation4 + $0x1] sm:$0xff]
        %v1996 = vstv %s265
        %v1997 = vmul.f32 %v1996, %v1995
        %v1998 = vadd.f32 %v1994, %v1997
        %v1999 = vstv %s270
        %v2000 = vmul.f32 %v1999, %v1995
        %2002 = vrot.lane.b32.xlu0 %v2000, 127
        %v2003 = vpop.permute.xlu0 %2002
        %v2005 = vadd.f32 %v1998, %v2003
        %v2006 = vstv %s275
        %v2007 = vmul.f32 %v2006, %v1995
        %2009 = vrot.lane.b32.xlu0 %v2007, 126
        %v2010 = vpop.permute.xlu0 %2009
        %v2012 = vadd.f32 %v2005, %v2010
        %v2013 = vstv %s280
        %v2014 = vmul.f32 %v2013, %v1995
        %2016 = vrot.lane.b32.xlu0 %v2014, 125
        %v2017 = vpop.permute.xlu0 %2016
        %v2019 = vadd.f32 %v2012, %v2017
        %v2020 = vstv %s285
        %v2021 = vmul.f32 %v2020, %v1995
        %2023 = vrot.lane.b32.xlu0 %v2021, 124
        %v2024 = vpop.permute.xlu0 %2023
        %v2026 = vadd.f32 %v2019, %v2024
        %v2027 = vld [vmem:[#allocation4 + $0x2] sm:$0xff]
        %v2028 = vstv %s266
        %v2029 = vmul.f32 %v2028, %v2027
        %v2030 = vadd.f32 %v2026, %v2029
        %v2031 = vstv %s271
        %v2032 = vmul.f32 %v2031, %v2027
        %2034 = vrot.lane.b32.xlu0 %v2032, 127
        %v2035 = vpop.permute.xlu0 %2034
        %v2037 = vadd.f32 %v2030, %v2035
        %v2038 = vstv %s276
        %v2039 = vmul.f32 %v2038, %v2027
        %2041 = vrot.lane.b32.xlu0 %v2039, 126
        %v2042 = vpop.permute.xlu0 %2041
        %v2044 = vadd.f32 %v2037, %v2042
        %v2045 = vstv %s281
        %v2046 = vmul.f32 %v2045, %v2027
        %2048 = vrot.lane.b32.xlu0 %v2046, 125
        %v2049 = vpop.permute.xlu0 %2048
        %v2051 = vadd.f32 %v2044, %v2049
        %v2052 = vstv %s286
        %v2053 = vmul.f32 %v2052, %v2027
        %2055 = vrot.lane.b32.xlu0 %v2053, 124
        %v2056 = vpop.permute.xlu0 %2055
        %v2058 = vadd.f32 %v2051, %v2056
        %v2059 = vld [vmem:[#allocation4 + $0x3] sm:$0xff]
        %v2060 = vstv %s267
        %v2061 = vmul.f32 %v2060, %v2059
        %v2062 = vadd.f32 %v2058, %v2061
        %v2063 = vstv %s272
        %v2064 = vmul.f32 %v2063, %v2059
        %2066 = vrot.lane.b32.xlu0 %v2064, 127
        %v2067 = vpop.permute.xlu0 %2066
        %v2069 = vadd.f32 %v2062, %v2067
        %v2070 = vstv %s277
        %v2071 = vmul.f32 %v2070, %v2059
        %2073 = vrot.lane.b32.xlu0 %v2071, 126
        %v2074 = vpop.permute.xlu0 %2073
        %v2076 = vadd.f32 %v2069, %v2074
        %v2077 = vstv %s282
        %v2078 = vmul.f32 %v2077, %v2059
        %2080 = vrot.lane.b32.xlu0 %v2078, 125
        %v2081 = vpop.permute.xlu0 %2080
        %v2083 = vadd.f32 %v2076, %v2081
        %v2084 = vstv %s287
        %v2085 = vmul.f32 %v2084, %v2059
        %2087 = vrot.lane.b32.xlu0 %v2085, 124
        %v2088 = vpop.permute.xlu0 %2087
        %v2090 = vadd.f32 %v2083, %v2088
        %v2091 = vld [vmem:[#allocation4 + $0x4] sm:$0xff]
        %v2092 = vstv %s268
        %v2093 = vmul.f32 %v2092, %v2091
        %v2094 = vadd.f32 %v2090, %v2093
        %v2095 = vstv %s273
        %v2096 = vmul.f32 %v2095, %v2091
        %2098 = vrot.lane.b32.xlu0 %v2096, 127
        %v2099 = vpop.permute.xlu0 %2098
        %v2101 = vadd.f32 %v2094, %v2099
        %v2102 = vstv %s278
        %v2103 = vmul.f32 %v2102, %v2091
        %2105 = vrot.lane.b32.xlu0 %v2103, 126
        %v2106 = vpop.permute.xlu0 %2105
        %v2108 = vadd.f32 %v2101, %v2106
        %v2109 = vstv %s283
        %v2110 = vmul.f32 %v2109, %v2091
        %2112 = vrot.lane.b32.xlu0 %v2110, 125
        %v2113 = vpop.permute.xlu0 %2112
        %v2115 = vadd.f32 %v2108, %v2113
        %v2116 = vstv %s288
        %v2117 = vmul.f32 %v2116, %v2091
        %2119 = vrot.lane.b32.xlu0 %v2117, 124
        %v2120 = vpop.permute.xlu0 %2119
        %v2122 = vadd.f32 %v2115, %v2120
        %v2123 = vld [vmem:[%s357] sm:$0xff]
        %v2124 = vstv %s289
        %v2125 = vmul.f32 %v2124, %v2123
        %v2126 = vadd.f32 %v2122, %v2125
        %v2127 = vstv %s294
        %v2128 = vmul.f32 %v2127, %v2123
        %2130 = vrot.lane.b32.xlu0 %v2128, 127
        %v2131 = vpop.permute.xlu0 %2130
        %v2133 = vadd.f32 %v2126, %v2131
        %v2134 = vstv %s299
        %v2135 = vmul.f32 %v2134, %v2123
        %2137 = vrot.lane.b32.xlu0 %v2135, 126
        %v2138 = vpop.permute.xlu0 %2137
        %v2140 = vadd.f32 %v2133, %v2138
        %v2141 = vstv %s304
        %v2142 = vmul.f32 %v2141, %v2123
        %2144 = vrot.lane.b32.xlu0 %v2142, 125
        %v2145 = vpop.permute.xlu0 %2144
        %v2147 = vadd.f32 %v2140, %v2145
        %v2148 = vstv %s309
        %v2149 = vmul.f32 %v2148, %v2123
        %2151 = vrot.lane.b32.xlu0 %v2149, 124
        %v2152 = vpop.permute.xlu0 %2151
        %v2154 = vadd.f32 %v2147, %v2152
        %v2155 = vld [vmem:[%s357 + $0x1] sm:$0xff]
        %v2156 = vstv %s290
        %v2157 = vmul.f32 %v2156, %v2155
        %v2158 = vadd.f32 %v2154, %v2157
        %v2159 = vstv %s295
        %v2160 = vmul.f32 %v2159, %v2155
        %2162 = vrot.lane.b32.xlu0 %v2160, 127
        %v2163 = vpop.permute.xlu0 %2162
        %v2165 = vadd.f32 %v2158, %v2163
        %v2166 = vstv %s300
        %v2167 = vmul.f32 %v2166, %v2155
        %2169 = vrot.lane.b32.xlu0 %v2167, 126
        %v2170 = vpop.permute.xlu0 %2169
        %v2172 = vadd.f32 %v2165, %v2170
        %v2173 = vstv %s305
        %v2174 = vmul.f32 %v2173, %v2155
        %2176 = vrot.lane.b32.xlu0 %v2174, 125
        %v2177 = vpop.permute.xlu0 %2176
        %v2179 = vadd.f32 %v2172, %v2177
        %v2180 = vstv %s310
        %v2181 = vmul.f32 %v2180, %v2155
        %2183 = vrot.lane.b32.xlu0 %v2181, 124
        %v2184 = vpop.permute.xlu0 %2183
        %v2186 = vadd.f32 %v2179, %v2184
        %v2187 = vld [vmem:[%s357 + $0x2] sm:$0xff]
        %v2188 = vstv %s291
        %v2189 = vmul.f32 %v2188, %v2187
        %v2190 = vadd.f32 %v2186, %v2189
        %v2191 = vstv %s296
        %v2192 = vmul.f32 %v2191, %v2187
        %2194 = vrot.lane.b32.xlu0 %v2192, 127
        %v2195 = vpop.permute.xlu0 %2194
        %v2197 = vadd.f32 %v2190, %v2195
        %v2198 = vstv %s301
        %v2199 = vmul.f32 %v2198, %v2187
        %2201 = vrot.lane.b32.xlu0 %v2199, 126
        %v2202 = vpop.permute.xlu0 %2201
        %v2204 = vadd.f32 %v2197, %v2202
        %v2205 = vstv %s306
        %v2206 = vmul.f32 %v2205, %v2187
        %2208 = vrot.lane.b32.xlu0 %v2206, 125
        %v2209 = vpop.permute.xlu0 %2208
        %v2211 = vadd.f32 %v2204, %v2209
        %v2212 = vstv %s311
        %v2213 = vmul.f32 %v2212, %v2187
        %2215 = vrot.lane.b32.xlu0 %v2213, 124
        %v2216 = vpop.permute.xlu0 %2215
        %v2218 = vadd.f32 %v2211, %v2216
        %v2219 = vld [vmem:[%s357 + $0x3] sm:$0xff]
        %v2220 = vstv %s292
        %v2221 = vmul.f32 %v2220, %v2219
        %v2222 = vadd.f32 %v2218, %v2221
        %v2223 = vstv %s297
        %v2224 = vmul.f32 %v2223, %v2219
        %2226 = vrot.lane.b32.xlu0 %v2224, 127
        %v2227 = vpop.permute.xlu0 %2226
        %v2229 = vadd.f32 %v2222, %v2227
        %v2230 = vstv %s302
        %v2231 = vmul.f32 %v2230, %v2219
        %2233 = vrot.lane.b32.xlu0 %v2231, 126
        %v2234 = vpop.permute.xlu0 %2233
        %v2236 = vadd.f32 %v2229, %v2234
        %v2237 = vstv %s307
        %v2238 = vmul.f32 %v2237, %v2219
        %2240 = vrot.lane.b32.xlu0 %v2238, 125
        %v2241 = vpop.permute.xlu0 %2240
        %v2243 = vadd.f32 %v2236, %v2241
        %v2244 = vstv %s312
        %v2245 = vmul.f32 %v2244, %v2219
        %2247 = vrot.lane.b32.xlu0 %v2245, 124
        %v2248 = vpop.permute.xlu0 %2247
        %v2250 = vadd.f32 %v2243, %v2248
        %v2251 = vld [vmem:[%s357 + $0x4] sm:$0xff]
        %v2252 = vstv %s293
        %v2253 = vmul.f32 %v2252, %v2251
        %v2254 = vadd.f32 %v2250, %v2253
        %v2255 = vstv %s298
        %v2256 = vmul.f32 %v2255, %v2251
        %2258 = vrot.lane.b32.xlu0 %v2256, 127
        %v2259 = vpop.permute.xlu0 %2258
        %v2261 = vadd.f32 %v2254, %v2259
        %v2262 = vstv %s303
        %v2263 = vmul.f32 %v2262, %v2251
        %2265 = vrot.lane.b32.xlu0 %v2263, 126
        %v2266 = vpop.permute.xlu0 %2265
        %v2268 = vadd.f32 %v2261, %v2266
        %v2269 = vstv %s308
        %v2270 = vmul.f32 %v2269, %v2251
        %2272 = vrot.lane.b32.xlu0 %v2270, 125
        %v2273 = vpop.permute.xlu0 %2272
        %v2275 = vadd.f32 %v2268, %v2273
        %v2276 = vstv %s313
        %v2277 = vmul.f32 %v2276, %v2251
        %2279 = vrot.lane.b32.xlu0 %v2277, 124
        %v2280 = vpop.permute.xlu0 %2279
        %v2282 = vadd.f32 %v2275, %v2280
        %v2283 = vxor.u32 %v2282, 2147483648
        %v2284 = vmul.f32 %v2283, 1.442695
        %v2285 = vpow.pop %v2284
        %v2286 = vadd.f32 %v2285, 1.0
        %v2287 = vrcp.pop %v2286
        %v2288 = vmul.f32 %v2286, %v2287
        %v2289 = vsub.f32 1.0, %v2288
        %v2290 = vmul.f32 %v2287, %v2289
        %v2291 = vadd.f32 %v2287, %v2290
        %vm2292 = vweird.f32 %v2286
        %vm2293 = vweird.f32 %v2287
        %vm2294 = vmor %vm2292, %vm2293
        %v2295 = vsel %vm2294, %v2287, %v2291
        %v2296 = vand.u32 2147483647, %v2286
        %vm2297 = vcmp.eq.f32.partialorder %v2296, 8.507059e+37
        %v2298 = vand.u32 %v2286, 2147483648
        %v2299 = vor.u32 1.1754944e-38, %v2298
        %v2300 = vsel %vm2297, %v2299, %v2295
        %v2301 = vmul.f32 1.0, %v2300
        %v2302 = vadd.f32 %v995, %v991
        %v2303 = vmul.f32 %v2302, 0.5
        %v2304 = vstv %s317
        %v2305 = vmul.f32 %v2304, %v995
        %v2306 = vadd.f32 %v2303, %v2305
        %v2307 = vstv %s318
        %v2308 = vmul.f32 %v2307, %v991
        %v2309 = vadd.f32 %v2306, %v2308
        %2310 = vst.msk [vmem:[#allocation5 + $0x1] sm:$0xff] %vm160, %v2309
        %v2311 = vld [vmem:[#allocation5] sm:$0xff]
        %v2312 = vstv %s314
        %v2313 = vmul.f32 %v2312, %v2311
        %v2314 = vadd.f32 %v2313, 0.0
        %v2315 = vld [vmem:[#allocation5 + $0x1] sm:$0xff]
        %v2316 = vstv %s315
        %v2317 = vmul.f32 %v2316, %v2315
        %v2318 = vadd.f32 %v2314, %v2317
        %v2319 = vld [vmem:[#allocation5 + $0x2] sm:$0xff]
        %v2320 = vstv %s316
        %v2321 = vmul.f32 %v2320, %v2319
        %v2322 = vadd.f32 %v2318, %v2321
        %v2323 = vstv %s319
        %v2324 = vadd.f32 %v2322, %v2323
        %v2325 = vxor.u32 %v2324, 2147483648
        %v2326 = vmul.f32 %v2325, 1.442695
        %v2327 = vpow.pop %v2326
        %v2328 = vadd.f32 %v2327, 1.0
        %v2329 = vrcp.pop %v2328
        %v2330 = vmul.f32 %v2328, %v2329
        %v2331 = vsub.f32 1.0, %v2330
        %v2332 = vmul.f32 %v2329, %v2331
        %v2333 = vadd.f32 %v2329, %v2332
        %vm2334 = vweird.f32 %v2328
        %vm2335 = vweird.f32 %v2329
        %vm2336 = vmor %vm2334, %vm2335
        %v2337 = vsel %vm2336, %v2329, %v2333
        %v2338 = vand.u32 2147483647, %v2328
        %vm2339 = vcmp.eq.f32.partialorder %v2338, 8.507059e+37
        %v2340 = vand.u32 %v2328, 2147483648
        %v2341 = vor.u32 1.1754944e-38, %v2340
        %v2342 = vsel %vm2339, %v2341, %v2337
        %v2343 = vmul.f32 1.0, %v2342
        %v2344 = vperm.slane %v1608, 0
        %v2345 = vadd.f32 %v2344, %v1962
        %2347 = vset.pattern.permute.xlu0 0
        %2348 = vperm.xlu0 %2347, %v2301
        %v2349 = vpop.permute.xlu0 %2348
        %v2351 = vadd.f32 %v2345, %v2349
        %2353 = vset.pattern.permute.xlu0 0
        %2354 = vperm.xlu0 %2353, %v2343
        %v2355 = vpop.permute.xlu0 %2354
        %v2357 = vadd.f32 %v2351, %v2355
        %2358 = vst.msk [vmem:[#allocation6] sm:$0xff] %vm322, %v2357
        %v2359 = vperm.slane %v1608, 1
        %v2360 = vadd.f32 %v2359, %v1962
        %2361 = vset.pattern.permute.xlu0 1
        %2362 = vperm.xlu0 %2361, %v2301
        %v2363 = vpop.permute.xlu0 %2362
        %v2365 = vadd.f32 %v2360, %v2363
        %v2366 = vadd.f32 %v2365, %v2355
        %2368 = vrot.lane.b32.xlu0 %v2366, 16
        %v2369 = vpop.permute.xlu0 %2368
        %2371 = vst.msk [vmem:[#allocation6] sm:$0xff] %vm366, %v2369
        %v2372 = vperm.slane %v1608, 2
        %v2373 = vadd.f32 %v2372, %v1962
        %2374 = vset.pattern.permute.xlu0 2
        %2375 = vperm.xlu0 %2374, %v2301
        %v2376 = vpop.permute.xlu0 %2375
        %v2378 = vadd.f32 %v2373, %v2376
        %v2379 = vadd.f32 %v2378, %v2355
        %2381 = vrot.lane.b32.xlu0 %v2379, 32
        %v2382 = vpop.permute.xlu0 %2381
        %2384 = vst.msk [vmem:[#allocation6] sm:$0xff] %vm408, %v2382
        %v2385 = vperm.slane %v1608, 3
        %v2386 = vadd.f32 %v2385, %v1962
        %2387 = vset.pattern.permute.xlu0 3
        %2388 = vperm.xlu0 %2387, %v2301
        %v2389 = vpop.permute.xlu0 %2388
        %v2391 = vadd.f32 %v2386, %v2389
        %v2392 = vadd.f32 %v2391, %v2355
        %2394 = vrot.lane.b32.xlu0 %v2392, 48
        %v2395 = vpop.permute.xlu0 %2394
        %2397 = vst.msk [vmem:[#allocation6] sm:$0xff] %vm450, %v2395
        %v2398 = vperm.slane %v1608, 4
        %v2399 = vadd.f32 %v2398, %v1962
        %2400 = vset.pattern.permute.xlu0 4
        %2401 = vperm.xlu0 %2400, %v2301
        %v2402 = vpop.permute.xlu0 %2401
        %v2404 = vadd.f32 %v2399, %v2402
        %v2405 = vadd.f32 %v2404, %v2355
        %2407 = vrot.lane.b32.xlu0 %v2405, 64
        %v2408 = vpop.permute.xlu0 %2407
        %2410 = vst.msk [vmem:[#allocation6] sm:$0xff] %vm492, %v2408
        %v2411 = vperm.slane %v1608, 5
        %v2412 = vadd.f32 %v2411, %v1962
        %2413 = vset.pattern.permute.xlu0 5
        %2414 = vperm.xlu0 %2413, %v2301
        %v2415 = vpop.permute.xlu0 %2414
        %v2417 = vadd.f32 %v2412, %v2415
        %v2418 = vadd.f32 %v2417, %v2355
        %2420 = vrot.lane.b32.xlu0 %v2418, 80
        %v2421 = vpop.permute.xlu0 %2420
        %2423 = vst.msk [vmem:[#allocation6] sm:$0xff] %vm534, %v2421
        %v2424 = vperm.slane %v1608, 6
        %v2425 = vadd.f32 %v2424, %v1962
        %2426 = vset.pattern.permute.xlu0 6
        %2427 = vperm.xlu0 %2426, %v2301
        %v2428 = vpop.permute.xlu0 %2427
        %v2430 = vadd.f32 %v2425, %v2428
        %v2431 = vadd.f32 %v2430, %v2355
        %2433 = vrot.lane.b32.xlu0 %v2431, 96
        %v2434 = vpop.permute.xlu0 %2433
        %2436 = vst.msk [vmem:[#allocation6] sm:$0xff] %vm576, %v2434
        %v2437 = vperm.slane %v1608, 7
        %v2438 = vadd.f32 %v2437, %v1962
        %2439 = vset.pattern.permute.xlu0 7
        %2440 = vperm.xlu0 %2439, %v2301
        %v2441 = vpop.permute.xlu0 %2440
        %v2443 = vadd.f32 %v2438, %v2441
        %v2444 = vadd.f32 %v2443, %v2355
        %2446 = vrot.lane.b32.xlu0 %v2444, 112
        %v2447 = vpop.permute.xlu0 %2446
        %2449 = vst.msk [vmem:[#allocation6] sm:$0xff] %vm618, %v2447
        %v2450 = vperm.slane %v1623, 0
        %v2451 = vadd.f32 %v2450, %v1962
        %2452 = vset.pattern.permute.xlu0 8
        %2453 = vperm.xlu0 %2452, %v2301
        %v2454 = vpop.permute.xlu0 %2453
        %v2456 = vadd.f32 %v2451, %v2454
        %v2457 = vadd.f32 %v2456, %v2355
        %2458 = vst.msk [vmem:[#allocation6 + $0x8] sm:$0xff] %vm322, %v2457
        %v2459 = vperm.slane %v1623, 1
        %v2460 = vadd.f32 %v2459, %v1962
        %2461 = vset.pattern.permute.xlu0 9
        %2462 = vperm.xlu0 %2461, %v2301
        %v2463 = vpop.permute.xlu0 %2462
        %v2465 = vadd.f32 %v2460, %v2463
        %v2466 = vadd.f32 %v2465, %v2355
        %2468 = vrot.lane.b32.xlu0 %v2466, 16
        %v2469 = vpop.permute.xlu0 %2468
        %2471 = vst.msk [vmem:[#allocation6 + $0x8] sm:$0xff] %vm366, %v2469
        %v2472 = vperm.slane %v1623, 2
        %v2473 = vadd.f32 %v2472, %v1962
        %2474 = vset.pattern.permute.xlu0 10
        %2475 = vperm.xlu0 %2474, %v2301
        %v2476 = vpop.permute.xlu0 %2475
        %v2478 = vadd.f32 %v2473, %v2476
        %v2479 = vadd.f32 %v2478, %v2355
        %2481 = vrot.lane.b32.xlu0 %v2479, 32
        %v2482 = vpop.permute.xlu0 %2481
        %2484 = vst.msk [vmem:[#allocation6 + $0x8] sm:$0xff] %vm408, %v2482
        %v2485 = vperm.slane %v1623, 3
        %v2486 = vadd.f32 %v2485, %v1962
        %2487 = vset.pattern.permute.xlu0 11
        %2488 = vperm.xlu0 %2487, %v2301
        %v2489 = vpop.permute.xlu0 %2488
        %v2491 = vadd.f32 %v2486, %v2489
        %v2492 = vadd.f32 %v2491, %v2355
        %2494 = vrot.lane.b32.xlu0 %v2492, 48
        %v2495 = vpop.permute.xlu0 %2494
        %2497 = vst.msk [vmem:[#allocation6 + $0x8] sm:$0xff] %vm450, %v2495
        %v2498 = vperm.slane %v1623, 4
        %v2499 = vadd.f32 %v2498, %v1962
        %2500 = vset.pattern.permute.xlu0 12
        %2501 = vperm.xlu0 %2500, %v2301
        %v2502 = vpop.permute.xlu0 %2501
        %v2504 = vadd.f32 %v2499, %v2502
        %v2505 = vadd.f32 %v2504, %v2355
        %2507 = vrot.lane.b32.xlu0 %v2505, 64
        %v2508 = vpop.permute.xlu0 %2507
        %2510 = vst.msk [vmem:[#allocation6 + $0x8] sm:$0xff] %vm492, %v2508
        %v2511 = vperm.slane %v1623, 5
        %v2512 = vadd.f32 %v2511, %v1962
        %2513 = vset.pattern.permute.xlu0 13
        %2514 = vperm.xlu0 %2513, %v2301
        %v2515 = vpop.permute.xlu0 %2514
        %v2517 = vadd.f32 %v2512, %v2515
        %v2518 = vadd.f32 %v2517, %v2355
        %2520 = vrot.lane.b32.xlu0 %v2518, 80
        %v2521 = vpop.permute.xlu0 %2520
        %2523 = vst.msk [vmem:[#allocation6 + $0x8] sm:$0xff] %vm534, %v2521
        %v2524 = vperm.slane %v1623, 6
        %v2525 = vadd.f32 %v2524, %v1962
        %2526 = vset.pattern.permute.xlu0 14
        %2527 = vperm.xlu0 %2526, %v2301
        %v2528 = vpop.permute.xlu0 %2527
        %v2530 = vadd.f32 %v2525, %v2528
        %v2531 = vadd.f32 %v2530, %v2355
        %2533 = vrot.lane.b32.xlu0 %v2531, 96
        %v2534 = vpop.permute.xlu0 %2533
        %2536 = vst.msk [vmem:[#allocation6 + $0x8] sm:$0xff] %vm576, %v2534
        %v2537 = vperm.slane %v1623, 7
        %v2538 = vadd.f32 %v2537, %v1962
        %2539 = vset.pattern.permute.xlu0 15
        %2540 = vperm.xlu0 %2539, %v2301
        %v2541 = vpop.permute.xlu0 %2540
        %v2543 = vadd.f32 %v2538, %v2541
        %v2544 = vadd.f32 %v2543, %v2355
        %2546 = vrot.lane.b32.xlu0 %v2544, 112
        %v2547 = vpop.permute.xlu0 %2546
        %2549 = vst.msk [vmem:[#allocation6 + $0x8] sm:$0xff] %vm618, %v2547
        %v2550 = vld [vmem:[%s124] sm:$0xff]
        %v2551 = vld [vmem:[%s124 + $0x8] sm:$0xff]
        %v2552 = vmul.f32 %v2550, 0.25
        %v2553 = vmul.f32 %v2551, 0.25
        %v2554 = vld [vmem:[#allocation6] sm:$0xff]
        %v2555 = vld [vmem:[#allocation6 + $0x8] sm:$0xff]
        %v2556 = vmul.f32 %v2552, %v2554
        %v2557 = vmul.f32 %v2553, %v2555
        %2558 = vst [vmem:[%s143] sm:$0xff] %v2556
        %2559 = vst [vmem:[%s143 + $0x8] sm:$0xff] %v2557
        %s2560 = sand.u32 %s61, 1
        %s2561 = scalar_lea.sflag [#allocation11], %s2560
        %s2562 = sand.u32 %s61, 1
        %s2563 = smul.addr %s2562, 16
        %s2564 = scalar_lea.vmem [#allocation12], %s2563
        // Predicated region
        $region29: #{tpu_custom_call.1} parent=23 // pred_check
          %p2565 = pneg %p71
        $region30: #{tpu_custom_call.1} parent=23 // pred_check_branch
          %2567 = sbr.rel (%p2565) target = $region32
        $region31: #{tpu_custom_call.1} parent=23 // pred_region
          %2569 = vsyncadd %s2561, 0
          %s2570 = smul.addr %s27, 2
          %s2571 = smul.addr %s2570, 8
          %s2572 = scalar_lea.hbm %s2, %s2571
          %s2574 = sshll.u32 %s2564, 4
          %s2575 = int_to_ptr.vmem [resolvable:$true] %s2574
          %s2576 = sshll.u32 %s2572, 4
          %s2577 = int_to_ptr.hbm [resolvable:$true] %s2576
          %2579 = dma.vmem_to_hbm [thread:$0]  %s2575, 256, %s2577, %s2561
        $region32: #{tpu_custom_call.1} parent=23 // pred_fallthru
          _
      $region24: #{tpu_custom_call.1} parent=5 // pred_fallthru
        _
      %p2580 = scmp.le.s32.totalorder 2, %s22
      // Predicated region
      $region33: #{tpu_custom_call.1} parent=5 // pred_check
        %p2581 = pneg %p2580
      $region34: #{tpu_custom_call.1} parent=5 // pred_check_branch
        %2583 = sbr.rel (%p2581) target = $region36
      $region35: #{tpu_custom_call.1} parent=5 // pred_region
        %s2584 = ssub.s32 %s22, 2
        // Predicated region
        $region37: #{tpu_custom_call.1} parent=35 // pred_check
          %p2585 = pneg %p77
        $region38: #{tpu_custom_call.1} parent=35 // pred_check_branch
          %2587 = sbr.rel (%p2585) target = $region40
        $region39: #{tpu_custom_call.1} parent=35 // pred_region
          %s2588 = sand.u32 %s62, 1
          %s2589 = scalar_lea.sflag [#allocation11], %s2588
          %s2590 = sand.u32 %s62, 1
          %s2591 = smul.addr %s2590, 16
          %s2592 = scalar_lea.vmem [#allocation12], %s2591
          %2594 = dma.done %s2589, 256
        $region40: #{tpu_custom_call.1} parent=35 // pred_fallthru
          _
      $region36: #{tpu_custom_call.1} parent=5 // pred_fallthru
        _
    $region6: #{tpu_custom_call.1} parent=1 // loop_footer
      %s26 = sadd.s32 1, %s22
    $region7: #{tpu_custom_call.1} parent=1 // loop_footer_branch
      %21 = sbr.rel target = $region3
    $region8: #{tpu_custom_call.1} parent=1 // loop_exit
      _
    %2595 = vsyncpa [#allocation10], 1
    %s2596 = scalar_lea.sflag [#allocation10], 1
    %2597 = vsyncpa %s2596, 1
    %2598 = vsyncpa [#allocation11], 1
    %s2599 = scalar_lea.sflag [#allocation11], 1
    %2600 = vsyncpa %s2599, 1

</llo_original>
